<compile_context>
chip_gen: v6e
topology: v6e:2x2x1
jax: 0.10.0
libtpu: 0.0.40
codegen_flags: <defaults>
</compile_context>

<pallas_src>
import jax
import jax.numpy as jnp
from jax.experimental import pallas as pl
from jax.experimental.pallas import tpu as pltpu

FEATURE_NUM = 128   # implied by nn.Linear(16*32, 256) after two MaxPool1d(2)
NUM_CLASSES = 6
OUT_PAD = 128       # lane-dense padded output width (classes live in columns 0..5)


def _round_up(n, m):
    return ((n + m - 1) // m) * m


# ----------------------------------------------------------------------------
# Trace-time weight folding
# ----------------------------------------------------------------------------
def _conv_pool_matrix(w, b, length):
    """Fold Conv1d(kernel=3, stride=1, padding=1) into a dense matrix (bf16) plus a
    half-width bias (f32), with a pooling-friendly column order.

    Input layout : flattened (ci-major, position) vector of size Cin*length.
    Matrix cols  : [even output positions | odd output positions]; each half is
                   (co-major, position) of size Cout*length//2.
    Kernel applies:  y = x @ W ; pooled = max(first half, second half);
                     out = relu(pooled + bias_half)
    (bias-add and ReLU commute with the parity max because the bias is per-channel.)
    """
    cout, cin, k = w.shape
    pad = (k - 1) // 2
    lh = length // 2
    j = jnp.arange(length)[:, None]             # input position
    l = jnp.arange(length)[None, :]             # conv output position
    tap = j - l + pad                           # which kernel tap connects j -> l
    valid = (tap >= 0) & (tap < k)
    tap_c = jnp.clip(tap, 0, k - 1)
    wt = jnp.transpose(w, (1, 2, 0))            # [Cin, K, Cout]
    m = wt[:, tap_c, :]                         # [Cin, Lin, Lout, Cout]
    m = jnp.where(valid[None, :, :, None], m, 0.0)
    m = jnp.transpose(m, (0, 1, 3, 2))          # [Cin, Lin, Cout, Lout]
    m = m.reshape(cin * length, cout, lh, 2)    # Lout -> (l', parity); l = 2*l'+parity
    m = jnp.transpose(m, (0, 3, 1, 2))          # [Cin*Lin, parity, Cout, l']
    m = m.reshape(cin * length, 2 * cout * lh)
    bias_half = jnp.repeat(b, lh).reshape(1, cout * lh)       # per (channel, pooled pos)
    return m.astype(jnp.bfloat16), bias_half.astype(jnp.float32)


def prepare_params(params):
    """PyTorch-shaped params -> packed bf16 matrices + f32 biases (one-time)."""
    (w1, b1, w2, b2, wf1, bf1, wf2, bf2, wf3, bf3) = params
    W1, B1 = _conv_pool_matrix(w1, b1, FEATURE_NUM)        # [128, 2048] bf16, [1, 1024] f32
    W2, B2 = _conv_pool_matrix(w2, b2, FEATURE_NUM // 2)   # [1024, 1024] bf16, [1, 512] f32
    # Pad the last Linear to a lane-dense 128-wide output; padded columns are zero
    # and are sliced off in the wrapper (the flatten-order transpose for fc1 is
    # absorbed here at zero runtime cost, as before).
    wf3_t = wf3.T.astype(jnp.float32)                       # [128, 6]
    Wf3p = jnp.zeros((wf3_t.shape[0], OUT_PAD), jnp.float32).at[:, :NUM_CLASSES].set(wf3_t)
    Bf3p = jnp.zeros((1, OUT_PAD), jnp.float32).at[:, :NUM_CLASSES].set(
        bf3.reshape(1, -1).astype(jnp.float32))
    return (W1, B1, W2, B2,
            wf1.T.astype(jnp.bfloat16), bf1.reshape(1, -1).astype(jnp.float32),
            wf2.T.astype(jnp.bfloat16), bf2.reshape(1, -1).astype(jnp.float32),
            Wf3p.astype(jnp.bfloat16), Bf3p)


# ----------------------------------------------------------------------------
# Fused kernel
# ----------------------------------------------------------------------------
def _dnn_kernel(x_ref, w1_ref, b1_ref, w2_ref, b2_ref,
                wf1_ref, bf1_ref, wf2_ref, bf2_ref, wf3_ref, bf3_ref, o_ref):
    def conv_relu_pool(h_bf16, w_ref, b_ref):
        # bf16 x bf16 matmul, f32 accumulation (MXU-native on all generations).
        y = jnp.dot(h_bf16, w_ref[...], preferred_element_type=jnp.float32)
        half = y.shape[-1] // 2
        # MaxPool1d(2): even-position outputs occupy the first half of the columns,
        # odd-position outputs the second half (see _conv_pool_matrix).
        pooled = jnp.maximum(y[:, :half], y[:, half:])
        # Bias-add + ReLU commute with the parity max -> do them at half width, in f32.
        return jnp.maximum(pooled + b_ref[...], 0.0)

    def dense(h_f32, w_ref, b_ref):
        y = jnp.dot(h_f32.astype(jnp.bfloat16), w_ref[...],
                    preferred_element_type=jnp.float32)
        return y + b_ref[...]

    h = conv_relu_pool(x_ref[...], w1_ref, b1_ref)               # [tb, 1024] f32 (c-major, L=64)
    h = conv_relu_pool(h.astype(jnp.bfloat16), w2_ref, b2_ref)   # [tb, 512]  f32 == torch flatten order
    h = jnp.maximum(dense(h, wf1_ref, bf1_ref), 0.0)             # [tb, 256]
    h = jnp.maximum(dense(h, wf2_ref, bf2_ref), 0.0)             # [tb, 128]
    z = dense(h, wf3_ref, bf3_ref)                               # [tb, 128] (cols >= 6 are padding)
    o_ref[...] = 1.0 / (1.0 + jnp.exp(-z))                       # exact sigmoid (f32)


def dnn_forward(x, packed, *, batch_tile=512):
    """x: [B, 1, FEATURE_NUM] (PyTorch NCL). packed: prepare_params(...) output.
    Returns [B, NUM_CLASSES]."""
    (W1, B1, W2, B2, Wf1, Bf1, Wf2, Bf2, Wf3, Bf3) = packed
    B = x.shape[0]
    L = x.shape[-1]
    assert L == FEATURE_NUM and L % 4 == 0, "two MaxPool1d(2) stages require L % 4 == 0"
    # Cin = 1 -> squeeze channel; bf16 input halves the per-tile activation DMA
    # (it is consumed only as an MXU operand, so no f32 elementwise math is lost).
    x2 = x.reshape(B, L).astype(jnp.bfloat16)

    # Batch tile: multiple of 8, capped at batch_tile, and chosen so that whenever B
    # allows it there are >= 2 grid steps — on v7x the "parallel" batch axis then
    # actually feeds both TensorCores instead of leaving one idle.
    tb = max(8, min(batch_tile, _round_up(pl.cdiv(B, 2), 8)))
    grid = (pl.cdiv(B, tb),)

    row_map = lambda i: (i, 0)
    fixed = lambda i: (0, 0)
    full = lambda a: pl.BlockSpec(a.shape, fixed)      # whole array, constant index map

    out = pl.pallas_call(
        _dnn_kernel,
        out_shape=jax.ShapeDtypeStruct((B, OUT_PAD), jnp.float32),
        grid=grid,
        in_specs=[pl.BlockSpec((tb, L), row_map),
                  full(W1), full(B1), full(W2), full(B2),
                  full(Wf1), full(Bf1), full(Wf2), full(Bf2),
                  full(Wf3), full(Bf3)],
        out_specs=pl.BlockSpec((tb, OUT_PAD), row_map),
        compiler_params=pltpu.CompilerParams(
            dimension_semantics=("parallel",),          # v7x: split batch tiles over 2 TCs
            vmem_limit_bytes=48 * 1024 * 1024),         # headroom under v7x's 64 MiB physical
    )(x2, W1, B1, W2, B2, Wf1, Bf1, Wf2, Bf2, Wf3, Bf3)
    return out[:, :NUM_CLASSES]


# ----------------------------------------------------------------------------
# Pure-JAX reference (semantics check against the PyTorch module)
# ----------------------------------------------------------------------------
def dnn_reference(x, params):
    (w1, b1, w2, b2, wf1, bf1, wf2, bf2, wf3, bf3) = params

    def conv1d(h, w, b):
        y = jax.lax.conv_general_dilated(
            h, w, window_strides=(1,), padding=((1, 1),),
            dimension_numbers=("NCH", "OIH", "NCH"))
        return y + b[None, :, None]

    h = jax.nn.relu(conv1d(x, w1, b1))
    h = jnp.max(h.reshape(h.shape[0], h.shape[1], -1, 2), axis=-1)
    h = jax.nn.relu(conv1d(h, w2, b2))
    h = jnp.max(h.reshape(h.shape[0], h.shape[1], -1, 2), axis=-1)
    f = h.reshape(h.shape[0], -1)
    f = jax.nn.relu(f @ wf1.T + bf1)
    f = jax.nn.relu(f @ wf2.T + bf2)
    return jax.nn.sigmoid(f @ wf3.T + bf3)


if __name__ == "__main__":
    key = jax.random.PRNGKey(0)
    ks = jax.random.split(key, 11)
    B = 2

    # Deterministic synthetic parameters (PyTorch shapes), small scale.
    w1 = 0.10 * jax.random.normal(ks[1], (16, 1, 3), jnp.float32)
    b1 = 0.10 * jax.random.normal(ks[2], (16,), jnp.float32)
    w2 = 0.10 * jax.random.normal(ks[3], (16, 16, 3), jnp.float32)
    b2 = 0.10 * jax.random.normal(ks[4], (16,), jnp.float32)
    wf1 = 0.05 * jax.random.normal(ks[5], (256, 16 * 32), jnp.float32)
    bf1 = 0.05 * jax.random.normal(ks[6], (256,), jnp.float32)
    wf2 = 0.05 * jax.random.normal(ks[7], (128, 256), jnp.float32)
    bf2 = 0.05 * jax.random.normal(ks[8], (128,), jnp.float32)
    wf3 = 0.05 * jax.random.normal(ks[9], (NUM_CLASSES, 128), jnp.float32)
    bf3 = 0.05 * jax.random.normal(ks[10], (NUM_CLASSES,), jnp.float32)
    params = (w1, b1, w2, b2, wf1, bf1, wf2, bf2, wf3, bf3)

    x = jax.random.normal(ks[0], (B, 1, FEATURE_NUM), dtype=jnp.float32)

    packed = prepare_params(params)            # one-time weight folding (bf16)
    out = jax.jit(dnn_forward)(x, packed)
    out = jax.block_until_ready(out)

    assert out.shape == (B, NUM_CLASSES)
    assert bool(jnp.all(jnp.isfinite(out)))
    assert bool(jnp.all((out >= 0.0) & (out <= 1.0)))      # exact sigmoid range

    ref = dnn_reference(x, params)
    err = float(jnp.max(jnp.abs(out - ref)))
    assert err < 2e-2, f"mismatch vs pure-JAX reference: max abs err = {err}"

    print("KERNEL_OK")
</pallas_src>

<mosaic_0001>
module attributes {stable_mosaic.version = 11 : i64} {
  func.func @_dnn_kernel(%arg0: i32, %arg1: memref<8x128xbf16, #tpu.memory_space<vmem>>, %arg2: memref<128x2048xbf16, #tpu.memory_space<vmem>>, %arg3: memref<1x1024xf32, #tpu.memory_space<vmem>>, %arg4: memref<1024x1024xbf16, #tpu.memory_space<vmem>>, %arg5: memref<1x512xf32, #tpu.memory_space<vmem>>, %arg6: memref<512x256xbf16, #tpu.memory_space<vmem>>, %arg7: memref<1x256xf32, #tpu.memory_space<vmem>>, %arg8: memref<256x128xbf16, #tpu.memory_space<vmem>>, %arg9: memref<1x128xf32, #tpu.memory_space<vmem>>, %arg10: memref<128x128xbf16, #tpu.memory_space<vmem>>, %arg11: memref<1x128xf32, #tpu.memory_space<vmem>>, %arg12: memref<8x128xf32, #tpu.memory_space<vmem>>) attributes {dimension_semantics = [#tpu.dimension_semantics<parallel>], iteration_bounds = array<i64: 1>, scalar_prefetch = 0 : i64, scratch_operands = 0 : i64, tpu.core_type = #tpu.core_type<tc>, window_params = [{transform_indices = @transform_0, window_bounds = array<i64: 8, 128>}, {pipeline_mode = #tpu.pipeline_mode<synchronous>, transform_indices = @transform_1, window_bounds = array<i64: 128, 2048>}, {pipeline_mode = #tpu.pipeline_mode<synchronous>, transform_indices = @transform_2, window_bounds = array<i64: 1, 1024>}, {pipeline_mode = #tpu.pipeline_mode<synchronous>, transform_indices = @transform_3, window_bounds = array<i64: 1024, 1024>}, {pipeline_mode = #tpu.pipeline_mode<synchronous>, transform_indices = @transform_4, window_bounds = array<i64: 1, 512>}, {pipeline_mode = #tpu.pipeline_mode<synchronous>, transform_indices = @transform_5, window_bounds = array<i64: 512, 256>}, {pipeline_mode = #tpu.pipeline_mode<synchronous>, transform_indices = @transform_6, window_bounds = array<i64: 1, 256>}, {pipeline_mode = #tpu.pipeline_mode<synchronous>, transform_indices = @transform_7, window_bounds = array<i64: 256, 128>}, {pipeline_mode = #tpu.pipeline_mode<synchronous>, transform_indices = @transform_8, window_bounds = array<i64: 1, 128>}, {pipeline_mode = #tpu.pipeline_mode<synchronous>, transform_indices = @transform_9, window_bounds = array<i64: 128, 128>}, {pipeline_mode = #tpu.pipeline_mode<synchronous>, transform_indices = @transform_10, window_bounds = array<i64: 1, 128>}, {transform_indices = @transform_11, window_bounds = array<i64: 8, 128>}]} {
    %c0 = arith.constant 0 : index
    %c0_0 = arith.constant 0 : index
    %0 = vector.load %arg1[%c0, %c0_0] : memref<8x128xbf16, #tpu.memory_space<vmem>>, vector<8x128xbf16>
    %c0_1 = arith.constant 0 : index
    %c0_2 = arith.constant 0 : index
    %1 = vector.load %arg2[%c0_1, %c0_2] : memref<128x2048xbf16, #tpu.memory_space<vmem>>, vector<128x2048xbf16>
    %cst = arith.constant dense<0.000000e+00> : vector<8x2048xf32>
    %2 = tpu.matmul %0, %1, %cst {dimension_numbers = #tpu.dot_dimension_numbers<[1], [0], [0], [1], [0, 0, 1, 1], [], []>} : vector<8x128xbf16>, vector<128x2048xbf16>, vector<8x2048xf32> -> vector<8x2048xf32>
    %3 = vector.extract_strided_slice %2 {offsets = [0, 0], sizes = [8, 1024], strides = [1, 1]} : vector<8x2048xf32> to vector<8x1024xf32>
    %4 = vector.extract_strided_slice %2 {offsets = [0, 1024], sizes = [8, 1024], strides = [1, 1]} : vector<8x2048xf32> to vector<8x1024xf32>
    %5 = arith.maximumf %3, %4 : vector<8x1024xf32>
    %c0_3 = arith.constant 0 : index
    %c0_4 = arith.constant 0 : index
    %6 = vector.load %arg3[%c0_3, %c0_4] : memref<1x1024xf32, #tpu.memory_space<vmem>>, vector<1x1024xf32>
    %7 = vector.broadcast %6 : vector<1x1024xf32> to vector<8x1024xf32>
    %8 = arith.addf %5, %7 : vector<8x1024xf32>
    %cst_5 = arith.constant 0.000000e+00 : f32
    %9 = vector.broadcast %cst_5 : f32 to vector<8x1024xf32>
    %10 = arith.maximumf %8, %9 : vector<8x1024xf32>
    %11 = arith.truncf %10 : vector<8x1024xf32> to vector<8x1024xbf16>
    %c0_6 = arith.constant 0 : index
    %c0_7 = arith.constant 0 : index
    %12 = vector.load %arg4[%c0_6, %c0_7] : memref<1024x1024xbf16, #tpu.memory_space<vmem>>, vector<1024x1024xbf16>
    %cst_8 = arith.constant dense<0.000000e+00> : vector<8x1024xf32>
    %13 = tpu.matmul %11, %12, %cst_8 {dimension_numbers = #tpu.dot_dimension_numbers<[1], [0], [0], [1], [0, 0, 1, 1], [], []>} : vector<8x1024xbf16>, vector<1024x1024xbf16>, vector<8x1024xf32> -> vector<8x1024xf32>
    %14 = vector.extract_strided_slice %13 {offsets = [0, 0], sizes = [8, 512], strides = [1, 1]} : vector<8x1024xf32> to vector<8x512xf32>
    %15 = vector.extract_strided_slice %13 {offsets = [0, 512], sizes = [8, 512], strides = [1, 1]} : vector<8x1024xf32> to vector<8x512xf32>
    %16 = arith.maximumf %14, %15 : vector<8x512xf32>
    %c0_9 = arith.constant 0 : index
    %c0_10 = arith.constant 0 : index
    %17 = vector.load %arg5[%c0_9, %c0_10] : memref<1x512xf32, #tpu.memory_space<vmem>>, vector<1x512xf32>
    %18 = vector.broadcast %17 : vector<1x512xf32> to vector<8x512xf32>
    %19 = arith.addf %16, %18 : vector<8x512xf32>
    %cst_11 = arith.constant 0.000000e+00 : f32
    %20 = vector.broadcast %cst_11 : f32 to vector<8x512xf32>
    %21 = arith.maximumf %19, %20 : vector<8x512xf32>
    %22 = arith.truncf %21 : vector<8x512xf32> to vector<8x512xbf16>
    %c0_12 = arith.constant 0 : index
    %c0_13 = arith.constant 0 : index
    %23 = vector.load %arg6[%c0_12, %c0_13] : memref<512x256xbf16, #tpu.memory_space<vmem>>, vector<512x256xbf16>
    %cst_14 = arith.constant dense<0.000000e+00> : vector<8x256xf32>
    %24 = tpu.matmul %22, %23, %cst_14 {dimension_numbers = #tpu.dot_dimension_numbers<[1], [0], [0], [1], [0, 0, 1, 1], [], []>} : vector<8x512xbf16>, vector<512x256xbf16>, vector<8x256xf32> -> vector<8x256xf32>
    %c0_15 = arith.constant 0 : index
    %c0_16 = arith.constant 0 : index
    %25 = vector.load %arg7[%c0_15, %c0_16] : memref<1x256xf32, #tpu.memory_space<vmem>>, vector<1x256xf32>
    %26 = vector.broadcast %25 : vector<1x256xf32> to vector<8x256xf32>
    %27 = arith.addf %24, %26 : vector<8x256xf32>
    %cst_17 = arith.constant 0.000000e+00 : f32
    %28 = vector.broadcast %cst_17 : f32 to vector<8x256xf32>
    %29 = arith.maximumf %27, %28 : vector<8x256xf32>
    %30 = arith.truncf %29 : vector<8x256xf32> to vector<8x256xbf16>
    %c0_18 = arith.constant 0 : index
    %c0_19 = arith.constant 0 : index
    %31 = vector.load %arg8[%c0_18, %c0_19] : memref<256x128xbf16, #tpu.memory_space<vmem>>, vector<256x128xbf16>
    %cst_20 = arith.constant dense<0.000000e+00> : vector<8x128xf32>
    %32 = tpu.matmul %30, %31, %cst_20 {dimension_numbers = #tpu.dot_dimension_numbers<[1], [0], [0], [1], [0, 0, 1, 1], [], []>} : vector<8x256xbf16>, vector<256x128xbf16>, vector<8x128xf32> -> vector<8x128xf32>
    %c0_21 = arith.constant 0 : index
    %c0_22 = arith.constant 0 : index
    %33 = vector.load %arg9[%c0_21, %c0_22] : memref<1x128xf32, #tpu.memory_space<vmem>>, vector<1x128xf32>
    %34 = vector.broadcast %33 : vector<1x128xf32> to vector<8x128xf32>
    %35 = arith.addf %32, %34 : vector<8x128xf32>
    %cst_23 = arith.constant 0.000000e+00 : f32
    %36 = vector.broadcast %cst_23 : f32 to vector<8x128xf32>
    %37 = arith.maximumf %35, %36 : vector<8x128xf32>
    %38 = arith.truncf %37 : vector<8x128xf32> to vector<8x128xbf16>
    %c0_24 = arith.constant 0 : index
    %c0_25 = arith.constant 0 : index
    %39 = vector.load %arg10[%c0_24, %c0_25] : memref<128x128xbf16, #tpu.memory_space<vmem>>, vector<128x128xbf16>
    %cst_26 = arith.constant dense<0.000000e+00> : vector<8x128xf32>
    %40 = tpu.matmul %38, %39, %cst_26 {dimension_numbers = #tpu.dot_dimension_numbers<[1], [0], [0], [1], [0, 0, 1, 1], [], []>} : vector<8x128xbf16>, vector<128x128xbf16>, vector<8x128xf32> -> vector<8x128xf32>
    %c0_27 = arith.constant 0 : index
    %c0_28 = arith.constant 0 : index
    %41 = vector.load %arg11[%c0_27, %c0_28] : memref<1x128xf32, #tpu.memory_space<vmem>>, vector<1x128xf32>
    %42 = vector.broadcast %41 : vector<1x128xf32> to vector<8x128xf32>
    %43 = arith.addf %40, %42 : vector<8x128xf32>
    %cst_29 = arith.constant 0.000000e+00 : f32
    %44 = vector.broadcast %cst_29 : f32 to vector<8x128xf32>
    %45 = arith.subf %44, %43 : vector<8x128xf32>
    %46 = math.exp %45 : vector<8x128xf32>
    %cst_30 = arith.constant 1.000000e+00 : f32
    %47 = vector.broadcast %cst_30 : f32 to vector<8x128xf32>
    %48 = arith.addf %47, %46 : vector<8x128xf32>
    %cst_31 = arith.constant 1.000000e+00 : f32
    %49 = vector.broadcast %cst_31 : f32 to vector<8x128xf32>
    %50 = arith.divf %49, %48 : vector<8x128xf32>
    %c0_32 = arith.constant 0 : index
    %c0_33 = arith.constant 0 : index
    %51 = vector.load %arg12[%c0_32, %c0_33] : memref<8x128xf32, #tpu.memory_space<vmem>>, vector<8x128xf32>
    tpu.vector_store %arg12[%c0_32, %c0_33], %50 {strides = array<i32>} : memref<8x128xf32, #tpu.memory_space<vmem>>, vector<8x128xf32>,
    return
  }
  func.func @transform_0(%arg0: i32) -> (i32, i32) {
    %c0_i32 = arith.constant 0 : i32
    %c0_i32_0 = arith.constant 0 : i32
    return %arg0, %c0_i32 : i32, i32
  }
  func.func @transform_1(%arg0: i32) -> (i32, i32) {
    %c0_i32 = arith.constant 0 : i32
    %c0_i32_0 = arith.constant 0 : i32
    %c0_i32_1 = arith.constant 0 : i32
    return %c0_i32, %c0_i32_0 : i32, i32
  }
  func.func @transform_2(%arg0: i32) -> (i32, i32) {
    %c0_i32 = arith.constant 0 : i32
    %c0_i32_0 = arith.constant 0 : i32
    %c0_i32_1 = arith.constant 0 : i32
    return %c0_i32, %c0_i32_0 : i32, i32
  }
  func.func @transform_3(%arg0: i32) -> (i32, i32) {
    %c0_i32 = arith.constant 0 : i32
    %c0_i32_0 = arith.constant 0 : i32
    %c0_i32_1 = arith.constant 0 : i32
    return %c0_i32, %c0_i32_0 : i32, i32
  }
  func.func @transform_4(%arg0: i32) -> (i32, i32) {
    %c0_i32 = arith.constant 0 : i32
    %c0_i32_0 = arith.constant 0 : i32
    %c0_i32_1 = arith.constant 0 : i32
    return %c0_i32, %c0_i32_0 : i32, i32
  }
  func.func @transform_5(%arg0: i32) -> (i32, i32) {
    %c0_i32 = arith.constant 0 : i32
    %c0_i32_0 = arith.constant 0 : i32
    %c0_i32_1 = arith.constant 0 : i32
    return %c0_i32, %c0_i32_0 : i32, i32
  }
  func.func @transform_6(%arg0: i32) -> (i32, i32) {
    %c0_i32 = arith.constant 0 : i32
    %c0_i32_0 = arith.constant 0 : i32
    %c0_i32_1 = arith.constant 0 : i32
    return %c0_i32, %c0_i32_0 : i32, i32
  }
  func.func @transform_7(%arg0: i32) -> (i32, i32) {
    %c0_i32 = arith.constant 0 : i32
    %c0_i32_0 = arith.constant 0 : i32
    %c0_i32_1 = arith.constant 0 : i32
    return %c0_i32, %c0_i32_0 : i32, i32
  }
  func.func @transform_8(%arg0: i32) -> (i32, i32) {
    %c0_i32 = arith.constant 0 : i32
    %c0_i32_0 = arith.constant 0 : i32
    %c0_i32_1 = arith.constant 0 : i32
    return %c0_i32, %c0_i32_0 : i32, i32
  }
  func.func @transform_9(%arg0: i32) -> (i32, i32) {
    %c0_i32 = arith.constant 0 : i32
    %c0_i32_0 = arith.constant 0 : i32
    %c0_i32_1 = arith.constant 0 : i32
    return %c0_i32, %c0_i32_0 : i32, i32
  }
  func.func @transform_10(%arg0: i32) -> (i32, i32) {
    %c0_i32 = arith.constant 0 : i32
    %c0_i32_0 = arith.constant 0 : i32
    %c0_i32_1 = arith.constant 0 : i32
    return %c0_i32, %c0_i32_0 : i32, i32
  }
  func.func @transform_11(%arg0: i32) -> (i32, i32) {
    %c0_i32 = arith.constant 0 : i32
    %c0_i32_0 = arith.constant 0 : i32
    return %arg0, %c0_i32 : i32, i32
  }
}

</mosaic_0001>

<llo_original>
// kernel: dnn_forward.1
$region0: #{dnn_forward.1}
  #allocation0 [shape = 'u32[]', space=smem, size = 0x4, offset = 0x4, fixed_abs, tag = 'smem constant byte address 0x4 - core index']
  #allocation1 [shape = 'u32[144,128]{1,0:T(1,128)}', space=vmem, size = 0x12000, scoped, tag = 'internal scratch']
  %s0 = inlined_call_operand.vmem [shape: bf16[2,128], index: 0, kind: input, shape index: {}]
  %s1 = inlined_call_operand.hbm [shape: bf16[128,2048], index: 1, kind: input, shape index: {}]
  %s2 = inlined_call_operand.hbm [shape: f32[1,1024], index: 2, kind: input, shape index: {}]
  %s3 = inlined_call_operand.hbm [shape: bf16[1024,1024], index: 3, kind: input, shape index: {}]
  %s4 = inlined_call_operand.hbm [shape: f32[1,512], index: 4, kind: input, shape index: {}]
  %s5 = inlined_call_operand.hbm [shape: bf16[512,256], index: 5, kind: input, shape index: {}]
  %s6 = inlined_call_operand.hbm [shape: f32[1,256], index: 6, kind: input, shape index: {}]
  %s7 = inlined_call_operand.hbm [shape: bf16[256,128], index: 7, kind: input, shape index: {}]
  %s8 = inlined_call_operand.hbm [shape: f32[1,128], index: 8, kind: input, shape index: {}]
  %s9 = inlined_call_operand.hbm [shape: bf16[128,128], index: 9, kind: input, shape index: {}]
  %s10 = inlined_call_operand.hbm [shape: f32[1,128], index: 10, kind: input, shape index: {}]
  %s11 = inlined_call_operand.hbm [shape: f32[2,128], index: 11, kind: output, shape index: {}]
  %s12 = sld [smem:[#allocation0]]
  $region94: #{dnn_forward.1} parent=0
    _
  %s14 = ssub.s32 1, %s12
  %s15 = scalar_select 0, %s14, %s12
  $region1: #{dnn_forward.1} parent=0
    #allocation2 [shape = 'u8[524288]{0}', space=vmem, size = 0x80000, scoped, tag = 'input window, operand 1, single buffered']
    #allocation3 [shape = 's32[1]{0}', space=sflag, size = 0x4, scoped, tag = 'scoped memory for dnn_forward.1']
    #allocation4 [shape = 's32[1]{0}', space=sflag, size = 0x4, scoped, tag = 'scoped memory for dnn_forward.1']
    #allocation5 [shape = 'u8[4096]{0}', space=vmem, size = 0x1000, scoped, tag = 'input window, operand 2, single buffered']
    #allocation6 [shape = 's32[1]{0}', space=sflag, size = 0x4, scoped, tag = 'scoped memory for dnn_forward.1']
    #allocation7 [shape = 'u8[2097152]{0}', space=vmem, size = 0x200000, scoped, tag = 'input window, operand 3, single buffered']
    #allocation8 [shape = 'u8[2048]{0}', space=vmem, size = 0x800, scoped, tag = 'input window, operand 4, single buffered']
    #allocation9 [shape = 's32[1]{0}', space=sflag, size = 0x4, scoped, tag = 'scoped memory for dnn_forward.1']
    #allocation10 [shape = 'u8[262144]{0}', space=vmem, size = 0x40000, scoped, tag = 'input window, operand 5, single buffered']
    #allocation11 [shape = 'u8[1024]{0}', space=vmem, size = 0x400, scoped, tag = 'input window, operand 6, single buffered']
    #allocation12 [shape = 's32[1]{0}', space=sflag, size = 0x4, scoped, tag = 'scoped memory for dnn_forward.1']
    #allocation13 [shape = 'u8[65536]{0}', space=vmem, size = 0x10000, scoped, tag = 'input window, operand 7, single buffered']
    #allocation14 [shape = 'u8[512]{0}', space=vmem, size = 0x400, scoped, tag = 'input window, operand 8, single buffered']
    #allocation15 [shape = 's32[1]{0}', space=sflag, size = 0x4, scoped, tag = 'scoped memory for dnn_forward.1']
    #allocation16 [shape = 'u8[32768]{0}', space=vmem, size = 0x8000, scoped, tag = 'input window, operand 9, single buffered']
    #allocation17 [shape = 'u8[512]{0}', space=vmem, size = 0x400, scoped, tag = 'input window, operand 10, single buffered']
    #allocation18 [shape = 's32[1]{0}', space=sflag, size = 0x4, scoped, tag = 'scoped memory for dnn_forward.1']
    #allocation19 [shape = 'u8[4096]{0}', space=vmem, size = 0x1000, scoped, tag = 'output window, operand 0, single buffered']
    %16 = vsyncpa [#allocation3], 0
    %17 = vsyncpa [#allocation6], 0
    %18 = vsyncpa [#allocation9], 0
    %19 = vsyncpa [#allocation12], 0
    %20 = vsyncpa [#allocation15], 0
    %21 = vsyncpa [#allocation18], 0
    %22 = vsyncpa [#allocation4], 0
    // Predicated region
    $region2: #{dnn_forward.1} parent=1 // pred_check
      _
    $region3: #{dnn_forward.1} parent=1 // pred_check_branch
      %24 = sbr.rel (0) target = $region5
    $region4: #{dnn_forward.1} parent=1 // pred_region
      _
    $region5: #{dnn_forward.1} parent=1 // pred_fallthru
      _
    // Predicated region
    $region6: #{dnn_forward.1} parent=1 // pred_check
      _
    $region7: #{dnn_forward.1} parent=1 // pred_check_branch
      %26 = sbr.rel (0) target = $region9
    $region8: #{dnn_forward.1} parent=1 // pred_region
      %s28 = ssub.s32 16384, 16384
      %29 = vsyncadd [#allocation3], %s28
      %s30 = sshll.u32 [#allocation2], 4
      %s31 = int_to_ptr.vmem [resolvable:$true] %s30
      %36 = dma.hbm_to_vmem [thread:$0]  %s1, 16384, %s31, [#allocation3], 1024, 1024, 64
    $region9: #{dnn_forward.1} parent=1 // pred_fallthru
      _
    // Predicated region
    $region10: #{dnn_forward.1} parent=1 // pred_check
      _
    $region11: #{dnn_forward.1} parent=1 // pred_check_branch
      %38 = sbr.rel (0) target = $region13
    $region12: #{dnn_forward.1} parent=1 // pred_region
      %s40 = ssub.s32 128, 128
      %41 = vsyncadd [#allocation6], %s40
      %s43 = sshll.u32 [#allocation5], 4
      %s44 = int_to_ptr.vmem [resolvable:$true] %s43
      %46 = dma.hbm_to_vmem [thread:$0]  %s2, 128, %s44, [#allocation6]
    $region13: #{dnn_forward.1} parent=1 // pred_fallthru
      _
    // Predicated region
    $region14: #{dnn_forward.1} parent=1 // pred_check
      _
    $region15: #{dnn_forward.1} parent=1 // pred_check_branch
      %48 = sbr.rel (0) target = $region17
    $region16: #{dnn_forward.1} parent=1 // pred_region
      %s50 = ssub.s32 65536, 65536
      %51 = vsyncadd [#allocation6], %s50
      %s52 = sshll.u32 [#allocation7], 4
      %s53 = int_to_ptr.vmem [resolvable:$true] %s52
      %58 = dma.hbm_to_vmem [thread:$0]  %s3, 65536, %s53, [#allocation6], 512, 512, 32
    $region17: #{dnn_forward.1} parent=1 // pred_fallthru
      _
    // Predicated region
    $region18: #{dnn_forward.1} parent=1 // pred_check
      _
    $region19: #{dnn_forward.1} parent=1 // pred_check_branch
      %60 = sbr.rel (0) target = $region21
    $region20: #{dnn_forward.1} parent=1 // pred_region
      %s62 = ssub.s32 64, 64
      %63 = vsyncadd [#allocation9], %s62
      %s65 = sshll.u32 [#allocation8], 4
      %s66 = int_to_ptr.vmem [resolvable:$true] %s65
      %68 = dma.hbm_to_vmem [thread:$0]  %s4, 64, %s66, [#allocation9]
    $region21: #{dnn_forward.1} parent=1 // pred_fallthru
      _
    // Predicated region
    $region22: #{dnn_forward.1} parent=1 // pred_check
      _
    $region23: #{dnn_forward.1} parent=1 // pred_check_branch
      %70 = sbr.rel (0) target = $region25
    $region24: #{dnn_forward.1} parent=1 // pred_region
      %s72 = ssub.s32 8192, 8192
      %73 = vsyncadd [#allocation9], %s72
      %s74 = sshll.u32 [#allocation10], 4
      %s75 = int_to_ptr.vmem [resolvable:$true] %s74
      %80 = dma.hbm_to_vmem [thread:$0]  %s5, 8192, %s75, [#allocation9], 128, 128, 8
    $region25: #{dnn_forward.1} parent=1 // pred_fallthru
      _
    // Predicated region
    $region26: #{dnn_forward.1} parent=1 // pred_check
      _
    $region27: #{dnn_forward.1} parent=1 // pred_check_branch
      %82 = sbr.rel (0) target = $region29
    $region28: #{dnn_forward.1} parent=1 // pred_region
      %s84 = ssub.s32 32, 32
      %85 = vsyncadd [#allocation12], %s84
      %s87 = sshll.u32 [#allocation11], 4
      %s88 = int_to_ptr.vmem [resolvable:$true] %s87
      %90 = dma.hbm_to_vmem [thread:$0]  %s6, 32, %s88, [#allocation12]
    $region29: #{dnn_forward.1} parent=1 // pred_fallthru
      _
    // Predicated region
    $region30: #{dnn_forward.1} parent=1 // pred_check
      _
    $region31: #{dnn_forward.1} parent=1 // pred_check_branch
      %92 = sbr.rel (0) target = $region33
    $region32: #{dnn_forward.1} parent=1 // pred_region
      %s94 = ssub.s32 2048, 2048
      %95 = vsyncadd [#allocation12], %s94
      %s96 = sshll.u32 [#allocation13], 4
      %s97 = int_to_ptr.vmem [resolvable:$true] %s96
      %102 = dma.hbm_to_vmem [thread:$0]  %s7, 2048, %s97, [#allocation12], 64, 64, 4
    $region33: #{dnn_forward.1} parent=1 // pred_fallthru
      _
    // Predicated region
    $region34: #{dnn_forward.1} parent=1 // pred_check
      _
    $region35: #{dnn_forward.1} parent=1 // pred_check_branch
      %104 = sbr.rel (0) target = $region37
    $region36: #{dnn_forward.1} parent=1 // pred_region
      %s106 = ssub.s32 16, 16
      %107 = vsyncadd [#allocation15], %s106
      %s109 = sshll.u32 [#allocation14], 4
      %s110 = int_to_ptr.vmem [resolvable:$true] %s109
      %112 = dma.hbm_to_vmem [thread:$0]  %s8, 16, %s110, [#allocation15]
    $region37: #{dnn_forward.1} parent=1 // pred_fallthru
      _
    // Predicated region
    $region38: #{dnn_forward.1} parent=1 // pred_check
      _
    $region39: #{dnn_forward.1} parent=1 // pred_check_branch
      %114 = sbr.rel (0) target = $region41
    $region40: #{dnn_forward.1} parent=1 // pred_region
      %s116 = ssub.s32 1024, 1024
      %117 = vsyncadd [#allocation15], %s116
      %s118 = sshll.u32 [#allocation16], 4
      %s119 = int_to_ptr.vmem [resolvable:$true] %s118
      %124 = dma.hbm_to_vmem [thread:$0]  %s9, 1024, %s119, [#allocation15], 64, 64, 4
    $region41: #{dnn_forward.1} parent=1 // pred_fallthru
      _
    // Predicated region
    $region42: #{dnn_forward.1} parent=1 // pred_check
      _
    $region43: #{dnn_forward.1} parent=1 // pred_check_branch
      %126 = sbr.rel (0) target = $region45
    $region44: #{dnn_forward.1} parent=1 // pred_region
      %s128 = ssub.s32 16, 16
      %129 = vsyncadd [#allocation18], %s128
      %s131 = sshll.u32 [#allocation17], 4
      %s132 = int_to_ptr.vmem [resolvable:$true] %s131
      %134 = dma.hbm_to_vmem [thread:$0]  %s10, 16, %s132, [#allocation18]
    $region45: #{dnn_forward.1} parent=1 // pred_fallthru
      _
    // Predicated region
    $region46: #{dnn_forward.1} parent=1 // pred_check
      _
    $region47: #{dnn_forward.1} parent=1 // pred_check_branch
      %136 = sbr.rel (0) target = $region49
    $region48: #{dnn_forward.1} parent=1 // pred_region
      %137 = dma.done [#allocation3], 16384
    $region49: #{dnn_forward.1} parent=1 // pred_fallthru
      _
    // Predicated region
    $region50: #{dnn_forward.1} parent=1 // pred_check
      _
    $region51: #{dnn_forward.1} parent=1 // pred_check_branch
      %139 = sbr.rel (0) target = $region53
    $region52: #{dnn_forward.1} parent=1 // pred_region
      %140 = dma.done [#allocation6], 128
    $region53: #{dnn_forward.1} parent=1 // pred_fallthru
      _
    // Predicated region
    $region54: #{dnn_forward.1} parent=1 // pred_check
      _
    $region55: #{dnn_forward.1} parent=1 // pred_check_branch
      %142 = sbr.rel (0) target = $region57
    $region56: #{dnn_forward.1} parent=1 // pred_region
      %143 = dma.done [#allocation6], 65536
    $region57: #{dnn_forward.1} parent=1 // pred_fallthru
      _
    // Predicated region
    $region58: #{dnn_forward.1} parent=1 // pred_check
      _
    $region59: #{dnn_forward.1} parent=1 // pred_check_branch
      %145 = sbr.rel (0) target = $region61
    $region60: #{dnn_forward.1} parent=1 // pred_region
      %146 = dma.done [#allocation9], 64
    $region61: #{dnn_forward.1} parent=1 // pred_fallthru
      _
    // Predicated region
    $region62: #{dnn_forward.1} parent=1 // pred_check
      _
    $region63: #{dnn_forward.1} parent=1 // pred_check_branch
      %148 = sbr.rel (0) target = $region65
    $region64: #{dnn_forward.1} parent=1 // pred_region
      %149 = dma.done [#allocation9], 8192
    $region65: #{dnn_forward.1} parent=1 // pred_fallthru
      _
    // Predicated region
    $region66: #{dnn_forward.1} parent=1 // pred_check
      _
    $region67: #{dnn_forward.1} parent=1 // pred_check_branch
      %151 = sbr.rel (0) target = $region69
    $region68: #{dnn_forward.1} parent=1 // pred_region
      %152 = dma.done [#allocation12], 32
    $region69: #{dnn_forward.1} parent=1 // pred_fallthru
      _
    // Predicated region
    $region70: #{dnn_forward.1} parent=1 // pred_check
      _
    $region71: #{dnn_forward.1} parent=1 // pred_check_branch
      %154 = sbr.rel (0) target = $region73
    $region72: #{dnn_forward.1} parent=1 // pred_region
      %155 = dma.done [#allocation12], 2048
    $region73: #{dnn_forward.1} parent=1 // pred_fallthru
      _
    // Predicated region
    $region74: #{dnn_forward.1} parent=1 // pred_check
      _
    $region75: #{dnn_forward.1} parent=1 // pred_check_branch
      %157 = sbr.rel (0) target = $region77
    $region76: #{dnn_forward.1} parent=1 // pred_region
      %158 = dma.done [#allocation15], 16
    $region77: #{dnn_forward.1} parent=1 // pred_fallthru
      _
    // Predicated region
    $region78: #{dnn_forward.1} parent=1 // pred_check
      _
    $region79: #{dnn_forward.1} parent=1 // pred_check_branch
      %160 = sbr.rel (0) target = $region81
    $region80: #{dnn_forward.1} parent=1 // pred_region
      %161 = dma.done [#allocation15], 1024
    $region81: #{dnn_forward.1} parent=1 // pred_fallthru
      _
    // Predicated region
    $region82: #{dnn_forward.1} parent=1 // pred_check
      _
    $region83: #{dnn_forward.1} parent=1 // pred_check_branch
      %163 = sbr.rel (0) target = $region85
    $region84: #{dnn_forward.1} parent=1 // pred_region
      %164 = dma.done [#allocation18], 16
    $region85: #{dnn_forward.1} parent=1 // pred_fallthru
      _
    %v166 = vld [vmem:[%s0] sm:$0x1]
    %v167 = vld [vmem:[%s0 + $0x1] sm:$0x1]
    %v168 = vld [vmem:[%s0 + $0x2] sm:$0x1]
    %v169 = vld [vmem:[%s0 + $0x3] sm:$0x1]
    %v170 = vld [vmem:[#allocation2] sm:$0xff]
    %v171 = vld [vmem:[#allocation2 + $0x8] sm:$0xff]
    %v172 = vld [vmem:[#allocation2 + $0x10] sm:$0xff]
    %v173 = vld [vmem:[#allocation2 + $0x18] sm:$0xff]
    %v174 = vld [vmem:[#allocation2 + $0x20] sm:$0xff]
    %v175 = vld [vmem:[#allocation2 + $0x28] sm:$0xff]
    %v176 = vld [vmem:[#allocation2 + $0x30] sm:$0xff]
    %v177 = vld [vmem:[#allocation2 + $0x38] sm:$0xff]
    %v178 = vld [vmem:[#allocation2 + $0x40] sm:$0xff]
    %v179 = vld [vmem:[#allocation2 + $0x48] sm:$0xff]
    %v180 = vld [vmem:[#allocation2 + $0x50] sm:$0xff]
    %v181 = vld [vmem:[#allocation2 + $0x58] sm:$0xff]
    %v182 = vld [vmem:[#allocation2 + $0x60] sm:$0xff]
    %v183 = vld [vmem:[#allocation2 + $0x68] sm:$0xff]
    %v184 = vld [vmem:[#allocation2 + $0x70] sm:$0xff]
    %v185 = vld [vmem:[#allocation2 + $0x78] sm:$0xff]
    %v186 = vld [vmem:[#allocation2 + $0x80] sm:$0xff]
    %v187 = vld [vmem:[#allocation2 + $0x88] sm:$0xff]
    %v188 = vld [vmem:[#allocation2 + $0x90] sm:$0xff]
    %v189 = vld [vmem:[#allocation2 + $0x98] sm:$0xff]
    %v190 = vld [vmem:[#allocation2 + $0xa0] sm:$0xff]
    %v191 = vld [vmem:[#allocation2 + $0xa8] sm:$0xff]
    %v192 = vld [vmem:[#allocation2 + $0xb0] sm:$0xff]
    %v193 = vld [vmem:[#allocation2 + $0xb8] sm:$0xff]
    %v194 = vld [vmem:[#allocation2 + $0xc0] sm:$0xff]
    %v195 = vld [vmem:[#allocation2 + $0xc8] sm:$0xff]
    %v196 = vld [vmem:[#allocation2 + $0xd0] sm:$0xff]
    %v197 = vld [vmem:[#allocation2 + $0xd8] sm:$0xff]
    %v198 = vld [vmem:[#allocation2 + $0xe0] sm:$0xff]
    %v199 = vld [vmem:[#allocation2 + $0xe8] sm:$0xff]
    %v200 = vld [vmem:[#allocation2 + $0xf0] sm:$0xff]
    %v201 = vld [vmem:[#allocation2 + $0xf8] sm:$0xff]
    %v202 = vld [vmem:[#allocation2 + $0x100] sm:$0xff]
    %v203 = vld [vmem:[#allocation2 + $0x108] sm:$0xff]
    %v204 = vld [vmem:[#allocation2 + $0x110] sm:$0xff]
    %v205 = vld [vmem:[#allocation2 + $0x118] sm:$0xff]
    %v206 = vld [vmem:[#allocation2 + $0x120] sm:$0xff]
    %v207 = vld [vmem:[#allocation2 + $0x128] sm:$0xff]
    %v208 = vld [vmem:[#allocation2 + $0x130] sm:$0xff]
    %v209 = vld [vmem:[#allocation2 + $0x138] sm:$0xff]
    %v210 = vld [vmem:[#allocation2 + $0x140] sm:$0xff]
    %v211 = vld [vmem:[#allocation2 + $0x148] sm:$0xff]
    %v212 = vld [vmem:[#allocation2 + $0x150] sm:$0xff]
    %v213 = vld [vmem:[#allocation2 + $0x158] sm:$0xff]
    %v214 = vld [vmem:[#allocation2 + $0x160] sm:$0xff]
    %v215 = vld [vmem:[#allocation2 + $0x168] sm:$0xff]
    %v216 = vld [vmem:[#allocation2 + $0x170] sm:$0xff]
    %v217 = vld [vmem:[#allocation2 + $0x178] sm:$0xff]
    %v218 = vld [vmem:[#allocation2 + $0x180] sm:$0xff]
    %v219 = vld [vmem:[#allocation2 + $0x188] sm:$0xff]
    %v220 = vld [vmem:[#allocation2 + $0x190] sm:$0xff]
    %v221 = vld [vmem:[#allocation2 + $0x198] sm:$0xff]
    %v222 = vld [vmem:[#allocation2 + $0x1a0] sm:$0xff]
    %v223 = vld [vmem:[#allocation2 + $0x1a8] sm:$0xff]
    %v224 = vld [vmem:[#allocation2 + $0x1b0] sm:$0xff]
    %v225 = vld [vmem:[#allocation2 + $0x1b8] sm:$0xff]
    %v226 = vld [vmem:[#allocation2 + $0x1c0] sm:$0xff]
    %v227 = vld [vmem:[#allocation2 + $0x1c8] sm:$0xff]
    %v228 = vld [vmem:[#allocation2 + $0x1d0] sm:$0xff]
    %v229 = vld [vmem:[#allocation2 + $0x1d8] sm:$0xff]
    %v230 = vld [vmem:[#allocation2 + $0x1e0] sm:$0xff]
    %v231 = vld [vmem:[#allocation2 + $0x1e8] sm:$0xff]
    %v232 = vld [vmem:[#allocation2 + $0x1f0] sm:$0xff]
    %v233 = vld [vmem:[#allocation2 + $0x1f8] sm:$0xff]
    %v234 = vld [vmem:[#allocation2 + $0x200] sm:$0xff]
    %v235 = vld [vmem:[#allocation2 + $0x208] sm:$0xff]
    %v236 = vld [vmem:[#allocation2 + $0x210] sm:$0xff]
    %v237 = vld [vmem:[#allocation2 + $0x218] sm:$0xff]
    %v238 = vld [vmem:[#allocation2 + $0x220] sm:$0xff]
    %v239 = vld [vmem:[#allocation2 + $0x228] sm:$0xff]
    %v240 = vld [vmem:[#allocation2 + $0x230] sm:$0xff]
    %v241 = vld [vmem:[#allocation2 + $0x238] sm:$0xff]
    %v242 = vld [vmem:[#allocation2 + $0x240] sm:$0xff]
    %v243 = vld [vmem:[#allocation2 + $0x248] sm:$0xff]
    %v244 = vld [vmem:[#allocation2 + $0x250] sm:$0xff]
    %v245 = vld [vmem:[#allocation2 + $0x258] sm:$0xff]
    %v246 = vld [vmem:[#allocation2 + $0x260] sm:$0xff]
    %v247 = vld [vmem:[#allocation2 + $0x268] sm:$0xff]
    %v248 = vld [vmem:[#allocation2 + $0x270] sm:$0xff]
    %v249 = vld [vmem:[#allocation2 + $0x278] sm:$0xff]
    %v250 = vld [vmem:[#allocation2 + $0x280] sm:$0xff]
    %v251 = vld [vmem:[#allocation2 + $0x288] sm:$0xff]
    %v252 = vld [vmem:[#allocation2 + $0x290] sm:$0xff]
    %v253 = vld [vmem:[#allocation2 + $0x298] sm:$0xff]
    %v254 = vld [vmem:[#allocation2 + $0x2a0] sm:$0xff]
    %v255 = vld [vmem:[#allocation2 + $0x2a8] sm:$0xff]
    %v256 = vld [vmem:[#allocation2 + $0x2b0] sm:$0xff]
    %v257 = vld [vmem:[#allocation2 + $0x2b8] sm:$0xff]
    %v258 = vld [vmem:[#allocation2 + $0x2c0] sm:$0xff]
    %v259 = vld [vmem:[#allocation2 + $0x2c8] sm:$0xff]
    %v260 = vld [vmem:[#allocation2 + $0x2d0] sm:$0xff]
    %v261 = vld [vmem:[#allocation2 + $0x2d8] sm:$0xff]
    %v262 = vld [vmem:[#allocation2 + $0x2e0] sm:$0xff]
    %v263 = vld [vmem:[#allocation2 + $0x2e8] sm:$0xff]
    %v264 = vld [vmem:[#allocation2 + $0x2f0] sm:$0xff]
    %v265 = vld [vmem:[#allocation2 + $0x2f8] sm:$0xff]
    %v266 = vld [vmem:[#allocation2 + $0x300] sm:$0xff]
    %v267 = vld [vmem:[#allocation2 + $0x308] sm:$0xff]
    %v268 = vld [vmem:[#allocation2 + $0x310] sm:$0xff]
    %v269 = vld [vmem:[#allocation2 + $0x318] sm:$0xff]
    %v270 = vld [vmem:[#allocation2 + $0x320] sm:$0xff]
    %v271 = vld [vmem:[#allocation2 + $0x328] sm:$0xff]
    %v272 = vld [vmem:[#allocation2 + $0x330] sm:$0xff]
    %v273 = vld [vmem:[#allocation2 + $0x338] sm:$0xff]
    %v274 = vld [vmem:[#allocation2 + $0x340] sm:$0xff]
    %v275 = vld [vmem:[#allocation2 + $0x348] sm:$0xff]
    %v276 = vld [vmem:[#allocation2 + $0x350] sm:$0xff]
    %v277 = vld [vmem:[#allocation2 + $0x358] sm:$0xff]
    %v278 = vld [vmem:[#allocation2 + $0x360] sm:$0xff]
    %v279 = vld [vmem:[#allocation2 + $0x368] sm:$0xff]
    %v280 = vld [vmem:[#allocation2 + $0x370] sm:$0xff]
    %v281 = vld [vmem:[#allocation2 + $0x378] sm:$0xff]
    %v282 = vld [vmem:[#allocation2 + $0x380] sm:$0xff]
    %v283 = vld [vmem:[#allocation2 + $0x388] sm:$0xff]
    %v284 = vld [vmem:[#allocation2 + $0x390] sm:$0xff]
    %v285 = vld [vmem:[#allocation2 + $0x398] sm:$0xff]
    %v286 = vld [vmem:[#allocation2 + $0x3a0] sm:$0xff]
    %v287 = vld [vmem:[#allocation2 + $0x3a8] sm:$0xff]
    %v288 = vld [vmem:[#allocation2 + $0x3b0] sm:$0xff]
    %v289 = vld [vmem:[#allocation2 + $0x3b8] sm:$0xff]
    %v290 = vld [vmem:[#allocation2 + $0x3c0] sm:$0xff]
    %v291 = vld [vmem:[#allocation2 + $0x3c8] sm:$0xff]
    %v292 = vld [vmem:[#allocation2 + $0x3d0] sm:$0xff]
    %v293 = vld [vmem:[#allocation2 + $0x3d8] sm:$0xff]
    %v294 = vld [vmem:[#allocation2 + $0x3e0] sm:$0xff]
    %v295 = vld [vmem:[#allocation2 + $0x3e8] sm:$0xff]
    %v296 = vld [vmem:[#allocation2 + $0x3f0] sm:$0xff]
    %v297 = vld [vmem:[#allocation2 + $0x3f8] sm:$0xff]
    %v302 = vcombine.low %v166, %v167
    %v303 = vcombine.low %v168, %v169
    %v305 = vunpack.c.l.s4 1966171168
    %v306 = vunpack.c.0.s8 %v305
    %v307 = vlaneseq
    %v308 = vshrl.u32 %v307, 7
    %v309 = vsub.s32 %v306, %v308
    %v310 = vrot.slane %v302, %v309
    %v312 = vunpack.c.l.s4 1966171168
    %v313 = vunpack.c.0.s8 %v312
    %v314 = vlaneseq
    %v315 = vshrl.u32 %v314, 7
    %v316 = vsub.s32 %v313, %v315
    %v317 = vrot.slane %v303, %v316
    %v318 = vcombine.low %v310, %v317
    %v320 = vunpack.c.l.s4 1966171168
    %v321 = vunpack.c.0.s8 %v320
    %v322 = vlaneseq
    %v323 = vshrl.u32 %v322, 7
    %v324 = vsub.s32 %v321, %v323
    %v325 = vrot.slane %v318, %v324
    %v455 = vunpack.c.l.b16 %v170
    %v456 = vunpack.c.h.b16 %v170
    %v457 = vunpack.c.l.b16 %v171
    %v458 = vunpack.c.h.b16 %v171
    %v459 = vunpack.c.l.b16 %v172
    %v460 = vunpack.c.h.b16 %v172
    %v461 = vunpack.c.l.b16 %v173
    %v462 = vunpack.c.h.b16 %v173
    %v463 = vunpack.c.l.b16 %v174
    %v464 = vunpack.c.h.b16 %v174
    %v465 = vunpack.c.l.b16 %v175
    %v466 = vunpack.c.h.b16 %v175
    %v467 = vunpack.c.l.b16 %v176
    %v468 = vunpack.c.h.b16 %v176
    %v469 = vunpack.c.l.b16 %v177
    %v470 = vunpack.c.h.b16 %v177
    %v471 = vunpack.c.l.b16 %v178
    %v472 = vunpack.c.h.b16 %v178
    %v473 = vunpack.c.l.b16 %v179
    %v474 = vunpack.c.h.b16 %v179
    %v475 = vunpack.c.l.b16 %v180
    %v476 = vunpack.c.h.b16 %v180
    %v477 = vunpack.c.l.b16 %v181
    %v478 = vunpack.c.h.b16 %v181
    %v479 = vunpack.c.l.b16 %v182
    %v480 = vunpack.c.h.b16 %v182
    %v481 = vunpack.c.l.b16 %v183
    %v482 = vunpack.c.h.b16 %v183
    %v483 = vunpack.c.l.b16 %v184
    %v484 = vunpack.c.h.b16 %v184
    %v485 = vunpack.c.l.b16 %v185
    %v486 = vunpack.c.h.b16 %v185
    %v487 = vunpack.c.l.b16 %v186
    %v488 = vunpack.c.h.b16 %v186
    %v489 = vunpack.c.l.b16 %v187
    %v490 = vunpack.c.h.b16 %v187
    %v491 = vunpack.c.l.b16 %v188
    %v492 = vunpack.c.h.b16 %v188
    %v493 = vunpack.c.l.b16 %v189
    %v494 = vunpack.c.h.b16 %v189
    %v495 = vunpack.c.l.b16 %v190
    %v496 = vunpack.c.h.b16 %v190
    %v497 = vunpack.c.l.b16 %v191
    %v498 = vunpack.c.h.b16 %v191
    %v499 = vunpack.c.l.b16 %v192
    %v500 = vunpack.c.h.b16 %v192
    %v501 = vunpack.c.l.b16 %v193
    %v502 = vunpack.c.h.b16 %v193
    %v503 = vunpack.c.l.b16 %v194
    %v504 = vunpack.c.h.b16 %v194
    %v505 = vunpack.c.l.b16 %v195
    %v506 = vunpack.c.h.b16 %v195
    %v507 = vunpack.c.l.b16 %v196
    %v508 = vunpack.c.h.b16 %v196
    %v509 = vunpack.c.l.b16 %v197
    %v510 = vunpack.c.h.b16 %v197
    %v511 = vunpack.c.l.b16 %v198
    %v512 = vunpack.c.h.b16 %v198
    %v513 = vunpack.c.l.b16 %v199
    %v514 = vunpack.c.h.b16 %v199
    %v515 = vunpack.c.l.b16 %v200
    %v516 = vunpack.c.h.b16 %v200
    %v517 = vunpack.c.l.b16 %v201
    %v518 = vunpack.c.h.b16 %v201
    %v519 = vunpack.c.l.b16 %v202
    %v520 = vunpack.c.h.b16 %v202
    %v521 = vunpack.c.l.b16 %v203
    %v522 = vunpack.c.h.b16 %v203
    %v523 = vunpack.c.l.b16 %v204
    %v524 = vunpack.c.h.b16 %v204
    %v525 = vunpack.c.l.b16 %v205
    %v526 = vunpack.c.h.b16 %v205
    %v527 = vunpack.c.l.b16 %v206
    %v528 = vunpack.c.h.b16 %v206
    %v529 = vunpack.c.l.b16 %v207
    %v530 = vunpack.c.h.b16 %v207
    %v531 = vunpack.c.l.b16 %v208
    %v532 = vunpack.c.h.b16 %v208
    %v533 = vunpack.c.l.b16 %v209
    %v534 = vunpack.c.h.b16 %v209
    %v535 = vunpack.c.l.b16 %v210
    %v536 = vunpack.c.h.b16 %v210
    %v537 = vunpack.c.l.b16 %v211
    %v538 = vunpack.c.h.b16 %v211
    %v539 = vunpack.c.l.b16 %v212
    %v540 = vunpack.c.h.b16 %v212
    %v541 = vunpack.c.l.b16 %v213
    %v542 = vunpack.c.h.b16 %v213
    %v543 = vunpack.c.l.b16 %v214
    %v544 = vunpack.c.h.b16 %v214
    %v545 = vunpack.c.l.b16 %v215
    %v546 = vunpack.c.h.b16 %v215
    %v547 = vunpack.c.l.b16 %v216
    %v548 = vunpack.c.h.b16 %v216
    %v549 = vunpack.c.l.b16 %v217
    %v550 = vunpack.c.h.b16 %v217
    %v551 = vunpack.c.l.b16 %v218
    %v552 = vunpack.c.h.b16 %v218
    %v553 = vunpack.c.l.b16 %v219
    %v554 = vunpack.c.h.b16 %v219
    %v555 = vunpack.c.l.b16 %v220
    %v556 = vunpack.c.h.b16 %v220
    %v557 = vunpack.c.l.b16 %v221
    %v558 = vunpack.c.h.b16 %v221
    %v559 = vunpack.c.l.b16 %v222
    %v560 = vunpack.c.h.b16 %v222
    %v561 = vunpack.c.l.b16 %v223
    %v562 = vunpack.c.h.b16 %v223
    %v563 = vunpack.c.l.b16 %v224
    %v564 = vunpack.c.h.b16 %v224
    %v565 = vunpack.c.l.b16 %v225
    %v566 = vunpack.c.h.b16 %v225
    %v567 = vunpack.c.l.b16 %v226
    %v568 = vunpack.c.h.b16 %v226
    %v569 = vunpack.c.l.b16 %v227
    %v570 = vunpack.c.h.b16 %v227
    %v571 = vunpack.c.l.b16 %v228
    %v572 = vunpack.c.h.b16 %v228
    %v573 = vunpack.c.l.b16 %v229
    %v574 = vunpack.c.h.b16 %v229
    %v575 = vunpack.c.l.b16 %v230
    %v576 = vunpack.c.h.b16 %v230
    %v577 = vunpack.c.l.b16 %v231
    %v578 = vunpack.c.h.b16 %v231
    %v579 = vunpack.c.l.b16 %v232
    %v580 = vunpack.c.h.b16 %v232
    %v581 = vunpack.c.l.b16 %v233
    %v582 = vunpack.c.h.b16 %v233
    %v583 = vunpack.c.l.b16 %v234
    %v584 = vunpack.c.h.b16 %v234
    %v585 = vunpack.c.l.b16 %v235
    %v586 = vunpack.c.h.b16 %v235
    %v587 = vunpack.c.l.b16 %v236
    %v588 = vunpack.c.h.b16 %v236
    %v589 = vunpack.c.l.b16 %v237
    %v590 = vunpack.c.h.b16 %v237
    %v591 = vunpack.c.l.b16 %v238
    %v592 = vunpack.c.h.b16 %v238
    %v593 = vunpack.c.l.b16 %v239
    %v594 = vunpack.c.h.b16 %v239
    %v595 = vunpack.c.l.b16 %v240
    %v596 = vunpack.c.h.b16 %v240
    %v597 = vunpack.c.l.b16 %v241
    %v598 = vunpack.c.h.b16 %v241
    %v599 = vunpack.c.l.b16 %v242
    %v600 = vunpack.c.h.b16 %v242
    %v601 = vunpack.c.l.b16 %v243
    %v602 = vunpack.c.h.b16 %v243
    %v603 = vunpack.c.l.b16 %v244
    %v604 = vunpack.c.h.b16 %v244
    %v605 = vunpack.c.l.b16 %v245
    %v606 = vunpack.c.h.b16 %v245
    %v607 = vunpack.c.l.b16 %v246
    %v608 = vunpack.c.h.b16 %v246
    %v609 = vunpack.c.l.b16 %v247
    %v610 = vunpack.c.h.b16 %v247
    %v611 = vunpack.c.l.b16 %v248
    %v612 = vunpack.c.h.b16 %v248
    %v613 = vunpack.c.l.b16 %v249
    %v614 = vunpack.c.h.b16 %v249
    %v615 = vunpack.c.l.b16 %v250
    %v616 = vunpack.c.h.b16 %v250
    %v617 = vunpack.c.l.b16 %v251
    %v618 = vunpack.c.h.b16 %v251
    %v619 = vunpack.c.l.b16 %v252
    %v620 = vunpack.c.h.b16 %v252
    %v621 = vunpack.c.l.b16 %v253
    %v622 = vunpack.c.h.b16 %v253
    %v623 = vunpack.c.l.b16 %v254
    %v624 = vunpack.c.h.b16 %v254
    %v625 = vunpack.c.l.b16 %v255
    %v626 = vunpack.c.h.b16 %v255
    %v627 = vunpack.c.l.b16 %v256
    %v628 = vunpack.c.h.b16 %v256
    %v629 = vunpack.c.l.b16 %v257
    %v630 = vunpack.c.h.b16 %v257
    %v631 = vunpack.c.l.b16 %v258
    %v632 = vunpack.c.h.b16 %v258
    %v633 = vunpack.c.l.b16 %v259
    %v634 = vunpack.c.h.b16 %v259
    %v635 = vunpack.c.l.b16 %v260
    %v636 = vunpack.c.h.b16 %v260
    %v637 = vunpack.c.l.b16 %v261
    %v638 = vunpack.c.h.b16 %v261
    %v639 = vunpack.c.l.b16 %v262
    %v640 = vunpack.c.h.b16 %v262
    %v641 = vunpack.c.l.b16 %v263
    %v642 = vunpack.c.h.b16 %v263
    %v643 = vunpack.c.l.b16 %v264
    %v644 = vunpack.c.h.b16 %v264
    %v645 = vunpack.c.l.b16 %v265
    %v646 = vunpack.c.h.b16 %v265
    %v647 = vunpack.c.l.b16 %v266
    %v648 = vunpack.c.h.b16 %v266
    %v649 = vunpack.c.l.b16 %v267
    %v650 = vunpack.c.h.b16 %v267
    %v651 = vunpack.c.l.b16 %v268
    %v652 = vunpack.c.h.b16 %v268
    %v653 = vunpack.c.l.b16 %v269
    %v654 = vunpack.c.h.b16 %v269
    %v655 = vunpack.c.l.b16 %v270
    %v656 = vunpack.c.h.b16 %v270
    %v657 = vunpack.c.l.b16 %v271
    %v658 = vunpack.c.h.b16 %v271
    %v659 = vunpack.c.l.b16 %v272
    %v660 = vunpack.c.h.b16 %v272
    %v661 = vunpack.c.l.b16 %v273
    %v662 = vunpack.c.h.b16 %v273
    %v663 = vunpack.c.l.b16 %v274
    %v664 = vunpack.c.h.b16 %v274
    %v665 = vunpack.c.l.b16 %v275
    %v666 = vunpack.c.h.b16 %v275
    %v667 = vunpack.c.l.b16 %v276
    %v668 = vunpack.c.h.b16 %v276
    %v669 = vunpack.c.l.b16 %v277
    %v670 = vunpack.c.h.b16 %v277
    %v671 = vunpack.c.l.b16 %v278
    %v672 = vunpack.c.h.b16 %v278
    %v673 = vunpack.c.l.b16 %v279
    %v674 = vunpack.c.h.b16 %v279
    %v675 = vunpack.c.l.b16 %v280
    %v676 = vunpack.c.h.b16 %v280
    %v677 = vunpack.c.l.b16 %v281
    %v678 = vunpack.c.h.b16 %v281
    %v679 = vunpack.c.l.b16 %v282
    %v680 = vunpack.c.h.b16 %v282
    %v681 = vunpack.c.l.b16 %v283
    %v682 = vunpack.c.h.b16 %v283
    %v683 = vunpack.c.l.b16 %v284
    %v684 = vunpack.c.h.b16 %v284
    %v685 = vunpack.c.l.b16 %v285
    %v686 = vunpack.c.h.b16 %v285
    %v687 = vunpack.c.l.b16 %v286
    %v688 = vunpack.c.h.b16 %v286
    %v689 = vunpack.c.l.b16 %v287
    %v690 = vunpack.c.h.b16 %v287
    %v691 = vunpack.c.l.b16 %v288
    %v692 = vunpack.c.h.b16 %v288
    %v693 = vunpack.c.l.b16 %v289
    %v694 = vunpack.c.h.b16 %v289
    %v695 = vunpack.c.l.b16 %v290
    %v696 = vunpack.c.h.b16 %v290
    %v697 = vunpack.c.l.b16 %v291
    %v698 = vunpack.c.h.b16 %v291
    %v699 = vunpack.c.l.b16 %v292
    %v700 = vunpack.c.h.b16 %v292
    %v701 = vunpack.c.l.b16 %v293
    %v702 = vunpack.c.h.b16 %v293
    %v703 = vunpack.c.l.b16 %v294
    %v704 = vunpack.c.h.b16 %v294
    %v705 = vunpack.c.l.b16 %v295
    %v706 = vunpack.c.h.b16 %v295
    %v707 = vunpack.c.l.b16 %v296
    %v708 = vunpack.c.h.b16 %v296
    %v709 = vunpack.c.l.b16 %v297
    %v710 = vunpack.c.h.b16 %v297
    %v711 = vpack.c.b16 %v471, %v455
    %v712 = vpack.c.b16 %v472, %v456
    %v713 = vpack.c.b16 %v473, %v457
    %v714 = vpack.c.b16 %v474, %v458
    %v715 = vpack.c.b16 %v475, %v459
    %v716 = vpack.c.b16 %v476, %v460
    %v717 = vpack.c.b16 %v477, %v461
    %v718 = vpack.c.b16 %v478, %v462
    %v719 = vpack.c.b16 %v479, %v463
    %v720 = vpack.c.b16 %v480, %v464
    %v721 = vpack.c.b16 %v481, %v465
    %v722 = vpack.c.b16 %v482, %v466
    %v723 = vpack.c.b16 %v483, %v467
    %v724 = vpack.c.b16 %v484, %v468
    %v725 = vpack.c.b16 %v485, %v469
    %v726 = vpack.c.b16 %v486, %v470
    %v727 = vpack.c.b16 %v503, %v487
    %v728 = vpack.c.b16 %v504, %v488
    %v729 = vpack.c.b16 %v505, %v489
    %v730 = vpack.c.b16 %v506, %v490
    %v731 = vpack.c.b16 %v507, %v491
    %v732 = vpack.c.b16 %v508, %v492
    %v733 = vpack.c.b16 %v509, %v493
    %v734 = vpack.c.b16 %v510, %v494
    %v735 = vpack.c.b16 %v511, %v495
    %v736 = vpack.c.b16 %v512, %v496
    %v737 = vpack.c.b16 %v513, %v497
    %v738 = vpack.c.b16 %v514, %v498
    %v739 = vpack.c.b16 %v515, %v499
    %v740 = vpack.c.b16 %v516, %v500
    %v741 = vpack.c.b16 %v517, %v501
    %v742 = vpack.c.b16 %v518, %v502
    %v743 = vpack.c.b16 %v535, %v519
    %v744 = vpack.c.b16 %v536, %v520
    %v745 = vpack.c.b16 %v537, %v521
    %v746 = vpack.c.b16 %v538, %v522
    %v747 = vpack.c.b16 %v539, %v523
    %v748 = vpack.c.b16 %v540, %v524
    %v749 = vpack.c.b16 %v541, %v525
    %v750 = vpack.c.b16 %v542, %v526
    %v751 = vpack.c.b16 %v543, %v527
    %v752 = vpack.c.b16 %v544, %v528
    %v753 = vpack.c.b16 %v545, %v529
    %v754 = vpack.c.b16 %v546, %v530
    %v755 = vpack.c.b16 %v547, %v531
    %v756 = vpack.c.b16 %v548, %v532
    %v757 = vpack.c.b16 %v549, %v533
    %v758 = vpack.c.b16 %v550, %v534
    %v759 = vpack.c.b16 %v567, %v551
    %v760 = vpack.c.b16 %v568, %v552
    %v761 = vpack.c.b16 %v569, %v553
    %v762 = vpack.c.b16 %v570, %v554
    %v763 = vpack.c.b16 %v571, %v555
    %v764 = vpack.c.b16 %v572, %v556
    %v765 = vpack.c.b16 %v573, %v557
    %v766 = vpack.c.b16 %v574, %v558
    %v767 = vpack.c.b16 %v575, %v559
    %v768 = vpack.c.b16 %v576, %v560
    %v769 = vpack.c.b16 %v577, %v561
    %v770 = vpack.c.b16 %v578, %v562
    %v771 = vpack.c.b16 %v579, %v563
    %v772 = vpack.c.b16 %v580, %v564
    %v773 = vpack.c.b16 %v581, %v565
    %v774 = vpack.c.b16 %v582, %v566
    %v775 = vpack.c.b16 %v599, %v583
    %v776 = vpack.c.b16 %v600, %v584
    %v777 = vpack.c.b16 %v601, %v585
    %v778 = vpack.c.b16 %v602, %v586
    %v779 = vpack.c.b16 %v603, %v587
    %v780 = vpack.c.b16 %v604, %v588
    %v781 = vpack.c.b16 %v605, %v589
    %v782 = vpack.c.b16 %v606, %v590
    %v783 = vpack.c.b16 %v607, %v591
    %v784 = vpack.c.b16 %v608, %v592
    %v785 = vpack.c.b16 %v609, %v593
    %v786 = vpack.c.b16 %v610, %v594
    %v787 = vpack.c.b16 %v611, %v595
    %v788 = vpack.c.b16 %v612, %v596
    %v789 = vpack.c.b16 %v613, %v597
    %v790 = vpack.c.b16 %v614, %v598
    %v791 = vpack.c.b16 %v631, %v615
    %v792 = vpack.c.b16 %v632, %v616
    %v793 = vpack.c.b16 %v633, %v617
    %v794 = vpack.c.b16 %v634, %v618
    %v795 = vpack.c.b16 %v635, %v619
    %v796 = vpack.c.b16 %v636, %v620
    %v797 = vpack.c.b16 %v637, %v621
    %v798 = vpack.c.b16 %v638, %v622
    %v799 = vpack.c.b16 %v639, %v623
    %v800 = vpack.c.b16 %v640, %v624
    %v801 = vpack.c.b16 %v641, %v625
    %v802 = vpack.c.b16 %v642, %v626
    %v803 = vpack.c.b16 %v643, %v627
    %v804 = vpack.c.b16 %v644, %v628
    %v805 = vpack.c.b16 %v645, %v629
    %v806 = vpack.c.b16 %v646, %v630
    %v807 = vpack.c.b16 %v663, %v647
    %v808 = vpack.c.b16 %v664, %v648
    %v809 = vpack.c.b16 %v665, %v649
    %v810 = vpack.c.b16 %v666, %v650
    %v811 = vpack.c.b16 %v667, %v651
    %v812 = vpack.c.b16 %v668, %v652
    %v813 = vpack.c.b16 %v669, %v653
    %v814 = vpack.c.b16 %v670, %v654
    %v815 = vpack.c.b16 %v671, %v655
    %v816 = vpack.c.b16 %v672, %v656
    %v817 = vpack.c.b16 %v673, %v657
    %v818 = vpack.c.b16 %v674, %v658
    %v819 = vpack.c.b16 %v675, %v659
    %v820 = vpack.c.b16 %v676, %v660
    %v821 = vpack.c.b16 %v677, %v661
    %v822 = vpack.c.b16 %v678, %v662
    %v823 = vpack.c.b16 %v695, %v679
    %v824 = vpack.c.b16 %v696, %v680
    %v825 = vpack.c.b16 %v697, %v681
    %v826 = vpack.c.b16 %v698, %v682
    %v827 = vpack.c.b16 %v699, %v683
    %v828 = vpack.c.b16 %v700, %v684
    %v829 = vpack.c.b16 %v701, %v685
    %v830 = vpack.c.b16 %v702, %v686
    %v831 = vpack.c.b16 %v703, %v687
    %v832 = vpack.c.b16 %v704, %v688
    %v833 = vpack.c.b16 %v705, %v689
    %v834 = vpack.c.b16 %v706, %v690
    %v835 = vpack.c.b16 %v707, %v691
    %v836 = vpack.c.b16 %v708, %v692
    %v837 = vpack.c.b16 %v709, %v693
    %v838 = vpack.c.b16 %v710, %v694
    %967 = vmatprep.subr.bf16.mxu0 %v824
    %968 = vmatpush1.bf16.msra.mxu0 %v823
    %969 = vmatprep.subr.bf16.mxu0 %v808
    %970 = vmatpush1.bf16.msra.mxu0 %v807
    %971 = vmatprep.subr.bf16.mxu0 %v792
    %972 = vmatpush1.bf16.msra.mxu0 %v791
    %973 = vmatprep.subr.bf16.mxu0 %v776
    %974 = vmatpush1.bf16.msra.mxu0 %v775
    %975 = vmatprep.subr.bf16.mxu0 %v760
    %976 = vmatpush1.bf16.msra.mxu0 %v759
    %977 = vmatprep.subr.bf16.mxu0 %v744
    %978 = vmatpush1.bf16.msra.mxu0 %v743
    %979 = vmatprep.subr.bf16.mxu0 %v728
    %980 = vmatpush1.bf16.msra.mxu0 %v727
    %981 = vmatprep.subr.bf16.mxu0 %v712
    %982 = vmatpush1.bf16.msra.mxu0 %v711
    %983 = vmatprep.subr.bf16.mxu0 0
    %984 = vmatpush2.bf16.msra.mxu0 0
    %985 = vmatprep.subr.bf16.mxu0 0
    %986 = vmatpush2.bf16.msra.mxu0 0
    %987 = vmatprep.subr.bf16.mxu0 0
    %988 = vmatpush2.bf16.msra.mxu0 0
    %989 = vmatprep.subr.bf16.mxu0 0
    %990 = vmatpush2.bf16.msra.mxu0 0
    %991 = vmatprep.subr.bf16.mxu0 0
    %992 = vmatpush2.bf16.msra.mxu0 0
    %993 = vmatprep.subr.bf16.mxu0 0
    %994 = vmatpush2.bf16.msra.mxu0 0
    %995 = vmatprep.subr.bf16.mxu0 0
    %996 = vmatpush2.bf16.msra.mxu0 0
    %997 = vmatprep.subr.bf16.mxu0 0
    %998 = vmatpush2.bf16.msra.mxu0 0
    %999 = vmatprep.mubr.bf16.mxu0 0
    %1000 = vmatmul.mubr.bf16.gmra.mxu0 %v325
    %v1001 = vpop.f32.mrf.mxu0
    %v1002 = vadd.f32 0.0, %v1001
    %v1003 = vpop.f32.mrf.mxu0
    %v1004 = vadd.f32 0.0, %v1003
    %v1005 = vpop.f32.mrf.mxu0
    %v1006 = vpop.f32.mrf.mxu0
    %1007 = vdwg.mxu0
    %1008 = vmatprep.subr.bf16.mxu0 %v826
    %1009 = vmatpush1.bf16.msra.mxu0 %v825
    %1010 = vmatprep.subr.bf16.mxu0 %v810
    %1011 = vmatpush1.bf16.msra.mxu0 %v809
    %1012 = vmatprep.subr.bf16.mxu0 %v794
    %1013 = vmatpush1.bf16.msra.mxu0 %v793
    %1014 = vmatprep.subr.bf16.mxu0 %v778
    %1015 = vmatpush1.bf16.msra.mxu0 %v777
    %1016 = vmatprep.subr.bf16.mxu0 %v762
    %1017 = vmatpush1.bf16.msra.mxu0 %v761
    %1018 = vmatprep.subr.bf16.mxu0 %v746
    %1019 = vmatpush1.bf16.msra.mxu0 %v745
    %1020 = vmatprep.subr.bf16.mxu0 %v730
    %1021 = vmatpush1.bf16.msra.mxu0 %v729
    %1022 = vmatprep.subr.bf16.mxu0 %v714
    %1023 = vmatpush1.bf16.msra.mxu0 %v713
    %1024 = vmatprep.subr.bf16.mxu0 0
    %1025 = vmatpush2.bf16.msra.mxu0 0
    %1026 = vmatprep.subr.bf16.mxu0 0
    %1027 = vmatpush2.bf16.msra.mxu0 0
    %1028 = vmatprep.subr.bf16.mxu0 0
    %1029 = vmatpush2.bf16.msra.mxu0 0
    %1030 = vmatprep.subr.bf16.mxu0 0
    %1031 = vmatpush2.bf16.msra.mxu0 0
    %1032 = vmatprep.subr.bf16.mxu0 0
    %1033 = vmatpush2.bf16.msra.mxu0 0
    %1034 = vmatprep.subr.bf16.mxu0 0
    %1035 = vmatpush2.bf16.msra.mxu0 0
    %1036 = vmatprep.subr.bf16.mxu0 0
    %1037 = vmatpush2.bf16.msra.mxu0 0
    %1038 = vmatprep.subr.bf16.mxu0 0
    %1039 = vmatpush2.bf16.msra.mxu0 0
    %1040 = vmatprep.mubr.bf16.mxu0 0
    %1041 = vmatmul.mubr.bf16.gmra.mxu0 %v325
    %v1042 = vpop.f32.mrf.mxu0
    %v1043 = vadd.f32 0.0, %v1042
    %v1044 = vpop.f32.mrf.mxu0
    %v1045 = vadd.f32 0.0, %v1044
    %v1046 = vpop.f32.mrf.mxu0
    %v1047 = vpop.f32.mrf.mxu0
    %1048 = vdwg.mxu0
    %1049 = vmatprep.subr.bf16.mxu0 %v828
    %1050 = vmatpush1.bf16.msra.mxu0 %v827
    %1051 = vmatprep.subr.bf16.mxu0 %v812
    %1052 = vmatpush1.bf16.msra.mxu0 %v811
    %1053 = vmatprep.subr.bf16.mxu0 %v796
    %1054 = vmatpush1.bf16.msra.mxu0 %v795
    %1055 = vmatprep.subr.bf16.mxu0 %v780
    %1056 = vmatpush1.bf16.msra.mxu0 %v779
    %1057 = vmatprep.subr.bf16.mxu0 %v764
    %1058 = vmatpush1.bf16.msra.mxu0 %v763
    %1059 = vmatprep.subr.bf16.mxu0 %v748
    %1060 = vmatpush1.bf16.msra.mxu0 %v747
    %1061 = vmatprep.subr.bf16.mxu0 %v732
    %1062 = vmatpush1.bf16.msra.mxu0 %v731
    %1063 = vmatprep.subr.bf16.mxu0 %v716
    %1064 = vmatpush1.bf16.msra.mxu0 %v715
    %1065 = vmatprep.subr.bf16.mxu0 0
    %1066 = vmatpush2.bf16.msra.mxu0 0
    %1067 = vmatprep.subr.bf16.mxu0 0
    %1068 = vmatpush2.bf16.msra.mxu0 0
    %1069 = vmatprep.subr.bf16.mxu0 0
    %1070 = vmatpush2.bf16.msra.mxu0 0
    %1071 = vmatprep.subr.bf16.mxu0 0
    %1072 = vmatpush2.bf16.msra.mxu0 0
    %1073 = vmatprep.subr.bf16.mxu0 0
    %1074 = vmatpush2.bf16.msra.mxu0 0
    %1075 = vmatprep.subr.bf16.mxu0 0
    %1076 = vmatpush2.bf16.msra.mxu0 0
    %1077 = vmatprep.subr.bf16.mxu0 0
    %1078 = vmatpush2.bf16.msra.mxu0 0
    %1079 = vmatprep.subr.bf16.mxu0 0
    %1080 = vmatpush2.bf16.msra.mxu0 0
    %1081 = vmatprep.mubr.bf16.mxu0 0
    %1082 = vmatmul.mubr.bf16.gmra.mxu0 %v325
    %v1083 = vpop.f32.mrf.mxu0
    %v1084 = vadd.f32 0.0, %v1083
    %v1085 = vpop.f32.mrf.mxu0
    %v1086 = vadd.f32 0.0, %v1085
    %v1087 = vpop.f32.mrf.mxu0
    %v1088 = vpop.f32.mrf.mxu0
    %1089 = vdwg.mxu0
    %1090 = vmatprep.subr.bf16.mxu0 %v830
    %1091 = vmatpush1.bf16.msra.mxu0 %v829
    %1092 = vmatprep.subr.bf16.mxu0 %v814
    %1093 = vmatpush1.bf16.msra.mxu0 %v813
    %1094 = vmatprep.subr.bf16.mxu0 %v798
    %1095 = vmatpush1.bf16.msra.mxu0 %v797
    %1096 = vmatprep.subr.bf16.mxu0 %v782
    %1097 = vmatpush1.bf16.msra.mxu0 %v781
    %1098 = vmatprep.subr.bf16.mxu0 %v766
    %1099 = vmatpush1.bf16.msra.mxu0 %v765
    %1100 = vmatprep.subr.bf16.mxu0 %v750
    %1101 = vmatpush1.bf16.msra.mxu0 %v749
    %1102 = vmatprep.subr.bf16.mxu0 %v734
    %1103 = vmatpush1.bf16.msra.mxu0 %v733
    %1104 = vmatprep.subr.bf16.mxu0 %v718
    %1105 = vmatpush1.bf16.msra.mxu0 %v717
    %1106 = vmatprep.subr.bf16.mxu0 0
    %1107 = vmatpush2.bf16.msra.mxu0 0
    %1108 = vmatprep.subr.bf16.mxu0 0
    %1109 = vmatpush2.bf16.msra.mxu0 0
    %1110 = vmatprep.subr.bf16.mxu0 0
    %1111 = vmatpush2.bf16.msra.mxu0 0
    %1112 = vmatprep.subr.bf16.mxu0 0
    %1113 = vmatpush2.bf16.msra.mxu0 0
    %1114 = vmatprep.subr.bf16.mxu0 0
    %1115 = vmatpush2.bf16.msra.mxu0 0
    %1116 = vmatprep.subr.bf16.mxu0 0
    %1117 = vmatpush2.bf16.msra.mxu0 0
    %1118 = vmatprep.subr.bf16.mxu0 0
    %1119 = vmatpush2.bf16.msra.mxu0 0
    %1120 = vmatprep.subr.bf16.mxu0 0
    %1121 = vmatpush2.bf16.msra.mxu0 0
    %1122 = vmatprep.mubr.bf16.mxu0 0
    %1123 = vmatmul.mubr.bf16.gmra.mxu0 %v325
    %v1124 = vpop.f32.mrf.mxu0
    %v1125 = vadd.f32 0.0, %v1124
    %v1126 = vpop.f32.mrf.mxu0
    %v1127 = vadd.f32 0.0, %v1126
    %v1128 = vpop.f32.mrf.mxu0
    %v1129 = vpop.f32.mrf.mxu0
    %1130 = vdwg.mxu0
    %1131 = vmatprep.subr.bf16.mxu0 %v832
    %1132 = vmatpush1.bf16.msra.mxu0 %v831
    %1133 = vmatprep.subr.bf16.mxu0 %v816
    %1134 = vmatpush1.bf16.msra.mxu0 %v815
    %1135 = vmatprep.subr.bf16.mxu0 %v800
    %1136 = vmatpush1.bf16.msra.mxu0 %v799
    %1137 = vmatprep.subr.bf16.mxu0 %v784
    %1138 = vmatpush1.bf16.msra.mxu0 %v783
    %1139 = vmatprep.subr.bf16.mxu0 %v768
    %1140 = vmatpush1.bf16.msra.mxu0 %v767
    %1141 = vmatprep.subr.bf16.mxu0 %v752
    %1142 = vmatpush1.bf16.msra.mxu0 %v751
    %1143 = vmatprep.subr.bf16.mxu0 %v736
    %1144 = vmatpush1.bf16.msra.mxu0 %v735
    %1145 = vmatprep.subr.bf16.mxu0 %v720
    %1146 = vmatpush1.bf16.msra.mxu0 %v719
    %1147 = vmatprep.subr.bf16.mxu0 0
    %1148 = vmatpush2.bf16.msra.mxu0 0
    %1149 = vmatprep.subr.bf16.mxu0 0
    %1150 = vmatpush2.bf16.msra.mxu0 0
    %1151 = vmatprep.subr.bf16.mxu0 0
    %1152 = vmatpush2.bf16.msra.mxu0 0
    %1153 = vmatprep.subr.bf16.mxu0 0
    %1154 = vmatpush2.bf16.msra.mxu0 0
    %1155 = vmatprep.subr.bf16.mxu0 0
    %1156 = vmatpush2.bf16.msra.mxu0 0
    %1157 = vmatprep.subr.bf16.mxu0 0
    %1158 = vmatpush2.bf16.msra.mxu0 0
    %1159 = vmatprep.subr.bf16.mxu0 0
    %1160 = vmatpush2.bf16.msra.mxu0 0
    %1161 = vmatprep.subr.bf16.mxu0 0
    %1162 = vmatpush2.bf16.msra.mxu0 0
    %1163 = vmatprep.mubr.bf16.mxu0 0
    %1164 = vmatmul.mubr.bf16.gmra.mxu0 %v325
    %v1165 = vpop.f32.mrf.mxu0
    %v1166 = vadd.f32 0.0, %v1165
    %v1167 = vpop.f32.mrf.mxu0
    %v1168 = vadd.f32 0.0, %v1167
    %v1169 = vpop.f32.mrf.mxu0
    %v1170 = vpop.f32.mrf.mxu0
    %1171 = vdwg.mxu0
    %1172 = vmatprep.subr.bf16.mxu0 %v834
    %1173 = vmatpush1.bf16.msra.mxu0 %v833
    %1174 = vmatprep.subr.bf16.mxu0 %v818
    %1175 = vmatpush1.bf16.msra.mxu0 %v817
    %1176 = vmatprep.subr.bf16.mxu0 %v802
    %1177 = vmatpush1.bf16.msra.mxu0 %v801
    %1178 = vmatprep.subr.bf16.mxu0 %v786
    %1179 = vmatpush1.bf16.msra.mxu0 %v785
    %1180 = vmatprep.subr.bf16.mxu0 %v770
    %1181 = vmatpush1.bf16.msra.mxu0 %v769
    %1182 = vmatprep.subr.bf16.mxu0 %v754
    %1183 = vmatpush1.bf16.msra.mxu0 %v753
    %1184 = vmatprep.subr.bf16.mxu0 %v738
    %1185 = vmatpush1.bf16.msra.mxu0 %v737
    %1186 = vmatprep.subr.bf16.mxu0 %v722
    %1187 = vmatpush1.bf16.msra.mxu0 %v721
    %1188 = vmatprep.subr.bf16.mxu0 0
    %1189 = vmatpush2.bf16.msra.mxu0 0
    %1190 = vmatprep.subr.bf16.mxu0 0
    %1191 = vmatpush2.bf16.msra.mxu0 0
    %1192 = vmatprep.subr.bf16.mxu0 0
    %1193 = vmatpush2.bf16.msra.mxu0 0
    %1194 = vmatprep.subr.bf16.mxu0 0
    %1195 = vmatpush2.bf16.msra.mxu0 0
    %1196 = vmatprep.subr.bf16.mxu0 0
    %1197 = vmatpush2.bf16.msra.mxu0 0
    %1198 = vmatprep.subr.bf16.mxu0 0
    %1199 = vmatpush2.bf16.msra.mxu0 0
    %1200 = vmatprep.subr.bf16.mxu0 0
    %1201 = vmatpush2.bf16.msra.mxu0 0
    %1202 = vmatprep.subr.bf16.mxu0 0
    %1203 = vmatpush2.bf16.msra.mxu0 0
    %1204 = vmatprep.mubr.bf16.mxu0 0
    %1205 = vmatmul.mubr.bf16.gmra.mxu0 %v325
    %v1206 = vpop.f32.mrf.mxu0
    %v1207 = vadd.f32 0.0, %v1206
    %v1208 = vpop.f32.mrf.mxu0
    %v1209 = vadd.f32 0.0, %v1208
    %v1210 = vpop.f32.mrf.mxu0
    %v1211 = vpop.f32.mrf.mxu0
    %1212 = vdwg.mxu0
    %1213 = vmatprep.subr.bf16.mxu0 %v836
    %1214 = vmatpush1.bf16.msra.mxu0 %v835
    %1215 = vmatprep.subr.bf16.mxu0 %v820
    %1216 = vmatpush1.bf16.msra.mxu0 %v819
    %1217 = vmatprep.subr.bf16.mxu0 %v804
    %1218 = vmatpush1.bf16.msra.mxu0 %v803
    %1219 = vmatprep.subr.bf16.mxu0 %v788
    %1220 = vmatpush1.bf16.msra.mxu0 %v787
    %1221 = vmatprep.subr.bf16.mxu0 %v772
    %1222 = vmatpush1.bf16.msra.mxu0 %v771
    %1223 = vmatprep.subr.bf16.mxu0 %v756
    %1224 = vmatpush1.bf16.msra.mxu0 %v755
    %1225 = vmatprep.subr.bf16.mxu0 %v740
    %1226 = vmatpush1.bf16.msra.mxu0 %v739
    %1227 = vmatprep.subr.bf16.mxu0 %v724
    %1228 = vmatpush1.bf16.msra.mxu0 %v723
    %1229 = vmatprep.subr.bf16.mxu0 0
    %1230 = vmatpush2.bf16.msra.mxu0 0
    %1231 = vmatprep.subr.bf16.mxu0 0
    %1232 = vmatpush2.bf16.msra.mxu0 0
    %1233 = vmatprep.subr.bf16.mxu0 0
    %1234 = vmatpush2.bf16.msra.mxu0 0
    %1235 = vmatprep.subr.bf16.mxu0 0
    %1236 = vmatpush2.bf16.msra.mxu0 0
    %1237 = vmatprep.subr.bf16.mxu0 0
    %1238 = vmatpush2.bf16.msra.mxu0 0
    %1239 = vmatprep.subr.bf16.mxu0 0
    %1240 = vmatpush2.bf16.msra.mxu0 0
    %1241 = vmatprep.subr.bf16.mxu0 0
    %1242 = vmatpush2.bf16.msra.mxu0 0
    %1243 = vmatprep.subr.bf16.mxu0 0
    %1244 = vmatpush2.bf16.msra.mxu0 0
    %1245 = vmatprep.mubr.bf16.mxu0 0
    %1246 = vmatmul.mubr.bf16.gmra.mxu0 %v325
    %v1247 = vpop.f32.mrf.mxu0
    %v1248 = vadd.f32 0.0, %v1247
    %v1249 = vpop.f32.mrf.mxu0
    %v1250 = vadd.f32 0.0, %v1249
    %v1251 = vpop.f32.mrf.mxu0
    %v1252 = vpop.f32.mrf.mxu0
    %1253 = vdwg.mxu0
    %1254 = vmatprep.subr.bf16.mxu0 %v838
    %1255 = vmatpush1.bf16.msra.mxu0 %v837
    %1256 = vmatprep.subr.bf16.mxu0 %v822
    %1257 = vmatpush1.bf16.msra.mxu0 %v821
    %1258 = vmatprep.subr.bf16.mxu0 %v806
    %1259 = vmatpush1.bf16.msra.mxu0 %v805
    %1260 = vmatprep.subr.bf16.mxu0 %v790
    %1261 = vmatpush1.bf16.msra.mxu0 %v789
    %1262 = vmatprep.subr.bf16.mxu0 %v774
    %1263 = vmatpush1.bf16.msra.mxu0 %v773
    %1264 = vmatprep.subr.bf16.mxu0 %v758
    %1265 = vmatpush1.bf16.msra.mxu0 %v757
    %1266 = vmatprep.subr.bf16.mxu0 %v742
    %1267 = vmatpush1.bf16.msra.mxu0 %v741
    %1268 = vmatprep.subr.bf16.mxu0 %v726
    %1269 = vmatpush1.bf16.msra.mxu0 %v725
    %1270 = vmatprep.subr.bf16.mxu0 0
    %1271 = vmatpush2.bf16.msra.mxu0 0
    %1272 = vmatprep.subr.bf16.mxu0 0
    %1273 = vmatpush2.bf16.msra.mxu0 0
    %1274 = vmatprep.subr.bf16.mxu0 0
    %1275 = vmatpush2.bf16.msra.mxu0 0
    %1276 = vmatprep.subr.bf16.mxu0 0
    %1277 = vmatpush2.bf16.msra.mxu0 0
    %1278 = vmatprep.subr.bf16.mxu0 0
    %1279 = vmatpush2.bf16.msra.mxu0 0
    %1280 = vmatprep.subr.bf16.mxu0 0
    %1281 = vmatpush2.bf16.msra.mxu0 0
    %1282 = vmatprep.subr.bf16.mxu0 0
    %1283 = vmatpush2.bf16.msra.mxu0 0
    %1284 = vmatprep.subr.bf16.mxu0 0
    %1285 = vmatpush2.bf16.msra.mxu0 0
    %1286 = vmatprep.mubr.bf16.mxu0 0
    %1287 = vmatmul.mubr.bf16.gmra.mxu0 %v325
    %v1288 = vpop.f32.mrf.mxu0
    %v1289 = vadd.f32 0.0, %v1288
    %v1290 = vpop.f32.mrf.mxu0
    %v1291 = vadd.f32 0.0, %v1290
    %v1292 = vpop.f32.mrf.mxu0
    %v1293 = vpop.f32.mrf.mxu0
    %1294 = vdwg.mxu0
    %v1295 = vmax.f32 %v1002, %v1166
    %v1296 = vmax.f32 %v1004, %v1168
    %v1297 = vmax.f32 %v1043, %v1207
    %v1298 = vmax.f32 %v1045, %v1209
    %v1299 = vmax.f32 %v1084, %v1248
    %v1300 = vmax.f32 %v1086, %v1250
    %v1301 = vmax.f32 %v1125, %v1289
    %v1302 = vmax.f32 %v1127, %v1291
    %v1303 = vld [vmem:[#allocation5] sm:$0xff]
    %v1305 = vlaneseq
    %v1306 = vshrl.u32 %v1305, 7
    %v1307 = vsub.s32 0, %v1306
    %v1308 = vrot.slane %v1303, %v1307
    %v1309 = vlaneseq
    %v1310 = vshrl.u32 %v1309, 7
    %v1311 = vsub.s32 1, %v1310
    %v1312 = vrot.slane %v1303, %v1311
    %v1313 = vlaneseq
    %v1314 = vshrl.u32 %v1313, 7
    %v1315 = vsub.s32 2, %v1314
    %v1316 = vrot.slane %v1303, %v1315
    %v1317 = vlaneseq
    %v1318 = vshrl.u32 %v1317, 7
    %v1319 = vsub.s32 3, %v1318
    %v1320 = vrot.slane %v1303, %v1319
    %v1321 = vlaneseq
    %v1322 = vshrl.u32 %v1321, 7
    %v1323 = vsub.s32 4, %v1322
    %v1324 = vrot.slane %v1303, %v1323
    %v1325 = vlaneseq
    %v1326 = vshrl.u32 %v1325, 7
    %v1327 = vsub.s32 5, %v1326
    %v1328 = vrot.slane %v1303, %v1327
    %v1329 = vlaneseq
    %v1330 = vshrl.u32 %v1329, 7
    %v1331 = vsub.s32 6, %v1330
    %v1332 = vrot.slane %v1303, %v1331
    %v1333 = vlaneseq
    %v1334 = vshrl.u32 %v1333, 7
    %v1335 = vsub.s32 7, %v1334
    %v1336 = vrot.slane %v1303, %v1335
    %v1345 = vadd.f32 %v1295, %v1308
    %v1346 = vadd.f32 %v1296, %v1312
    %v1347 = vadd.f32 %v1297, %v1316
    %v1348 = vadd.f32 %v1298, %v1320
    %v1349 = vadd.f32 %v1299, %v1324
    %v1350 = vadd.f32 %v1300, %v1328
    %v1351 = vadd.f32 %v1301, %v1332
    %v1352 = vadd.f32 %v1302, %v1336
    %v1353 = vmax.f32 %v1345, 0.0
    %v1354 = vmax.f32 %v1346, 0.0
    %v1355 = vmax.f32 %v1347, 0.0
    %v1356 = vmax.f32 %v1348, 0.0
    %v1357 = vmax.f32 %v1349, 0.0
    %v1358 = vmax.f32 %v1350, 0.0
    %v1359 = vmax.f32 %v1351, 0.0
    %v1360 = vmax.f32 %v1352, 0.0
    %v1361 = vpack.c.bf16 %v1353, %v1353
    %v1362 = vpack.c.bf16 %v1354, %v1354
    %v1363 = vpack.c.bf16 %v1355, %v1355
    %v1364 = vpack.c.bf16 %v1356, %v1356
    %v1365 = vpack.c.bf16 %v1357, %v1357
    %v1366 = vpack.c.bf16 %v1358, %v1358
    %v1367 = vpack.c.bf16 %v1359, %v1359
    %v1368 = vpack.c.bf16 %v1360, %v1360
    %v1369 = vld [vmem:[#allocation7] sm:$0xff]
    %v1370 = vld [vmem:[#allocation7 + $0x8] sm:$0xff]
    %v1371 = vld [vmem:[#allocation7 + $0x10] sm:$0xff]
    %v1372 = vld [vmem:[#allocation7 + $0x18] sm:$0xff]
    %v1373 = vld [vmem:[#allocation7 + $0x20] sm:$0xff]
    %v1374 = vld [vmem:[#allocation7 + $0x28] sm:$0xff]
    %v1375 = vld [vmem:[#allocation7 + $0x30] sm:$0xff]
    %v1376 = vld [vmem:[#allocation7 + $0x38] sm:$0xff]
    %v1377 = vld [vmem:[#allocation7 + $0x40] sm:$0xff]
    %v1378 = vld [vmem:[#allocation7 + $0x48] sm:$0xff]
    %v1379 = vld [vmem:[#allocation7 + $0x50] sm:$0xff]
    %v1380 = vld [vmem:[#allocation7 + $0x58] sm:$0xff]
    %v1381 = vld [vmem:[#allocation7 + $0x60] sm:$0xff]
    %v1382 = vld [vmem:[#allocation7 + $0x68] sm:$0xff]
    %v1383 = vld [vmem:[#allocation7 + $0x70] sm:$0xff]
    %v1384 = vld [vmem:[#allocation7 + $0x78] sm:$0xff]
    %v1385 = vld [vmem:[#allocation7 + $0x80] sm:$0xff]
    %v1386 = vld [vmem:[#allocation7 + $0x88] sm:$0xff]
    %v1387 = vld [vmem:[#allocation7 + $0x90] sm:$0xff]
    %v1388 = vld [vmem:[#allocation7 + $0x98] sm:$0xff]
    %v1389 = vld [vmem:[#allocation7 + $0xa0] sm:$0xff]
    %v1390 = vld [vmem:[#allocation7 + $0xa8] sm:$0xff]
    %v1391 = vld [vmem:[#allocation7 + $0xb0] sm:$0xff]
    %v1392 = vld [vmem:[#allocation7 + $0xb8] sm:$0xff]
    %v1393 = vld [vmem:[#allocation7 + $0xc0] sm:$0xff]
    %v1394 = vld [vmem:[#allocation7 + $0xc8] sm:$0xff]
    %v1395 = vld [vmem:[#allocation7 + $0xd0] sm:$0xff]
    %v1396 = vld [vmem:[#allocation7 + $0xd8] sm:$0xff]
    %v1397 = vld [vmem:[#allocation7 + $0xe0] sm:$0xff]
    %v1398 = vld [vmem:[#allocation7 + $0xe8] sm:$0xff]
    %v1399 = vld [vmem:[#allocation7 + $0xf0] sm:$0xff]
    %v1400 = vld [vmem:[#allocation7 + $0xf8] sm:$0xff]
    %v1401 = vld [vmem:[#allocation7 + $0x100] sm:$0xff]
    %v1402 = vld [vmem:[#allocation7 + $0x108] sm:$0xff]
    %v1403 = vld [vmem:[#allocation7 + $0x110] sm:$0xff]
    %v1404 = vld [vmem:[#allocation7 + $0x118] sm:$0xff]
    %v1405 = vld [vmem:[#allocation7 + $0x120] sm:$0xff]
    %v1406 = vld [vmem:[#allocation7 + $0x128] sm:$0xff]
    %v1407 = vld [vmem:[#allocation7 + $0x130] sm:$0xff]
    %v1408 = vld [vmem:[#allocation7 + $0x138] sm:$0xff]
    %v1409 = vld [vmem:[#allocation7 + $0x140] sm:$0xff]
    %v1410 = vld [vmem:[#allocation7 + $0x148] sm:$0xff]
    %v1411 = vld [vmem:[#allocation7 + $0x150] sm:$0xff]
    %v1412 = vld [vmem:[#allocation7 + $0x158] sm:$0xff]
    %v1413 = vld [vmem:[#allocation7 + $0x160] sm:$0xff]
    %v1414 = vld [vmem:[#allocation7 + $0x168] sm:$0xff]
    %v1415 = vld [vmem:[#allocation7 + $0x170] sm:$0xff]
    %v1416 = vld [vmem:[#allocation7 + $0x178] sm:$0xff]
    %v1417 = vld [vmem:[#allocation7 + $0x180] sm:$0xff]
    %v1418 = vld [vmem:[#allocation7 + $0x188] sm:$0xff]
    %v1419 = vld [vmem:[#allocation7 + $0x190] sm:$0xff]
    %v1420 = vld [vmem:[#allocation7 + $0x198] sm:$0xff]
    %v1421 = vld [vmem:[#allocation7 + $0x1a0] sm:$0xff]
    %v1422 = vld [vmem:[#allocation7 + $0x1a8] sm:$0xff]
    %v1423 = vld [vmem:[#allocation7 + $0x1b0] sm:$0xff]
    %v1424 = vld [vmem:[#allocation7 + $0x1b8] sm:$0xff]
    %v1425 = vld [vmem:[#allocation7 + $0x1c0] sm:$0xff]
    %v1426 = vld [vmem:[#allocation7 + $0x1c8] sm:$0xff]
    %v1427 = vld [vmem:[#allocation7 + $0x1d0] sm:$0xff]
    %v1428 = vld [vmem:[#allocation7 + $0x1d8] sm:$0xff]
    %v1429 = vld [vmem:[#allocation7 + $0x1e0] sm:$0xff]
    %v1430 = vld [vmem:[#allocation7 + $0x1e8] sm:$0xff]
    %v1431 = vld [vmem:[#allocation7 + $0x1f0] sm:$0xff]
    %v1432 = vld [vmem:[#allocation7 + $0x1f8] sm:$0xff]
    %v1433 = vld [vmem:[#allocation7 + $0x200] sm:$0xff]
    %v1434 = vld [vmem:[#allocation7 + $0x208] sm:$0xff]
    %v1435 = vld [vmem:[#allocation7 + $0x210] sm:$0xff]
    %v1436 = vld [vmem:[#allocation7 + $0x218] sm:$0xff]
    %v1437 = vld [vmem:[#allocation7 + $0x220] sm:$0xff]
    %v1438 = vld [vmem:[#allocation7 + $0x228] sm:$0xff]
    %v1439 = vld [vmem:[#allocation7 + $0x230] sm:$0xff]
    %v1440 = vld [vmem:[#allocation7 + $0x238] sm:$0xff]
    %v1441 = vld [vmem:[#allocation7 + $0x240] sm:$0xff]
    %v1442 = vld [vmem:[#allocation7 + $0x248] sm:$0xff]
    %v1443 = vld [vmem:[#allocation7 + $0x250] sm:$0xff]
    %v1444 = vld [vmem:[#allocation7 + $0x258] sm:$0xff]
    %v1445 = vld [vmem:[#allocation7 + $0x260] sm:$0xff]
    %v1446 = vld [vmem:[#allocation7 + $0x268] sm:$0xff]
    %v1447 = vld [vmem:[#allocation7 + $0x270] sm:$0xff]
    %v1448 = vld [vmem:[#allocation7 + $0x278] sm:$0xff]
    %v1449 = vld [vmem:[#allocation7 + $0x280] sm:$0xff]
    %v1450 = vld [vmem:[#allocation7 + $0x288] sm:$0xff]
    %v1451 = vld [vmem:[#allocation7 + $0x290] sm:$0xff]
    %v1452 = vld [vmem:[#allocation7 + $0x298] sm:$0xff]
    %v1453 = vld [vmem:[#allocation7 + $0x2a0] sm:$0xff]
    %v1454 = vld [vmem:[#allocation7 + $0x2a8] sm:$0xff]
    %v1455 = vld [vmem:[#allocation7 + $0x2b0] sm:$0xff]
    %v1456 = vld [vmem:[#allocation7 + $0x2b8] sm:$0xff]
    %v1457 = vld [vmem:[#allocation7 + $0x2c0] sm:$0xff]
    %v1458 = vld [vmem:[#allocation7 + $0x2c8] sm:$0xff]
    %v1459 = vld [vmem:[#allocation7 + $0x2d0] sm:$0xff]
    %v1460 = vld [vmem:[#allocation7 + $0x2d8] sm:$0xff]
    %v1461 = vld [vmem:[#allocation7 + $0x2e0] sm:$0xff]
    %v1462 = vld [vmem:[#allocation7 + $0x2e8] sm:$0xff]
    %v1463 = vld [vmem:[#allocation7 + $0x2f0] sm:$0xff]
    %v1464 = vld [vmem:[#allocation7 + $0x2f8] sm:$0xff]
    %v1465 = vld [vmem:[#allocation7 + $0x300] sm:$0xff]
    %v1466 = vld [vmem:[#allocation7 + $0x308] sm:$0xff]
    %v1467 = vld [vmem:[#allocation7 + $0x310] sm:$0xff]
    %v1468 = vld [vmem:[#allocation7 + $0x318] sm:$0xff]
    %v1469 = vld [vmem:[#allocation7 + $0x320] sm:$0xff]
    %v1470 = vld [vmem:[#allocation7 + $0x328] sm:$0xff]
    %v1471 = vld [vmem:[#allocation7 + $0x330] sm:$0xff]
    %v1472 = vld [vmem:[#allocation7 + $0x338] sm:$0xff]
    %v1473 = vld [vmem:[#allocation7 + $0x340] sm:$0xff]
    %v1474 = vld [vmem:[#allocation7 + $0x348] sm:$0xff]
    %v1475 = vld [vmem:[#allocation7 + $0x350] sm:$0xff]
    %v1476 = vld [vmem:[#allocation7 + $0x358] sm:$0xff]
    %v1477 = vld [vmem:[#allocation7 + $0x360] sm:$0xff]
    %v1478 = vld [vmem:[#allocation7 + $0x368] sm:$0xff]
    %v1479 = vld [vmem:[#allocation7 + $0x370] sm:$0xff]
    %v1480 = vld [vmem:[#allocation7 + $0x378] sm:$0xff]
    %v1481 = vld [vmem:[#allocation7 + $0x380] sm:$0xff]
    %v1482 = vld [vmem:[#allocation7 + $0x388] sm:$0xff]
    %v1483 = vld [vmem:[#allocation7 + $0x390] sm:$0xff]
    %v1484 = vld [vmem:[#allocation7 + $0x398] sm:$0xff]
    %v1485 = vld [vmem:[#allocation7 + $0x3a0] sm:$0xff]
    %v1486 = vld [vmem:[#allocation7 + $0x3a8] sm:$0xff]
    %v1487 = vld [vmem:[#allocation7 + $0x3b0] sm:$0xff]
    %v1488 = vld [vmem:[#allocation7 + $0x3b8] sm:$0xff]
    %v1489 = vld [vmem:[#allocation7 + $0x3c0] sm:$0xff]
    %v1490 = vld [vmem:[#allocation7 + $0x3c8] sm:$0xff]
    %v1491 = vld [vmem:[#allocation7 + $0x3d0] sm:$0xff]
    %v1492 = vld [vmem:[#allocation7 + $0x3d8] sm:$0xff]
    %v1493 = vld [vmem:[#allocation7 + $0x3e0] sm:$0xff]
    %v1494 = vld [vmem:[#allocation7 + $0x3e8] sm:$0xff]
    %v1495 = vld [vmem:[#allocation7 + $0x3f0] sm:$0xff]
    %v1496 = vld [vmem:[#allocation7 + $0x3f8] sm:$0xff]
    %v1497 = vld [vmem:[#allocation7 + $0x400] sm:$0xff]
    %v1498 = vld [vmem:[#allocation7 + $0x408] sm:$0xff]
    %v1499 = vld [vmem:[#allocation7 + $0x410] sm:$0xff]
    %v1500 = vld [vmem:[#allocation7 + $0x418] sm:$0xff]
    %v1501 = vld [vmem:[#allocation7 + $0x420] sm:$0xff]
    %v1502 = vld [vmem:[#allocation7 + $0x428] sm:$0xff]
    %v1503 = vld [vmem:[#allocation7 + $0x430] sm:$0xff]
    %v1504 = vld [vmem:[#allocation7 + $0x438] sm:$0xff]
    %v1505 = vld [vmem:[#allocation7 + $0x440] sm:$0xff]
    %v1506 = vld [vmem:[#allocation7 + $0x448] sm:$0xff]
    %v1507 = vld [vmem:[#allocation7 + $0x450] sm:$0xff]
    %v1508 = vld [vmem:[#allocation7 + $0x458] sm:$0xff]
    %v1509 = vld [vmem:[#allocation7 + $0x460] sm:$0xff]
    %v1510 = vld [vmem:[#allocation7 + $0x468] sm:$0xff]
    %v1511 = vld [vmem:[#allocation7 + $0x470] sm:$0xff]
    %v1512 = vld [vmem:[#allocation7 + $0x478] sm:$0xff]
    %v1513 = vld [vmem:[#allocation7 + $0x480] sm:$0xff]
    %v1514 = vld [vmem:[#allocation7 + $0x488] sm:$0xff]
    %v1515 = vld [vmem:[#allocation7 + $0x490] sm:$0xff]
    %v1516 = vld [vmem:[#allocation7 + $0x498] sm:$0xff]
    %v1517 = vld [vmem:[#allocation7 + $0x4a0] sm:$0xff]
    %v1518 = vld [vmem:[#allocation7 + $0x4a8] sm:$0xff]
    %v1519 = vld [vmem:[#allocation7 + $0x4b0] sm:$0xff]
    %v1520 = vld [vmem:[#allocation7 + $0x4b8] sm:$0xff]
    %v1521 = vld [vmem:[#allocation7 + $0x4c0] sm:$0xff]
    %v1522 = vld [vmem:[#allocation7 + $0x4c8] sm:$0xff]
    %v1523 = vld [vmem:[#allocation7 + $0x4d0] sm:$0xff]
    %v1524 = vld [vmem:[#allocation7 + $0x4d8] sm:$0xff]
    %v1525 = vld [vmem:[#allocation7 + $0x4e0] sm:$0xff]
    %v1526 = vld [vmem:[#allocation7 + $0x4e8] sm:$0xff]
    %v1527 = vld [vmem:[#allocation7 + $0x4f0] sm:$0xff]
    %v1528 = vld [vmem:[#allocation7 + $0x4f8] sm:$0xff]
    %v1529 = vld [vmem:[#allocation7 + $0x500] sm:$0xff]
    %v1530 = vld [vmem:[#allocation7 + $0x508] sm:$0xff]
    %v1531 = vld [vmem:[#allocation7 + $0x510] sm:$0xff]
    %v1532 = vld [vmem:[#allocation7 + $0x518] sm:$0xff]
    %v1533 = vld [vmem:[#allocation7 + $0x520] sm:$0xff]
    %v1534 = vld [vmem:[#allocation7 + $0x528] sm:$0xff]
    %v1535 = vld [vmem:[#allocation7 + $0x530] sm:$0xff]
    %v1536 = vld [vmem:[#allocation7 + $0x538] sm:$0xff]
    %v1537 = vld [vmem:[#allocation7 + $0x540] sm:$0xff]
    %v1538 = vld [vmem:[#allocation7 + $0x548] sm:$0xff]
    %v1539 = vld [vmem:[#allocation7 + $0x550] sm:$0xff]
    %v1540 = vld [vmem:[#allocation7 + $0x558] sm:$0xff]
    %v1541 = vld [vmem:[#allocation7 + $0x560] sm:$0xff]
    %v1542 = vld [vmem:[#allocation7 + $0x568] sm:$0xff]
    %v1543 = vld [vmem:[#allocation7 + $0x570] sm:$0xff]
    %v1544 = vld [vmem:[#allocation7 + $0x578] sm:$0xff]
    %v1545 = vld [vmem:[#allocation7 + $0x580] sm:$0xff]
    %v1546 = vld [vmem:[#allocation7 + $0x588] sm:$0xff]
    %v1547 = vld [vmem:[#allocation7 + $0x590] sm:$0xff]
    %v1548 = vld [vmem:[#allocation7 + $0x598] sm:$0xff]
    %v1549 = vld [vmem:[#allocation7 + $0x5a0] sm:$0xff]
    %v1550 = vld [vmem:[#allocation7 + $0x5a8] sm:$0xff]
    %v1551 = vld [vmem:[#allocation7 + $0x5b0] sm:$0xff]
    %v1552 = vld [vmem:[#allocation7 + $0x5b8] sm:$0xff]
    %v1553 = vld [vmem:[#allocation7 + $0x5c0] sm:$0xff]
    %v1554 = vld [vmem:[#allocation7 + $0x5c8] sm:$0xff]
    %v1555 = vld [vmem:[#allocation7 + $0x5d0] sm:$0xff]
    %v1556 = vld [vmem:[#allocation7 + $0x5d8] sm:$0xff]
    %v1557 = vld [vmem:[#allocation7 + $0x5e0] sm:$0xff]
    %v1558 = vld [vmem:[#allocation7 + $0x5e8] sm:$0xff]
    %v1559 = vld [vmem:[#allocation7 + $0x5f0] sm:$0xff]
    %v1560 = vld [vmem:[#allocation7 + $0x5f8] sm:$0xff]
    %v1561 = vld [vmem:[#allocation7 + $0x600] sm:$0xff]
    %v1562 = vld [vmem:[#allocation7 + $0x608] sm:$0xff]
    %v1563 = vld [vmem:[#allocation7 + $0x610] sm:$0xff]
    %v1564 = vld [vmem:[#allocation7 + $0x618] sm:$0xff]
    %v1565 = vld [vmem:[#allocation7 + $0x620] sm:$0xff]
    %v1566 = vld [vmem:[#allocation7 + $0x628] sm:$0xff]
    %v1567 = vld [vmem:[#allocation7 + $0x630] sm:$0xff]
    %v1568 = vld [vmem:[#allocation7 + $0x638] sm:$0xff]
    %v1569 = vld [vmem:[#allocation7 + $0x640] sm:$0xff]
    %v1570 = vld [vmem:[#allocation7 + $0x648] sm:$0xff]
    %v1571 = vld [vmem:[#allocation7 + $0x650] sm:$0xff]
    %v1572 = vld [vmem:[#allocation7 + $0x658] sm:$0xff]
    %v1573 = vld [vmem:[#allocation7 + $0x660] sm:$0xff]
    %v1574 = vld [vmem:[#allocation7 + $0x668] sm:$0xff]
    %v1575 = vld [vmem:[#allocation7 + $0x670] sm:$0xff]
    %v1576 = vld [vmem:[#allocation7 + $0x678] sm:$0xff]
    %v1577 = vld [vmem:[#allocation7 + $0x680] sm:$0xff]
    %v1578 = vld [vmem:[#allocation7 + $0x688] sm:$0xff]
    %v1579 = vld [vmem:[#allocation7 + $0x690] sm:$0xff]
    %v1580 = vld [vmem:[#allocation7 + $0x698] sm:$0xff]
    %v1581 = vld [vmem:[#allocation7 + $0x6a0] sm:$0xff]
    %v1582 = vld [vmem:[#allocation7 + $0x6a8] sm:$0xff]
    %v1583 = vld [vmem:[#allocation7 + $0x6b0] sm:$0xff]
    %v1584 = vld [vmem:[#allocation7 + $0x6b8] sm:$0xff]
    %v1585 = vld [vmem:[#allocation7 + $0x6c0] sm:$0xff]
    %v1586 = vld [vmem:[#allocation7 + $0x6c8] sm:$0xff]
    %v1587 = vld [vmem:[#allocation7 + $0x6d0] sm:$0xff]
    %v1588 = vld [vmem:[#allocation7 + $0x6d8] sm:$0xff]
    %v1589 = vld [vmem:[#allocation7 + $0x6e0] sm:$0xff]
    %v1590 = vld [vmem:[#allocation7 + $0x6e8] sm:$0xff]
    %v1591 = vld [vmem:[#allocation7 + $0x6f0] sm:$0xff]
    %v1592 = vld [vmem:[#allocation7 + $0x6f8] sm:$0xff]
    %v1593 = vld [vmem:[#allocation7 + $0x700] sm:$0xff]
    %v1594 = vld [vmem:[#allocation7 + $0x708] sm:$0xff]
    %v1595 = vld [vmem:[#allocation7 + $0x710] sm:$0xff]
    %v1596 = vld [vmem:[#allocation7 + $0x718] sm:$0xff]
    %v1597 = vld [vmem:[#allocation7 + $0x720] sm:$0xff]
    %v1598 = vld [vmem:[#allocation7 + $0x728] sm:$0xff]
    %v1599 = vld [vmem:[#allocation7 + $0x730] sm:$0xff]
    %v1600 = vld [vmem:[#allocation7 + $0x738] sm:$0xff]
    %v1601 = vld [vmem:[#allocation7 + $0x740] sm:$0xff]
    %v1602 = vld [vmem:[#allocation7 + $0x748] sm:$0xff]
    %v1603 = vld [vmem:[#allocation7 + $0x750] sm:$0xff]
    %v1604 = vld [vmem:[#allocation7 + $0x758] sm:$0xff]
    %v1605 = vld [vmem:[#allocation7 + $0x760] sm:$0xff]
    %v1606 = vld [vmem:[#allocation7 + $0x768] sm:$0xff]
    %v1607 = vld [vmem:[#allocation7 + $0x770] sm:$0xff]
    %v1608 = vld [vmem:[#allocation7 + $0x778] sm:$0xff]
    %v1609 = vld [vmem:[#allocation7 + $0x780] sm:$0xff]
    %v1610 = vld [vmem:[#allocation7 + $0x788] sm:$0xff]
    %v1611 = vld [vmem:[#allocation7 + $0x790] sm:$0xff]
    %v1612 = vld [vmem:[#allocation7 + $0x798] sm:$0xff]
    %v1613 = vld [vmem:[#allocation7 + $0x7a0] sm:$0xff]
    %v1614 = vld [vmem:[#allocation7 + $0x7a8] sm:$0xff]
    %v1615 = vld [vmem:[#allocation7 + $0x7b0] sm:$0xff]
    %v1616 = vld [vmem:[#allocation7 + $0x7b8] sm:$0xff]
    %v1617 = vld [vmem:[#allocation7 + $0x7c0] sm:$0xff]
    %v1618 = vld [vmem:[#allocation7 + $0x7c8] sm:$0xff]
    %v1619 = vld [vmem:[#allocation7 + $0x7d0] sm:$0xff]
    %v1620 = vld [vmem:[#allocation7 + $0x7d8] sm:$0xff]
    %v1621 = vld [vmem:[#allocation7 + $0x7e0] sm:$0xff]
    %v1622 = vld [vmem:[#allocation7 + $0x7e8] sm:$0xff]
    %v1623 = vld [vmem:[#allocation7 + $0x7f0] sm:$0xff]
    %v1624 = vld [vmem:[#allocation7 + $0x7f8] sm:$0xff]
    %v1625 = vld [vmem:[#allocation7 + $0x800] sm:$0xff]
    %v1626 = vld [vmem:[#allocation7 + $0x808] sm:$0xff]
    %v1627 = vld [vmem:[#allocation7 + $0x810] sm:$0xff]
    %v1628 = vld [vmem:[#allocation7 + $0x818] sm:$0xff]
    %v1629 = vld [vmem:[#allocation7 + $0x820] sm:$0xff]
    %v1630 = vld [vmem:[#allocation7 + $0x828] sm:$0xff]
    %v1631 = vld [vmem:[#allocation7 + $0x830] sm:$0xff]
    %v1632 = vld [vmem:[#allocation7 + $0x838] sm:$0xff]
    %v1633 = vld [vmem:[#allocation7 + $0x840] sm:$0xff]
    %v1634 = vld [vmem:[#allocation7 + $0x848] sm:$0xff]
    %v1635 = vld [vmem:[#allocation7 + $0x850] sm:$0xff]
    %v1636 = vld [vmem:[#allocation7 + $0x858] sm:$0xff]
    %v1637 = vld [vmem:[#allocation7 + $0x860] sm:$0xff]
    %v1638 = vld [vmem:[#allocation7 + $0x868] sm:$0xff]
    %v1639 = vld [vmem:[#allocation7 + $0x870] sm:$0xff]
    %v1640 = vld [vmem:[#allocation7 + $0x878] sm:$0xff]
    %v1641 = vld [vmem:[#allocation7 + $0x880] sm:$0xff]
    %v1642 = vld [vmem:[#allocation7 + $0x888] sm:$0xff]
    %v1643 = vld [vmem:[#allocation7 + $0x890] sm:$0xff]
    %v1644 = vld [vmem:[#allocation7 + $0x898] sm:$0xff]
    %v1645 = vld [vmem:[#allocation7 + $0x8a0] sm:$0xff]
    %v1646 = vld [vmem:[#allocation7 + $0x8a8] sm:$0xff]
    %v1647 = vld [vmem:[#allocation7 + $0x8b0] sm:$0xff]
    %v1648 = vld [vmem:[#allocation7 + $0x8b8] sm:$0xff]
    %v1649 = vld [vmem:[#allocation7 + $0x8c0] sm:$0xff]
    %v1650 = vld [vmem:[#allocation7 + $0x8c8] sm:$0xff]
    %v1651 = vld [vmem:[#allocation7 + $0x8d0] sm:$0xff]
    %v1652 = vld [vmem:[#allocation7 + $0x8d8] sm:$0xff]
    %v1653 = vld [vmem:[#allocation7 + $0x8e0] sm:$0xff]
    %v1654 = vld [vmem:[#allocation7 + $0x8e8] sm:$0xff]
    %v1655 = vld [vmem:[#allocation7 + $0x8f0] sm:$0xff]
    %v1656 = vld [vmem:[#allocation7 + $0x8f8] sm:$0xff]
    %v1657 = vld [vmem:[#allocation7 + $0x900] sm:$0xff]
    %v1658 = vld [vmem:[#allocation7 + $0x908] sm:$0xff]
    %v1659 = vld [vmem:[#allocation7 + $0x910] sm:$0xff]
    %v1660 = vld [vmem:[#allocation7 + $0x918] sm:$0xff]
    %v1661 = vld [vmem:[#allocation7 + $0x920] sm:$0xff]
    %v1662 = vld [vmem:[#allocation7 + $0x928] sm:$0xff]
    %v1663 = vld [vmem:[#allocation7 + $0x930] sm:$0xff]
    %v1664 = vld [vmem:[#allocation7 + $0x938] sm:$0xff]
    %v1665 = vld [vmem:[#allocation7 + $0x940] sm:$0xff]
    %v1666 = vld [vmem:[#allocation7 + $0x948] sm:$0xff]
    %v1667 = vld [vmem:[#allocation7 + $0x950] sm:$0xff]
    %v1668 = vld [vmem:[#allocation7 + $0x958] sm:$0xff]
    %v1669 = vld [vmem:[#allocation7 + $0x960] sm:$0xff]
    %v1670 = vld [vmem:[#allocation7 + $0x968] sm:$0xff]
    %v1671 = vld [vmem:[#allocation7 + $0x970] sm:$0xff]
    %v1672 = vld [vmem:[#allocation7 + $0x978] sm:$0xff]
    %v1673 = vld [vmem:[#allocation7 + $0x980] sm:$0xff]
    %v1674 = vld [vmem:[#allocation7 + $0x988] sm:$0xff]
    %v1675 = vld [vmem:[#allocation7 + $0x990] sm:$0xff]
    %v1676 = vld [vmem:[#allocation7 + $0x998] sm:$0xff]
    %v1677 = vld [vmem:[#allocation7 + $0x9a0] sm:$0xff]
    %v1678 = vld [vmem:[#allocation7 + $0x9a8] sm:$0xff]
    %v1679 = vld [vmem:[#allocation7 + $0x9b0] sm:$0xff]
    %v1680 = vld [vmem:[#allocation7 + $0x9b8] sm:$0xff]
    %v1681 = vld [vmem:[#allocation7 + $0x9c0] sm:$0xff]
    %v1682 = vld [vmem:[#allocation7 + $0x9c8] sm:$0xff]
    %v1683 = vld [vmem:[#allocation7 + $0x9d0] sm:$0xff]
    %v1684 = vld [vmem:[#allocation7 + $0x9d8] sm:$0xff]
    %v1685 = vld [vmem:[#allocation7 + $0x9e0] sm:$0xff]
    %v1686 = vld [vmem:[#allocation7 + $0x9e8] sm:$0xff]
    %v1687 = vld [vmem:[#allocation7 + $0x9f0] sm:$0xff]
    %v1688 = vld [vmem:[#allocation7 + $0x9f8] sm:$0xff]
    %v1689 = vld [vmem:[#allocation7 + $0xa00] sm:$0xff]
    %v1690 = vld [vmem:[#allocation7 + $0xa08] sm:$0xff]
    %v1691 = vld [vmem:[#allocation7 + $0xa10] sm:$0xff]
    %v1692 = vld [vmem:[#allocation7 + $0xa18] sm:$0xff]
    %v1693 = vld [vmem:[#allocation7 + $0xa20] sm:$0xff]
    %v1694 = vld [vmem:[#allocation7 + $0xa28] sm:$0xff]
    %v1695 = vld [vmem:[#allocation7 + $0xa30] sm:$0xff]
    %v1696 = vld [vmem:[#allocation7 + $0xa38] sm:$0xff]
    %v1697 = vld [vmem:[#allocation7 + $0xa40] sm:$0xff]
    %v1698 = vld [vmem:[#allocation7 + $0xa48] sm:$0xff]
    %v1699 = vld [vmem:[#allocation7 + $0xa50] sm:$0xff]
    %v1700 = vld [vmem:[#allocation7 + $0xa58] sm:$0xff]
    %v1701 = vld [vmem:[#allocation7 + $0xa60] sm:$0xff]
    %v1702 = vld [vmem:[#allocation7 + $0xa68] sm:$0xff]
    %v1703 = vld [vmem:[#allocation7 + $0xa70] sm:$0xff]
    %v1704 = vld [vmem:[#allocation7 + $0xa78] sm:$0xff]
    %v1705 = vld [vmem:[#allocation7 + $0xa80] sm:$0xff]
    %v1706 = vld [vmem:[#allocation7 + $0xa88] sm:$0xff]
    %v1707 = vld [vmem:[#allocation7 + $0xa90] sm:$0xff]
    %v1708 = vld [vmem:[#allocation7 + $0xa98] sm:$0xff]
    %v1709 = vld [vmem:[#allocation7 + $0xaa0] sm:$0xff]
    %v1710 = vld [vmem:[#allocation7 + $0xaa8] sm:$0xff]
    %v1711 = vld [vmem:[#allocation7 + $0xab0] sm:$0xff]
    %v1712 = vld [vmem:[#allocation7 + $0xab8] sm:$0xff]
    %v1713 = vld [vmem:[#allocation7 + $0xac0] sm:$0xff]
    %v1714 = vld [vmem:[#allocation7 + $0xac8] sm:$0xff]
    %v1715 = vld [vmem:[#allocation7 + $0xad0] sm:$0xff]
    %v1716 = vld [vmem:[#allocation7 + $0xad8] sm:$0xff]
    %v1717 = vld [vmem:[#allocation7 + $0xae0] sm:$0xff]
    %v1718 = vld [vmem:[#allocation7 + $0xae8] sm:$0xff]
    %v1719 = vld [vmem:[#allocation7 + $0xaf0] sm:$0xff]
    %v1720 = vld [vmem:[#allocation7 + $0xaf8] sm:$0xff]
    %v1721 = vld [vmem:[#allocation7 + $0xb00] sm:$0xff]
    %v1722 = vld [vmem:[#allocation7 + $0xb08] sm:$0xff]
    %v1723 = vld [vmem:[#allocation7 + $0xb10] sm:$0xff]
    %v1724 = vld [vmem:[#allocation7 + $0xb18] sm:$0xff]
    %v1725 = vld [vmem:[#allocation7 + $0xb20] sm:$0xff]
    %v1726 = vld [vmem:[#allocation7 + $0xb28] sm:$0xff]
    %v1727 = vld [vmem:[#allocation7 + $0xb30] sm:$0xff]
    %v1728 = vld [vmem:[#allocation7 + $0xb38] sm:$0xff]
    %v1729 = vld [vmem:[#allocation7 + $0xb40] sm:$0xff]
    %v1730 = vld [vmem:[#allocation7 + $0xb48] sm:$0xff]
    %v1731 = vld [vmem:[#allocation7 + $0xb50] sm:$0xff]
    %v1732 = vld [vmem:[#allocation7 + $0xb58] sm:$0xff]
    %v1733 = vld [vmem:[#allocation7 + $0xb60] sm:$0xff]
    %v1734 = vld [vmem:[#allocation7 + $0xb68] sm:$0xff]
    %v1735 = vld [vmem:[#allocation7 + $0xb70] sm:$0xff]
    %v1736 = vld [vmem:[#allocation7 + $0xb78] sm:$0xff]
    %v1737 = vld [vmem:[#allocation7 + $0xb80] sm:$0xff]
    %v1738 = vld [vmem:[#allocation7 + $0xb88] sm:$0xff]
    %v1739 = vld [vmem:[#allocation7 + $0xb90] sm:$0xff]
    %v1740 = vld [vmem:[#allocation7 + $0xb98] sm:$0xff]
    %v1741 = vld [vmem:[#allocation7 + $0xba0] sm:$0xff]
    %v1742 = vld [vmem:[#allocation7 + $0xba8] sm:$0xff]
    %v1743 = vld [vmem:[#allocation7 + $0xbb0] sm:$0xff]
    %v1744 = vld [vmem:[#allocation7 + $0xbb8] sm:$0xff]
    %v1745 = vld [vmem:[#allocation7 + $0xbc0] sm:$0xff]
    %v1746 = vld [vmem:[#allocation7 + $0xbc8] sm:$0xff]
    %v1747 = vld [vmem:[#allocation7 + $0xbd0] sm:$0xff]
    %v1748 = vld [vmem:[#allocation7 + $0xbd8] sm:$0xff]
    %v1749 = vld [vmem:[#allocation7 + $0xbe0] sm:$0xff]
    %v1750 = vld [vmem:[#allocation7 + $0xbe8] sm:$0xff]
    %v1751 = vld [vmem:[#allocation7 + $0xbf0] sm:$0xff]
    %v1752 = vld [vmem:[#allocation7 + $0xbf8] sm:$0xff]
    %v1753 = vld [vmem:[#allocation7 + $0xc00] sm:$0xff]
    %v1754 = vld [vmem:[#allocation7 + $0xc08] sm:$0xff]
    %v1755 = vld [vmem:[#allocation7 + $0xc10] sm:$0xff]
    %v1756 = vld [vmem:[#allocation7 + $0xc18] sm:$0xff]
    %v1757 = vld [vmem:[#allocation7 + $0xc20] sm:$0xff]
    %v1758 = vld [vmem:[#allocation7 + $0xc28] sm:$0xff]
    %v1759 = vld [vmem:[#allocation7 + $0xc30] sm:$0xff]
    %v1760 = vld [vmem:[#allocation7 + $0xc38] sm:$0xff]
    %v1761 = vld [vmem:[#allocation7 + $0xc40] sm:$0xff]
    %v1762 = vld [vmem:[#allocation7 + $0xc48] sm:$0xff]
    %v1763 = vld [vmem:[#allocation7 + $0xc50] sm:$0xff]
    %v1764 = vld [vmem:[#allocation7 + $0xc58] sm:$0xff]
    %v1765 = vld [vmem:[#allocation7 + $0xc60] sm:$0xff]
    %v1766 = vld [vmem:[#allocation7 + $0xc68] sm:$0xff]
    %v1767 = vld [vmem:[#allocation7 + $0xc70] sm:$0xff]
    %v1768 = vld [vmem:[#allocation7 + $0xc78] sm:$0xff]
    %v1769 = vld [vmem:[#allocation7 + $0xc80] sm:$0xff]
    %v1770 = vld [vmem:[#allocation7 + $0xc88] sm:$0xff]
    %v1771 = vld [vmem:[#allocation7 + $0xc90] sm:$0xff]
    %v1772 = vld [vmem:[#allocation7 + $0xc98] sm:$0xff]
    %v1773 = vld [vmem:[#allocation7 + $0xca0] sm:$0xff]
    %v1774 = vld [vmem:[#allocation7 + $0xca8] sm:$0xff]
    %v1775 = vld [vmem:[#allocation7 + $0xcb0] sm:$0xff]
    %v1776 = vld [vmem:[#allocation7 + $0xcb8] sm:$0xff]
    %v1777 = vld [vmem:[#allocation7 + $0xcc0] sm:$0xff]
    %v1778 = vld [vmem:[#allocation7 + $0xcc8] sm:$0xff]
    %v1779 = vld [vmem:[#allocation7 + $0xcd0] sm:$0xff]
    %v1780 = vld [vmem:[#allocation7 + $0xcd8] sm:$0xff]
    %v1781 = vld [vmem:[#allocation7 + $0xce0] sm:$0xff]
    %v1782 = vld [vmem:[#allocation7 + $0xce8] sm:$0xff]
    %v1783 = vld [vmem:[#allocation7 + $0xcf0] sm:$0xff]
    %v1784 = vld [vmem:[#allocation7 + $0xcf8] sm:$0xff]
    %v1785 = vld [vmem:[#allocation7 + $0xd00] sm:$0xff]
    %v1786 = vld [vmem:[#allocation7 + $0xd08] sm:$0xff]
    %v1787 = vld [vmem:[#allocation7 + $0xd10] sm:$0xff]
    %v1788 = vld [vmem:[#allocation7 + $0xd18] sm:$0xff]
    %v1789 = vld [vmem:[#allocation7 + $0xd20] sm:$0xff]
    %v1790 = vld [vmem:[#allocation7 + $0xd28] sm:$0xff]
    %v1791 = vld [vmem:[#allocation7 + $0xd30] sm:$0xff]
    %v1792 = vld [vmem:[#allocation7 + $0xd38] sm:$0xff]
    %v1793 = vld [vmem:[#allocation7 + $0xd40] sm:$0xff]
    %v1794 = vld [vmem:[#allocation7 + $0xd48] sm:$0xff]
    %v1795 = vld [vmem:[#allocation7 + $0xd50] sm:$0xff]
    %v1796 = vld [vmem:[#allocation7 + $0xd58] sm:$0xff]
    %v1797 = vld [vmem:[#allocation7 + $0xd60] sm:$0xff]
    %v1798 = vld [vmem:[#allocation7 + $0xd68] sm:$0xff]
    %v1799 = vld [vmem:[#allocation7 + $0xd70] sm:$0xff]
    %v1800 = vld [vmem:[#allocation7 + $0xd78] sm:$0xff]
    %v1801 = vld [vmem:[#allocation7 + $0xd80] sm:$0xff]
    %v1802 = vld [vmem:[#allocation7 + $0xd88] sm:$0xff]
    %v1803 = vld [vmem:[#allocation7 + $0xd90] sm:$0xff]
    %v1804 = vld [vmem:[#allocation7 + $0xd98] sm:$0xff]
    %v1805 = vld [vmem:[#allocation7 + $0xda0] sm:$0xff]
    %v1806 = vld [vmem:[#allocation7 + $0xda8] sm:$0xff]
    %v1807 = vld [vmem:[#allocation7 + $0xdb0] sm:$0xff]
    %v1808 = vld [vmem:[#allocation7 + $0xdb8] sm:$0xff]
    %v1809 = vld [vmem:[#allocation7 + $0xdc0] sm:$0xff]
    %v1810 = vld [vmem:[#allocation7 + $0xdc8] sm:$0xff]
    %v1811 = vld [vmem:[#allocation7 + $0xdd0] sm:$0xff]
    %v1812 = vld [vmem:[#allocation7 + $0xdd8] sm:$0xff]
    %v1813 = vld [vmem:[#allocation7 + $0xde0] sm:$0xff]
    %v1814 = vld [vmem:[#allocation7 + $0xde8] sm:$0xff]
    %v1815 = vld [vmem:[#allocation7 + $0xdf0] sm:$0xff]
    %v1816 = vld [vmem:[#allocation7 + $0xdf8] sm:$0xff]
    %v1817 = vld [vmem:[#allocation7 + $0xe00] sm:$0xff]
    %v1818 = vld [vmem:[#allocation7 + $0xe08] sm:$0xff]
    %v1819 = vld [vmem:[#allocation7 + $0xe10] sm:$0xff]
    %v1820 = vld [vmem:[#allocation7 + $0xe18] sm:$0xff]
    %v1821 = vld [vmem:[#allocation7 + $0xe20] sm:$0xff]
    %v1822 = vld [vmem:[#allocation7 + $0xe28] sm:$0xff]
    %v1823 = vld [vmem:[#allocation7 + $0xe30] sm:$0xff]
    %v1824 = vld [vmem:[#allocation7 + $0xe38] sm:$0xff]
    %v1825 = vld [vmem:[#allocation7 + $0xe40] sm:$0xff]
    %v1826 = vld [vmem:[#allocation7 + $0xe48] sm:$0xff]
    %v1827 = vld [vmem:[#allocation7 + $0xe50] sm:$0xff]
    %v1828 = vld [vmem:[#allocation7 + $0xe58] sm:$0xff]
    %v1829 = vld [vmem:[#allocation7 + $0xe60] sm:$0xff]
    %v1830 = vld [vmem:[#allocation7 + $0xe68] sm:$0xff]
    %v1831 = vld [vmem:[#allocation7 + $0xe70] sm:$0xff]
    %v1832 = vld [vmem:[#allocation7 + $0xe78] sm:$0xff]
    %v1833 = vld [vmem:[#allocation7 + $0xe80] sm:$0xff]
    %v1834 = vld [vmem:[#allocation7 + $0xe88] sm:$0xff]
    %v1835 = vld [vmem:[#allocation7 + $0xe90] sm:$0xff]
    %v1836 = vld [vmem:[#allocation7 + $0xe98] sm:$0xff]
    %v1837 = vld [vmem:[#allocation7 + $0xea0] sm:$0xff]
    %v1838 = vld [vmem:[#allocation7 + $0xea8] sm:$0xff]
    %v1839 = vld [vmem:[#allocation7 + $0xeb0] sm:$0xff]
    %v1840 = vld [vmem:[#allocation7 + $0xeb8] sm:$0xff]
    %v1841 = vld [vmem:[#allocation7 + $0xec0] sm:$0xff]
    %v1842 = vld [vmem:[#allocation7 + $0xec8] sm:$0xff]
    %v1843 = vld [vmem:[#allocation7 + $0xed0] sm:$0xff]
    %v1844 = vld [vmem:[#allocation7 + $0xed8] sm:$0xff]
    %v1845 = vld [vmem:[#allocation7 + $0xee0] sm:$0xff]
    %v1846 = vld [vmem:[#allocation7 + $0xee8] sm:$0xff]
    %v1847 = vld [vmem:[#allocation7 + $0xef0] sm:$0xff]
    %v1848 = vld [vmem:[#allocation7 + $0xef8] sm:$0xff]
    %v1849 = vld [vmem:[#allocation7 + $0xf00] sm:$0xff]
    %v1850 = vld [vmem:[#allocation7 + $0xf08] sm:$0xff]
    %v1851 = vld [vmem:[#allocation7 + $0xf10] sm:$0xff]
    %v1852 = vld [vmem:[#allocation7 + $0xf18] sm:$0xff]
    %v1853 = vld [vmem:[#allocation7 + $0xf20] sm:$0xff]
    %v1854 = vld [vmem:[#allocation7 + $0xf28] sm:$0xff]
    %v1855 = vld [vmem:[#allocation7 + $0xf30] sm:$0xff]
    %v1856 = vld [vmem:[#allocation7 + $0xf38] sm:$0xff]
    %v1857 = vld [vmem:[#allocation7 + $0xf40] sm:$0xff]
    %v1858 = vld [vmem:[#allocation7 + $0xf48] sm:$0xff]
    %v1859 = vld [vmem:[#allocation7 + $0xf50] sm:$0xff]
    %v1860 = vld [vmem:[#allocation7 + $0xf58] sm:$0xff]
    %v1861 = vld [vmem:[#allocation7 + $0xf60] sm:$0xff]
    %v1862 = vld [vmem:[#allocation7 + $0xf68] sm:$0xff]
    %v1863 = vld [vmem:[#allocation7 + $0xf70] sm:$0xff]
    %v1864 = vld [vmem:[#allocation7 + $0xf78] sm:$0xff]
    %v1865 = vld [vmem:[#allocation7 + $0xf80] sm:$0xff]
    %v1866 = vld [vmem:[#allocation7 + $0xf88] sm:$0xff]
    %v1867 = vld [vmem:[#allocation7 + $0xf90] sm:$0xff]
    %v1868 = vld [vmem:[#allocation7 + $0xf98] sm:$0xff]
    %v1869 = vld [vmem:[#allocation7 + $0xfa0] sm:$0xff]
    %v1870 = vld [vmem:[#allocation7 + $0xfa8] sm:$0xff]
    %v1871 = vld [vmem:[#allocation7 + $0xfb0] sm:$0xff]
    %v1872 = vld [vmem:[#allocation7 + $0xfb8] sm:$0xff]
    %v1873 = vld [vmem:[#allocation7 + $0xfc0] sm:$0xff]
    %v1874 = vld [vmem:[#allocation7 + $0xfc8] sm:$0xff]
    %v1875 = vld [vmem:[#allocation7 + $0xfd0] sm:$0xff]
    %v1876 = vld [vmem:[#allocation7 + $0xfd8] sm:$0xff]
    %v1877 = vld [vmem:[#allocation7 + $0xfe0] sm:$0xff]
    %v1878 = vld [vmem:[#allocation7 + $0xfe8] sm:$0xff]
    %v1879 = vld [vmem:[#allocation7 + $0xff0] sm:$0xff]
    %v1880 = vld [vmem:[#allocation7 + $0xff8] sm:$0xff]
    %v2393 = vunpack.c.l.b16 %v1369
    %v2394 = vunpack.c.h.b16 %v1369
    %v2395 = vunpack.c.l.b16 %v1370
    %v2396 = vunpack.c.h.b16 %v1370
    %v2397 = vunpack.c.l.b16 %v1371
    %v2398 = vunpack.c.h.b16 %v1371
    %v2399 = vunpack.c.l.b16 %v1372
    %v2400 = vunpack.c.h.b16 %v1372
    %v2401 = vunpack.c.l.b16 %v1373
    %v2402 = vunpack.c.h.b16 %v1373
    %v2403 = vunpack.c.l.b16 %v1374
    %v2404 = vunpack.c.h.b16 %v1374
    %v2405 = vunpack.c.l.b16 %v1375
    %v2406 = vunpack.c.h.b16 %v1375
    %v2407 = vunpack.c.l.b16 %v1376
    %v2408 = vunpack.c.h.b16 %v1376
    %v2409 = vunpack.c.l.b16 %v1377
    %v2410 = vunpack.c.h.b16 %v1377
    %v2411 = vunpack.c.l.b16 %v1378
    %v2412 = vunpack.c.h.b16 %v1378
    %v2413 = vunpack.c.l.b16 %v1379
    %v2414 = vunpack.c.h.b16 %v1379
    %v2415 = vunpack.c.l.b16 %v1380
    %v2416 = vunpack.c.h.b16 %v1380
    %v2417 = vunpack.c.l.b16 %v1381
    %v2418 = vunpack.c.h.b16 %v1381
    %v2419 = vunpack.c.l.b16 %v1382
    %v2420 = vunpack.c.h.b16 %v1382
    %v2421 = vunpack.c.l.b16 %v1383
    %v2422 = vunpack.c.h.b16 %v1383
    %v2423 = vunpack.c.l.b16 %v1384
    %v2424 = vunpack.c.h.b16 %v1384
    %v2425 = vunpack.c.l.b16 %v1385
    %v2426 = vunpack.c.h.b16 %v1385
    %v2427 = vunpack.c.l.b16 %v1386
    %v2428 = vunpack.c.h.b16 %v1386
    %v2429 = vunpack.c.l.b16 %v1387
    %v2430 = vunpack.c.h.b16 %v1387
    %v2431 = vunpack.c.l.b16 %v1388
    %v2432 = vunpack.c.h.b16 %v1388
    %v2433 = vunpack.c.l.b16 %v1389
    %v2434 = vunpack.c.h.b16 %v1389
    %v2435 = vunpack.c.l.b16 %v1390
    %v2436 = vunpack.c.h.b16 %v1390
    %v2437 = vunpack.c.l.b16 %v1391
    %v2438 = vunpack.c.h.b16 %v1391
    %v2439 = vunpack.c.l.b16 %v1392
    %v2440 = vunpack.c.h.b16 %v1392
    %v2441 = vunpack.c.l.b16 %v1393
    %v2442 = vunpack.c.h.b16 %v1393
    %v2443 = vunpack.c.l.b16 %v1394
    %v2444 = vunpack.c.h.b16 %v1394
    %v2445 = vunpack.c.l.b16 %v1395
    %v2446 = vunpack.c.h.b16 %v1395
    %v2447 = vunpack.c.l.b16 %v1396
    %v2448 = vunpack.c.h.b16 %v1396
    %v2449 = vunpack.c.l.b16 %v1397
    %v2450 = vunpack.c.h.b16 %v1397
    %v2451 = vunpack.c.l.b16 %v1398
    %v2452 = vunpack.c.h.b16 %v1398
    %v2453 = vunpack.c.l.b16 %v1399
    %v2454 = vunpack.c.h.b16 %v1399
    %v2455 = vunpack.c.l.b16 %v1400
    %v2456 = vunpack.c.h.b16 %v1400
    %v2457 = vunpack.c.l.b16 %v1401
    %v2458 = vunpack.c.h.b16 %v1401
    %v2459 = vunpack.c.l.b16 %v1402
    %v2460 = vunpack.c.h.b16 %v1402
    %v2461 = vunpack.c.l.b16 %v1403
    %v2462 = vunpack.c.h.b16 %v1403
    %v2463 = vunpack.c.l.b16 %v1404
    %v2464 = vunpack.c.h.b16 %v1404
    %v2465 = vunpack.c.l.b16 %v1405
    %v2466 = vunpack.c.h.b16 %v1405
    %v2467 = vunpack.c.l.b16 %v1406
    %v2468 = vunpack.c.h.b16 %v1406
    %v2469 = vunpack.c.l.b16 %v1407
    %v2470 = vunpack.c.h.b16 %v1407
    %v2471 = vunpack.c.l.b16 %v1408
    %v2472 = vunpack.c.h.b16 %v1408
    %v2473 = vunpack.c.l.b16 %v1409
    %v2474 = vunpack.c.h.b16 %v1409
    %v2475 = vunpack.c.l.b16 %v1410
    %v2476 = vunpack.c.h.b16 %v1410
    %v2477 = vunpack.c.l.b16 %v1411
    %v2478 = vunpack.c.h.b16 %v1411
    %v2479 = vunpack.c.l.b16 %v1412
    %v2480 = vunpack.c.h.b16 %v1412
    %v2481 = vunpack.c.l.b16 %v1413
    %v2482 = vunpack.c.h.b16 %v1413
    %v2483 = vunpack.c.l.b16 %v1414
    %v2484 = vunpack.c.h.b16 %v1414
    %v2485 = vunpack.c.l.b16 %v1415
    %v2486 = vunpack.c.h.b16 %v1415
    %v2487 = vunpack.c.l.b16 %v1416
    %v2488 = vunpack.c.h.b16 %v1416
    %v2489 = vunpack.c.l.b16 %v1417
    %v2490 = vunpack.c.h.b16 %v1417
    %v2491 = vunpack.c.l.b16 %v1418
    %v2492 = vunpack.c.h.b16 %v1418
    %v2493 = vunpack.c.l.b16 %v1419
    %v2494 = vunpack.c.h.b16 %v1419
    %v2495 = vunpack.c.l.b16 %v1420
    %v2496 = vunpack.c.h.b16 %v1420
    %v2497 = vunpack.c.l.b16 %v1421
    %v2498 = vunpack.c.h.b16 %v1421
    %v2499 = vunpack.c.l.b16 %v1422
    %v2500 = vunpack.c.h.b16 %v1422
    %v2501 = vunpack.c.l.b16 %v1423
    %v2502 = vunpack.c.h.b16 %v1423
    %v2503 = vunpack.c.l.b16 %v1424
    %v2504 = vunpack.c.h.b16 %v1424
    %v2505 = vunpack.c.l.b16 %v1425
    %v2506 = vunpack.c.h.b16 %v1425
    %v2507 = vunpack.c.l.b16 %v1426
    %v2508 = vunpack.c.h.b16 %v1426
    %v2509 = vunpack.c.l.b16 %v1427
    %v2510 = vunpack.c.h.b16 %v1427
    %v2511 = vunpack.c.l.b16 %v1428
    %v2512 = vunpack.c.h.b16 %v1428
    %v2513 = vunpack.c.l.b16 %v1429
    %v2514 = vunpack.c.h.b16 %v1429
    %v2515 = vunpack.c.l.b16 %v1430
    %v2516 = vunpack.c.h.b16 %v1430
    %v2517 = vunpack.c.l.b16 %v1431
    %v2518 = vunpack.c.h.b16 %v1431
    %v2519 = vunpack.c.l.b16 %v1432
    %v2520 = vunpack.c.h.b16 %v1432
    %v2521 = vunpack.c.l.b16 %v1433
    %v2522 = vunpack.c.h.b16 %v1433
    %v2523 = vunpack.c.l.b16 %v1434
    %v2524 = vunpack.c.h.b16 %v1434
    %v2525 = vunpack.c.l.b16 %v1435
    %v2526 = vunpack.c.h.b16 %v1435
    %v2527 = vunpack.c.l.b16 %v1436
    %v2528 = vunpack.c.h.b16 %v1436
    %v2529 = vunpack.c.l.b16 %v1437
    %v2530 = vunpack.c.h.b16 %v1437
    %v2531 = vunpack.c.l.b16 %v1438
    %v2532 = vunpack.c.h.b16 %v1438
    %v2533 = vunpack.c.l.b16 %v1439
    %v2534 = vunpack.c.h.b16 %v1439
    %v2535 = vunpack.c.l.b16 %v1440
    %v2536 = vunpack.c.h.b16 %v1440
    %v2537 = vunpack.c.l.b16 %v1441
    %v2538 = vunpack.c.h.b16 %v1441
    %v2539 = vunpack.c.l.b16 %v1442
    %v2540 = vunpack.c.h.b16 %v1442
    %v2541 = vunpack.c.l.b16 %v1443
    %v2542 = vunpack.c.h.b16 %v1443
    %v2543 = vunpack.c.l.b16 %v1444
    %v2544 = vunpack.c.h.b16 %v1444
    %v2545 = vunpack.c.l.b16 %v1445
    %v2546 = vunpack.c.h.b16 %v1445
    %v2547 = vunpack.c.l.b16 %v1446
    %v2548 = vunpack.c.h.b16 %v1446
    %v2549 = vunpack.c.l.b16 %v1447
    %v2550 = vunpack.c.h.b16 %v1447
    %v2551 = vunpack.c.l.b16 %v1448
    %v2552 = vunpack.c.h.b16 %v1448
    %v2553 = vunpack.c.l.b16 %v1449
    %v2554 = vunpack.c.h.b16 %v1449
    %v2555 = vunpack.c.l.b16 %v1450
    %v2556 = vunpack.c.h.b16 %v1450
    %v2557 = vunpack.c.l.b16 %v1451
    %v2558 = vunpack.c.h.b16 %v1451
    %v2559 = vunpack.c.l.b16 %v1452
    %v2560 = vunpack.c.h.b16 %v1452
    %v2561 = vunpack.c.l.b16 %v1453
    %v2562 = vunpack.c.h.b16 %v1453
    %v2563 = vunpack.c.l.b16 %v1454
    %v2564 = vunpack.c.h.b16 %v1454
    %v2565 = vunpack.c.l.b16 %v1455
    %v2566 = vunpack.c.h.b16 %v1455
    %v2567 = vunpack.c.l.b16 %v1456
    %v2568 = vunpack.c.h.b16 %v1456
    %v2569 = vunpack.c.l.b16 %v1457
    %v2570 = vunpack.c.h.b16 %v1457
    %v2571 = vunpack.c.l.b16 %v1458
    %v2572 = vunpack.c.h.b16 %v1458
    %v2573 = vunpack.c.l.b16 %v1459
    %v2574 = vunpack.c.h.b16 %v1459
    %v2575 = vunpack.c.l.b16 %v1460
    %v2576 = vunpack.c.h.b16 %v1460
    %v2577 = vunpack.c.l.b16 %v1461
    %v2578 = vunpack.c.h.b16 %v1461
    %v2579 = vunpack.c.l.b16 %v1462
    %v2580 = vunpack.c.h.b16 %v1462
    %v2581 = vunpack.c.l.b16 %v1463
    %v2582 = vunpack.c.h.b16 %v1463
    %v2583 = vunpack.c.l.b16 %v1464
    %v2584 = vunpack.c.h.b16 %v1464
    %v2585 = vunpack.c.l.b16 %v1465
    %v2586 = vunpack.c.h.b16 %v1465
    %v2587 = vunpack.c.l.b16 %v1466
    %v2588 = vunpack.c.h.b16 %v1466
    %v2589 = vunpack.c.l.b16 %v1467
    %v2590 = vunpack.c.h.b16 %v1467
    %v2591 = vunpack.c.l.b16 %v1468
    %v2592 = vunpack.c.h.b16 %v1468
    %v2593 = vunpack.c.l.b16 %v1469
    %v2594 = vunpack.c.h.b16 %v1469
    %v2595 = vunpack.c.l.b16 %v1470
    %v2596 = vunpack.c.h.b16 %v1470
    %v2597 = vunpack.c.l.b16 %v1471
    %v2598 = vunpack.c.h.b16 %v1471
    %v2599 = vunpack.c.l.b16 %v1472
    %v2600 = vunpack.c.h.b16 %v1472
    %v2601 = vunpack.c.l.b16 %v1473
    %v2602 = vunpack.c.h.b16 %v1473
    %v2603 = vunpack.c.l.b16 %v1474
    %v2604 = vunpack.c.h.b16 %v1474
    %v2605 = vunpack.c.l.b16 %v1475
    %v2606 = vunpack.c.h.b16 %v1475
    %v2607 = vunpack.c.l.b16 %v1476
    %v2608 = vunpack.c.h.b16 %v1476
    %v2609 = vunpack.c.l.b16 %v1477
    %v2610 = vunpack.c.h.b16 %v1477
    %v2611 = vunpack.c.l.b16 %v1478
    %v2612 = vunpack.c.h.b16 %v1478
    %v2613 = vunpack.c.l.b16 %v1479
    %v2614 = vunpack.c.h.b16 %v1479
    %v2615 = vunpack.c.l.b16 %v1480
    %v2616 = vunpack.c.h.b16 %v1480
    %v2617 = vunpack.c.l.b16 %v1481
    %v2618 = vunpack.c.h.b16 %v1481
    %v2619 = vunpack.c.l.b16 %v1482
    %v2620 = vunpack.c.h.b16 %v1482
    %v2621 = vunpack.c.l.b16 %v1483
    %v2622 = vunpack.c.h.b16 %v1483
    %v2623 = vunpack.c.l.b16 %v1484
    %v2624 = vunpack.c.h.b16 %v1484
    %v2625 = vunpack.c.l.b16 %v1485
    %v2626 = vunpack.c.h.b16 %v1485
    %v2627 = vunpack.c.l.b16 %v1486
    %v2628 = vunpack.c.h.b16 %v1486
    %v2629 = vunpack.c.l.b16 %v1487
    %v2630 = vunpack.c.h.b16 %v1487
    %v2631 = vunpack.c.l.b16 %v1488
    %v2632 = vunpack.c.h.b16 %v1488
    %v2633 = vunpack.c.l.b16 %v1489
    %v2634 = vunpack.c.h.b16 %v1489
    %v2635 = vunpack.c.l.b16 %v1490
    %v2636 = vunpack.c.h.b16 %v1490
    %v2637 = vunpack.c.l.b16 %v1491
    %v2638 = vunpack.c.h.b16 %v1491
    %v2639 = vunpack.c.l.b16 %v1492
    %v2640 = vunpack.c.h.b16 %v1492
    %v2641 = vunpack.c.l.b16 %v1493
    %v2642 = vunpack.c.h.b16 %v1493
    %v2643 = vunpack.c.l.b16 %v1494
    %v2644 = vunpack.c.h.b16 %v1494
    %v2645 = vunpack.c.l.b16 %v1495
    %v2646 = vunpack.c.h.b16 %v1495
    %v2647 = vunpack.c.l.b16 %v1496
    %v2648 = vunpack.c.h.b16 %v1496
    %v2649 = vunpack.c.l.b16 %v1497
    %v2650 = vunpack.c.h.b16 %v1497
    %v2651 = vunpack.c.l.b16 %v1498
    %v2652 = vunpack.c.h.b16 %v1498
    %v2653 = vunpack.c.l.b16 %v1499
    %v2654 = vunpack.c.h.b16 %v1499
    %v2655 = vunpack.c.l.b16 %v1500
    %v2656 = vunpack.c.h.b16 %v1500
    %v2657 = vunpack.c.l.b16 %v1501
    %v2658 = vunpack.c.h.b16 %v1501
    %v2659 = vunpack.c.l.b16 %v1502
    %v2660 = vunpack.c.h.b16 %v1502
    %v2661 = vunpack.c.l.b16 %v1503
    %v2662 = vunpack.c.h.b16 %v1503
    %v2663 = vunpack.c.l.b16 %v1504
    %v2664 = vunpack.c.h.b16 %v1504
    %v2665 = vunpack.c.l.b16 %v1505
    %v2666 = vunpack.c.h.b16 %v1505
    %v2667 = vunpack.c.l.b16 %v1506
    %v2668 = vunpack.c.h.b16 %v1506
    %v2669 = vunpack.c.l.b16 %v1507
    %v2670 = vunpack.c.h.b16 %v1507
    %v2671 = vunpack.c.l.b16 %v1508
    %v2672 = vunpack.c.h.b16 %v1508
    %v2673 = vunpack.c.l.b16 %v1509
    %v2674 = vunpack.c.h.b16 %v1509
    %v2675 = vunpack.c.l.b16 %v1510
    %v2676 = vunpack.c.h.b16 %v1510
    %v2677 = vunpack.c.l.b16 %v1511
    %v2678 = vunpack.c.h.b16 %v1511
    %v2679 = vunpack.c.l.b16 %v1512
    %v2680 = vunpack.c.h.b16 %v1512
    %v2681 = vunpack.c.l.b16 %v1513
    %v2682 = vunpack.c.h.b16 %v1513
    %v2683 = vunpack.c.l.b16 %v1514
    %v2684 = vunpack.c.h.b16 %v1514
    %v2685 = vunpack.c.l.b16 %v1515
    %v2686 = vunpack.c.h.b16 %v1515
    %v2687 = vunpack.c.l.b16 %v1516
    %v2688 = vunpack.c.h.b16 %v1516
    %v2689 = vunpack.c.l.b16 %v1517
    %v2690 = vunpack.c.h.b16 %v1517
    %v2691 = vunpack.c.l.b16 %v1518
    %v2692 = vunpack.c.h.b16 %v1518
    %v2693 = vunpack.c.l.b16 %v1519
    %v2694 = vunpack.c.h.b16 %v1519
    %v2695 = vunpack.c.l.b16 %v1520
    %v2696 = vunpack.c.h.b16 %v1520
    %v2697 = vunpack.c.l.b16 %v1521
    %v2698 = vunpack.c.h.b16 %v1521
    %v2699 = vunpack.c.l.b16 %v1522
    %v2700 = vunpack.c.h.b16 %v1522
    %v2701 = vunpack.c.l.b16 %v1523
    %v2702 = vunpack.c.h.b16 %v1523
    %v2703 = vunpack.c.l.b16 %v1524
    %v2704 = vunpack.c.h.b16 %v1524
    %v2705 = vunpack.c.l.b16 %v1525
    %v2706 = vunpack.c.h.b16 %v1525
    %v2707 = vunpack.c.l.b16 %v1526
    %v2708 = vunpack.c.h.b16 %v1526
    %v2709 = vunpack.c.l.b16 %v1527
    %v2710 = vunpack.c.h.b16 %v1527
    %v2711 = vunpack.c.l.b16 %v1528
    %v2712 = vunpack.c.h.b16 %v1528
    %v2713 = vunpack.c.l.b16 %v1529
    %v2714 = vunpack.c.h.b16 %v1529
    %v2715 = vunpack.c.l.b16 %v1530
    %v2716 = vunpack.c.h.b16 %v1530
    %v2717 = vunpack.c.l.b16 %v1531
    %v2718 = vunpack.c.h.b16 %v1531
    %v2719 = vunpack.c.l.b16 %v1532
    %v2720 = vunpack.c.h.b16 %v1532
    %v2721 = vunpack.c.l.b16 %v1533
    %v2722 = vunpack.c.h.b16 %v1533
    %v2723 = vunpack.c.l.b16 %v1534
    %v2724 = vunpack.c.h.b16 %v1534
    %v2725 = vunpack.c.l.b16 %v1535
    %v2726 = vunpack.c.h.b16 %v1535
    %v2727 = vunpack.c.l.b16 %v1536
    %v2728 = vunpack.c.h.b16 %v1536
    %v2729 = vunpack.c.l.b16 %v1537
    %v2730 = vunpack.c.h.b16 %v1537
    %v2731 = vunpack.c.l.b16 %v1538
    %v2732 = vunpack.c.h.b16 %v1538
    %v2733 = vunpack.c.l.b16 %v1539
    %v2734 = vunpack.c.h.b16 %v1539
    %v2735 = vunpack.c.l.b16 %v1540
    %v2736 = vunpack.c.h.b16 %v1540
    %v2737 = vunpack.c.l.b16 %v1541
    %v2738 = vunpack.c.h.b16 %v1541
    %v2739 = vunpack.c.l.b16 %v1542
    %v2740 = vunpack.c.h.b16 %v1542
    %v2741 = vunpack.c.l.b16 %v1543
    %v2742 = vunpack.c.h.b16 %v1543
    %v2743 = vunpack.c.l.b16 %v1544
    %v2744 = vunpack.c.h.b16 %v1544
    %v2745 = vunpack.c.l.b16 %v1545
    %v2746 = vunpack.c.h.b16 %v1545
    %v2747 = vunpack.c.l.b16 %v1546
    %v2748 = vunpack.c.h.b16 %v1546
    %v2749 = vunpack.c.l.b16 %v1547
    %v2750 = vunpack.c.h.b16 %v1547
    %v2751 = vunpack.c.l.b16 %v1548
    %v2752 = vunpack.c.h.b16 %v1548
    %v2753 = vunpack.c.l.b16 %v1549
    %v2754 = vunpack.c.h.b16 %v1549
    %v2755 = vunpack.c.l.b16 %v1550
    %v2756 = vunpack.c.h.b16 %v1550
    %v2757 = vunpack.c.l.b16 %v1551
    %v2758 = vunpack.c.h.b16 %v1551
    %v2759 = vunpack.c.l.b16 %v1552
    %v2760 = vunpack.c.h.b16 %v1552
    %v2761 = vunpack.c.l.b16 %v1553
    %v2762 = vunpack.c.h.b16 %v1553
    %v2763 = vunpack.c.l.b16 %v1554
    %v2764 = vunpack.c.h.b16 %v1554
    %v2765 = vunpack.c.l.b16 %v1555
    %v2766 = vunpack.c.h.b16 %v1555
    %v2767 = vunpack.c.l.b16 %v1556
    %v2768 = vunpack.c.h.b16 %v1556
    %v2769 = vunpack.c.l.b16 %v1557
    %v2770 = vunpack.c.h.b16 %v1557
    %v2771 = vunpack.c.l.b16 %v1558
    %v2772 = vunpack.c.h.b16 %v1558
    %v2773 = vunpack.c.l.b16 %v1559
    %v2774 = vunpack.c.h.b16 %v1559
    %v2775 = vunpack.c.l.b16 %v1560
    %v2776 = vunpack.c.h.b16 %v1560
    %v2777 = vunpack.c.l.b16 %v1561
    %v2778 = vunpack.c.h.b16 %v1561
    %v2779 = vunpack.c.l.b16 %v1562
    %v2780 = vunpack.c.h.b16 %v1562
    %v2781 = vunpack.c.l.b16 %v1563
    %v2782 = vunpack.c.h.b16 %v1563
    %v2783 = vunpack.c.l.b16 %v1564
    %v2784 = vunpack.c.h.b16 %v1564
    %v2785 = vunpack.c.l.b16 %v1565
    %v2786 = vunpack.c.h.b16 %v1565
    %v2787 = vunpack.c.l.b16 %v1566
    %v2788 = vunpack.c.h.b16 %v1566
    %v2789 = vunpack.c.l.b16 %v1567
    %v2790 = vunpack.c.h.b16 %v1567
    %v2791 = vunpack.c.l.b16 %v1568
    %v2792 = vunpack.c.h.b16 %v1568
    %v2793 = vunpack.c.l.b16 %v1569
    %v2794 = vunpack.c.h.b16 %v1569
    %v2795 = vunpack.c.l.b16 %v1570
    %v2796 = vunpack.c.h.b16 %v1570
    %v2797 = vunpack.c.l.b16 %v1571
    %v2798 = vunpack.c.h.b16 %v1571
    %v2799 = vunpack.c.l.b16 %v1572
    %v2800 = vunpack.c.h.b16 %v1572
    %v2801 = vunpack.c.l.b16 %v1573
    %v2802 = vunpack.c.h.b16 %v1573
    %v2803 = vunpack.c.l.b16 %v1574
    %v2804 = vunpack.c.h.b16 %v1574
    %v2805 = vunpack.c.l.b16 %v1575
    %v2806 = vunpack.c.h.b16 %v1575
    %v2807 = vunpack.c.l.b16 %v1576
    %v2808 = vunpack.c.h.b16 %v1576
    %v2809 = vunpack.c.l.b16 %v1577
    %v2810 = vunpack.c.h.b16 %v1577
    %v2811 = vunpack.c.l.b16 %v1578
    %v2812 = vunpack.c.h.b16 %v1578
    %v2813 = vunpack.c.l.b16 %v1579
    %v2814 = vunpack.c.h.b16 %v1579
    %v2815 = vunpack.c.l.b16 %v1580
    %v2816 = vunpack.c.h.b16 %v1580
    %v2817 = vunpack.c.l.b16 %v1581
    %v2818 = vunpack.c.h.b16 %v1581
    %v2819 = vunpack.c.l.b16 %v1582
    %v2820 = vunpack.c.h.b16 %v1582
    %v2821 = vunpack.c.l.b16 %v1583
    %v2822 = vunpack.c.h.b16 %v1583
    %v2823 = vunpack.c.l.b16 %v1584
    %v2824 = vunpack.c.h.b16 %v1584
    %v2825 = vunpack.c.l.b16 %v1585
    %v2826 = vunpack.c.h.b16 %v1585
    %v2827 = vunpack.c.l.b16 %v1586
    %v2828 = vunpack.c.h.b16 %v1586
    %v2829 = vunpack.c.l.b16 %v1587
    %v2830 = vunpack.c.h.b16 %v1587
    %v2831 = vunpack.c.l.b16 %v1588
    %v2832 = vunpack.c.h.b16 %v1588
    %v2833 = vunpack.c.l.b16 %v1589
    %v2834 = vunpack.c.h.b16 %v1589
    %v2835 = vunpack.c.l.b16 %v1590
    %v2836 = vunpack.c.h.b16 %v1590
    %v2837 = vunpack.c.l.b16 %v1591
    %v2838 = vunpack.c.h.b16 %v1591
    %v2839 = vunpack.c.l.b16 %v1592
    %v2840 = vunpack.c.h.b16 %v1592
    %v2841 = vunpack.c.l.b16 %v1593
    %v2842 = vunpack.c.h.b16 %v1593
    %v2843 = vunpack.c.l.b16 %v1594
    %v2844 = vunpack.c.h.b16 %v1594
    %v2845 = vunpack.c.l.b16 %v1595
    %v2846 = vunpack.c.h.b16 %v1595
    %v2847 = vunpack.c.l.b16 %v1596
    %v2848 = vunpack.c.h.b16 %v1596
    %v2849 = vunpack.c.l.b16 %v1597
    %v2850 = vunpack.c.h.b16 %v1597
    %v2851 = vunpack.c.l.b16 %v1598
    %v2852 = vunpack.c.h.b16 %v1598
    %v2853 = vunpack.c.l.b16 %v1599
    %v2854 = vunpack.c.h.b16 %v1599
    %v2855 = vunpack.c.l.b16 %v1600
    %v2856 = vunpack.c.h.b16 %v1600
    %v2857 = vunpack.c.l.b16 %v1601
    %v2858 = vunpack.c.h.b16 %v1601
    %v2859 = vunpack.c.l.b16 %v1602
    %v2860 = vunpack.c.h.b16 %v1602
    %v2861 = vunpack.c.l.b16 %v1603
    %v2862 = vunpack.c.h.b16 %v1603
    %v2863 = vunpack.c.l.b16 %v1604
    %v2864 = vunpack.c.h.b16 %v1604
    %v2865 = vunpack.c.l.b16 %v1605
    %v2866 = vunpack.c.h.b16 %v1605
    %v2867 = vunpack.c.l.b16 %v1606
    %v2868 = vunpack.c.h.b16 %v1606
    %v2869 = vunpack.c.l.b16 %v1607
    %v2870 = vunpack.c.h.b16 %v1607
    %v2871 = vunpack.c.l.b16 %v1608
    %v2872 = vunpack.c.h.b16 %v1608
    %v2873 = vunpack.c.l.b16 %v1609
    %v2874 = vunpack.c.h.b16 %v1609
    %v2875 = vunpack.c.l.b16 %v1610
    %v2876 = vunpack.c.h.b16 %v1610
    %v2877 = vunpack.c.l.b16 %v1611
    %v2878 = vunpack.c.h.b16 %v1611
    %v2879 = vunpack.c.l.b16 %v1612
    %v2880 = vunpack.c.h.b16 %v1612
    %v2881 = vunpack.c.l.b16 %v1613
    %v2882 = vunpack.c.h.b16 %v1613
    %v2883 = vunpack.c.l.b16 %v1614
    %v2884 = vunpack.c.h.b16 %v1614
    %v2885 = vunpack.c.l.b16 %v1615
    %v2886 = vunpack.c.h.b16 %v1615
    %v2887 = vunpack.c.l.b16 %v1616
    %v2888 = vunpack.c.h.b16 %v1616
    %v2889 = vunpack.c.l.b16 %v1617
    %v2890 = vunpack.c.h.b16 %v1617
    %v2891 = vunpack.c.l.b16 %v1618
    %v2892 = vunpack.c.h.b16 %v1618
    %v2893 = vunpack.c.l.b16 %v1619
    %v2894 = vunpack.c.h.b16 %v1619
    %v2895 = vunpack.c.l.b16 %v1620
    %v2896 = vunpack.c.h.b16 %v1620
    %v2897 = vunpack.c.l.b16 %v1621
    %v2898 = vunpack.c.h.b16 %v1621
    %v2899 = vunpack.c.l.b16 %v1622
    %v2900 = vunpack.c.h.b16 %v1622
    %v2901 = vunpack.c.l.b16 %v1623
    %v2902 = vunpack.c.h.b16 %v1623
    %v2903 = vunpack.c.l.b16 %v1624
    %v2904 = vunpack.c.h.b16 %v1624
    %v2905 = vunpack.c.l.b16 %v1625
    %v2906 = vunpack.c.h.b16 %v1625
    %v2907 = vunpack.c.l.b16 %v1626
    %v2908 = vunpack.c.h.b16 %v1626
    %v2909 = vunpack.c.l.b16 %v1627
    %v2910 = vunpack.c.h.b16 %v1627
    %v2911 = vunpack.c.l.b16 %v1628
    %v2912 = vunpack.c.h.b16 %v1628
    %v2913 = vunpack.c.l.b16 %v1629
    %v2914 = vunpack.c.h.b16 %v1629
    %v2915 = vunpack.c.l.b16 %v1630
    %v2916 = vunpack.c.h.b16 %v1630
    %v2917 = vunpack.c.l.b16 %v1631
    %v2918 = vunpack.c.h.b16 %v1631
    %v2919 = vunpack.c.l.b16 %v1632
    %v2920 = vunpack.c.h.b16 %v1632
    %v2921 = vunpack.c.l.b16 %v1633
    %v2922 = vunpack.c.h.b16 %v1633
    %v2923 = vunpack.c.l.b16 %v1634
    %v2924 = vunpack.c.h.b16 %v1634
    %v2925 = vunpack.c.l.b16 %v1635
    %v2926 = vunpack.c.h.b16 %v1635
    %v2927 = vunpack.c.l.b16 %v1636
    %v2928 = vunpack.c.h.b16 %v1636
    %v2929 = vunpack.c.l.b16 %v1637
    %v2930 = vunpack.c.h.b16 %v1637
    %v2931 = vunpack.c.l.b16 %v1638
    %v2932 = vunpack.c.h.b16 %v1638
    %v2933 = vunpack.c.l.b16 %v1639
    %v2934 = vunpack.c.h.b16 %v1639
    %v2935 = vunpack.c.l.b16 %v1640
    %v2936 = vunpack.c.h.b16 %v1640
    %v2937 = vunpack.c.l.b16 %v1641
    %v2938 = vunpack.c.h.b16 %v1641
    %v2939 = vunpack.c.l.b16 %v1642
    %v2940 = vunpack.c.h.b16 %v1642
    %v2941 = vunpack.c.l.b16 %v1643
    %v2942 = vunpack.c.h.b16 %v1643
    %v2943 = vunpack.c.l.b16 %v1644
    %v2944 = vunpack.c.h.b16 %v1644
    %v2945 = vunpack.c.l.b16 %v1645
    %v2946 = vunpack.c.h.b16 %v1645
    %v2947 = vunpack.c.l.b16 %v1646
    %v2948 = vunpack.c.h.b16 %v1646
    %v2949 = vunpack.c.l.b16 %v1647
    %v2950 = vunpack.c.h.b16 %v1647
    %v2951 = vunpack.c.l.b16 %v1648
    %v2952 = vunpack.c.h.b16 %v1648
    %v2953 = vunpack.c.l.b16 %v1649
    %v2954 = vunpack.c.h.b16 %v1649
    %v2955 = vunpack.c.l.b16 %v1650
    %v2956 = vunpack.c.h.b16 %v1650
    %v2957 = vunpack.c.l.b16 %v1651
    %v2958 = vunpack.c.h.b16 %v1651
    %v2959 = vunpack.c.l.b16 %v1652
    %v2960 = vunpack.c.h.b16 %v1652
    %v2961 = vunpack.c.l.b16 %v1653
    %v2962 = vunpack.c.h.b16 %v1653
    %v2963 = vunpack.c.l.b16 %v1654
    %v2964 = vunpack.c.h.b16 %v1654
    %v2965 = vunpack.c.l.b16 %v1655
    %v2966 = vunpack.c.h.b16 %v1655
    %v2967 = vunpack.c.l.b16 %v1656
    %v2968 = vunpack.c.h.b16 %v1656
    %v2969 = vunpack.c.l.b16 %v1657
    %v2970 = vunpack.c.h.b16 %v1657
    %v2971 = vunpack.c.l.b16 %v1658
    %v2972 = vunpack.c.h.b16 %v1658
    %v2973 = vunpack.c.l.b16 %v1659
    %v2974 = vunpack.c.h.b16 %v1659
    %v2975 = vunpack.c.l.b16 %v1660
    %v2976 = vunpack.c.h.b16 %v1660
    %v2977 = vunpack.c.l.b16 %v1661
    %v2978 = vunpack.c.h.b16 %v1661
    %v2979 = vunpack.c.l.b16 %v1662
    %v2980 = vunpack.c.h.b16 %v1662
    %v2981 = vunpack.c.l.b16 %v1663
    %v2982 = vunpack.c.h.b16 %v1663
    %v2983 = vunpack.c.l.b16 %v1664
    %v2984 = vunpack.c.h.b16 %v1664
    %v2985 = vunpack.c.l.b16 %v1665
    %v2986 = vunpack.c.h.b16 %v1665
    %v2987 = vunpack.c.l.b16 %v1666
    %v2988 = vunpack.c.h.b16 %v1666
    %v2989 = vunpack.c.l.b16 %v1667
    %v2990 = vunpack.c.h.b16 %v1667
    %v2991 = vunpack.c.l.b16 %v1668
    %v2992 = vunpack.c.h.b16 %v1668
    %v2993 = vunpack.c.l.b16 %v1669
    %v2994 = vunpack.c.h.b16 %v1669
    %v2995 = vunpack.c.l.b16 %v1670
    %v2996 = vunpack.c.h.b16 %v1670
    %v2997 = vunpack.c.l.b16 %v1671
    %v2998 = vunpack.c.h.b16 %v1671
    %v2999 = vunpack.c.l.b16 %v1672
    %v3000 = vunpack.c.h.b16 %v1672
    %v3001 = vunpack.c.l.b16 %v1673
    %v3002 = vunpack.c.h.b16 %v1673
    %v3003 = vunpack.c.l.b16 %v1674
    %v3004 = vunpack.c.h.b16 %v1674
    %v3005 = vunpack.c.l.b16 %v1675
    %v3006 = vunpack.c.h.b16 %v1675
    %v3007 = vunpack.c.l.b16 %v1676
    %v3008 = vunpack.c.h.b16 %v1676
    %v3009 = vunpack.c.l.b16 %v1677
    %v3010 = vunpack.c.h.b16 %v1677
    %v3011 = vunpack.c.l.b16 %v1678
    %v3012 = vunpack.c.h.b16 %v1678
    %v3013 = vunpack.c.l.b16 %v1679
    %v3014 = vunpack.c.h.b16 %v1679
    %v3015 = vunpack.c.l.b16 %v1680
    %v3016 = vunpack.c.h.b16 %v1680
    %v3017 = vunpack.c.l.b16 %v1681
    %v3018 = vunpack.c.h.b16 %v1681
    %v3019 = vunpack.c.l.b16 %v1682
    %v3020 = vunpack.c.h.b16 %v1682
    %v3021 = vunpack.c.l.b16 %v1683
    %v3022 = vunpack.c.h.b16 %v1683
    %v3023 = vunpack.c.l.b16 %v1684
    %v3024 = vunpack.c.h.b16 %v1684
    %v3025 = vunpack.c.l.b16 %v1685
    %v3026 = vunpack.c.h.b16 %v1685
    %v3027 = vunpack.c.l.b16 %v1686
    %v3028 = vunpack.c.h.b16 %v1686
    %v3029 = vunpack.c.l.b16 %v1687
    %v3030 = vunpack.c.h.b16 %v1687
    %v3031 = vunpack.c.l.b16 %v1688
    %v3032 = vunpack.c.h.b16 %v1688
    %v3033 = vunpack.c.l.b16 %v1689
    %v3034 = vunpack.c.h.b16 %v1689
    %v3035 = vunpack.c.l.b16 %v1690
    %v3036 = vunpack.c.h.b16 %v1690
    %v3037 = vunpack.c.l.b16 %v1691
    %v3038 = vunpack.c.h.b16 %v1691
    %v3039 = vunpack.c.l.b16 %v1692
    %v3040 = vunpack.c.h.b16 %v1692
    %v3041 = vunpack.c.l.b16 %v1693
    %v3042 = vunpack.c.h.b16 %v1693
    %v3043 = vunpack.c.l.b16 %v1694
    %v3044 = vunpack.c.h.b16 %v1694
    %v3045 = vunpack.c.l.b16 %v1695
    %v3046 = vunpack.c.h.b16 %v1695
    %v3047 = vunpack.c.l.b16 %v1696
    %v3048 = vunpack.c.h.b16 %v1696
    %v3049 = vunpack.c.l.b16 %v1697
    %v3050 = vunpack.c.h.b16 %v1697
    %v3051 = vunpack.c.l.b16 %v1698
    %v3052 = vunpack.c.h.b16 %v1698
    %v3053 = vunpack.c.l.b16 %v1699
    %v3054 = vunpack.c.h.b16 %v1699
    %v3055 = vunpack.c.l.b16 %v1700
    %v3056 = vunpack.c.h.b16 %v1700
    %v3057 = vunpack.c.l.b16 %v1701
    %v3058 = vunpack.c.h.b16 %v1701
    %v3059 = vunpack.c.l.b16 %v1702
    %v3060 = vunpack.c.h.b16 %v1702
    %v3061 = vunpack.c.l.b16 %v1703
    %v3062 = vunpack.c.h.b16 %v1703
    %v3063 = vunpack.c.l.b16 %v1704
    %v3064 = vunpack.c.h.b16 %v1704
    %v3065 = vunpack.c.l.b16 %v1705
    %v3066 = vunpack.c.h.b16 %v1705
    %v3067 = vunpack.c.l.b16 %v1706
    %v3068 = vunpack.c.h.b16 %v1706
    %v3069 = vunpack.c.l.b16 %v1707
    %v3070 = vunpack.c.h.b16 %v1707
    %v3071 = vunpack.c.l.b16 %v1708
    %v3072 = vunpack.c.h.b16 %v1708
    %v3073 = vunpack.c.l.b16 %v1709
    %v3074 = vunpack.c.h.b16 %v1709
    %v3075 = vunpack.c.l.b16 %v1710
    %v3076 = vunpack.c.h.b16 %v1710
    %v3077 = vunpack.c.l.b16 %v1711
    %v3078 = vunpack.c.h.b16 %v1711
    %v3079 = vunpack.c.l.b16 %v1712
    %v3080 = vunpack.c.h.b16 %v1712
    %v3081 = vunpack.c.l.b16 %v1713
    %v3082 = vunpack.c.h.b16 %v1713
    %v3083 = vunpack.c.l.b16 %v1714
    %v3084 = vunpack.c.h.b16 %v1714
    %v3085 = vunpack.c.l.b16 %v1715
    %v3086 = vunpack.c.h.b16 %v1715
    %v3087 = vunpack.c.l.b16 %v1716
    %v3088 = vunpack.c.h.b16 %v1716
    %v3089 = vunpack.c.l.b16 %v1717
    %v3090 = vunpack.c.h.b16 %v1717
    %v3091 = vunpack.c.l.b16 %v1718
    %v3092 = vunpack.c.h.b16 %v1718
    %v3093 = vunpack.c.l.b16 %v1719
    %v3094 = vunpack.c.h.b16 %v1719
    %v3095 = vunpack.c.l.b16 %v1720
    %v3096 = vunpack.c.h.b16 %v1720
    %v3097 = vunpack.c.l.b16 %v1721
    %v3098 = vunpack.c.h.b16 %v1721
    %v3099 = vunpack.c.l.b16 %v1722
    %v3100 = vunpack.c.h.b16 %v1722
    %v3101 = vunpack.c.l.b16 %v1723
    %v3102 = vunpack.c.h.b16 %v1723
    %v3103 = vunpack.c.l.b16 %v1724
    %v3104 = vunpack.c.h.b16 %v1724
    %v3105 = vunpack.c.l.b16 %v1725
    %v3106 = vunpack.c.h.b16 %v1725
    %v3107 = vunpack.c.l.b16 %v1726
    %v3108 = vunpack.c.h.b16 %v1726
    %v3109 = vunpack.c.l.b16 %v1727
    %v3110 = vunpack.c.h.b16 %v1727
    %v3111 = vunpack.c.l.b16 %v1728
    %v3112 = vunpack.c.h.b16 %v1728
    %v3113 = vunpack.c.l.b16 %v1729
    %v3114 = vunpack.c.h.b16 %v1729
    %v3115 = vunpack.c.l.b16 %v1730
    %v3116 = vunpack.c.h.b16 %v1730
    %v3117 = vunpack.c.l.b16 %v1731
    %v3118 = vunpack.c.h.b16 %v1731
    %v3119 = vunpack.c.l.b16 %v1732
    %v3120 = vunpack.c.h.b16 %v1732
    %v3121 = vunpack.c.l.b16 %v1733
    %v3122 = vunpack.c.h.b16 %v1733
    %v3123 = vunpack.c.l.b16 %v1734
    %v3124 = vunpack.c.h.b16 %v1734
    %v3125 = vunpack.c.l.b16 %v1735
    %v3126 = vunpack.c.h.b16 %v1735
    %v3127 = vunpack.c.l.b16 %v1736
    %v3128 = vunpack.c.h.b16 %v1736
    %v3129 = vunpack.c.l.b16 %v1737
    %v3130 = vunpack.c.h.b16 %v1737
    %v3131 = vunpack.c.l.b16 %v1738
    %v3132 = vunpack.c.h.b16 %v1738
    %v3133 = vunpack.c.l.b16 %v1739
    %v3134 = vunpack.c.h.b16 %v1739
    %v3135 = vunpack.c.l.b16 %v1740
    %v3136 = vunpack.c.h.b16 %v1740
    %v3137 = vunpack.c.l.b16 %v1741
    %v3138 = vunpack.c.h.b16 %v1741
    %v3139 = vunpack.c.l.b16 %v1742
    %v3140 = vunpack.c.h.b16 %v1742
    %v3141 = vunpack.c.l.b16 %v1743
    %v3142 = vunpack.c.h.b16 %v1743
    %v3143 = vunpack.c.l.b16 %v1744
    %v3144 = vunpack.c.h.b16 %v1744
    %v3145 = vunpack.c.l.b16 %v1745
    %v3146 = vunpack.c.h.b16 %v1745
    %v3147 = vunpack.c.l.b16 %v1746
    %v3148 = vunpack.c.h.b16 %v1746
    %v3149 = vunpack.c.l.b16 %v1747
    %v3150 = vunpack.c.h.b16 %v1747
    %v3151 = vunpack.c.l.b16 %v1748
    %v3152 = vunpack.c.h.b16 %v1748
    %v3153 = vunpack.c.l.b16 %v1749
    %v3154 = vunpack.c.h.b16 %v1749
    %v3155 = vunpack.c.l.b16 %v1750
    %v3156 = vunpack.c.h.b16 %v1750
    %v3157 = vunpack.c.l.b16 %v1751
    %v3158 = vunpack.c.h.b16 %v1751
    %v3159 = vunpack.c.l.b16 %v1752
    %v3160 = vunpack.c.h.b16 %v1752
    %v3161 = vunpack.c.l.b16 %v1753
    %v3162 = vunpack.c.h.b16 %v1753
    %v3163 = vunpack.c.l.b16 %v1754
    %v3164 = vunpack.c.h.b16 %v1754
    %v3165 = vunpack.c.l.b16 %v1755
    %v3166 = vunpack.c.h.b16 %v1755
    %v3167 = vunpack.c.l.b16 %v1756
    %v3168 = vunpack.c.h.b16 %v1756
    %v3169 = vunpack.c.l.b16 %v1757
    %v3170 = vunpack.c.h.b16 %v1757
    %v3171 = vunpack.c.l.b16 %v1758
    %v3172 = vunpack.c.h.b16 %v1758
    %v3173 = vunpack.c.l.b16 %v1759
    %v3174 = vunpack.c.h.b16 %v1759
    %v3175 = vunpack.c.l.b16 %v1760
    %v3176 = vunpack.c.h.b16 %v1760
    %v3177 = vunpack.c.l.b16 %v1761
    %v3178 = vunpack.c.h.b16 %v1761
    %v3179 = vunpack.c.l.b16 %v1762
    %v3180 = vunpack.c.h.b16 %v1762
    %v3181 = vunpack.c.l.b16 %v1763
    %v3182 = vunpack.c.h.b16 %v1763
    %v3183 = vunpack.c.l.b16 %v1764
    %v3184 = vunpack.c.h.b16 %v1764
    %v3185 = vunpack.c.l.b16 %v1765
    %v3186 = vunpack.c.h.b16 %v1765
    %v3187 = vunpack.c.l.b16 %v1766
    %v3188 = vunpack.c.h.b16 %v1766
    %v3189 = vunpack.c.l.b16 %v1767
    %v3190 = vunpack.c.h.b16 %v1767
    %v3191 = vunpack.c.l.b16 %v1768
    %v3192 = vunpack.c.h.b16 %v1768
    %v3193 = vunpack.c.l.b16 %v1769
    %v3194 = vunpack.c.h.b16 %v1769
    %v3195 = vunpack.c.l.b16 %v1770
    %v3196 = vunpack.c.h.b16 %v1770
    %v3197 = vunpack.c.l.b16 %v1771
    %v3198 = vunpack.c.h.b16 %v1771
    %v3199 = vunpack.c.l.b16 %v1772
    %v3200 = vunpack.c.h.b16 %v1772
    %v3201 = vunpack.c.l.b16 %v1773
    %v3202 = vunpack.c.h.b16 %v1773
    %v3203 = vunpack.c.l.b16 %v1774
    %v3204 = vunpack.c.h.b16 %v1774
    %v3205 = vunpack.c.l.b16 %v1775
    %v3206 = vunpack.c.h.b16 %v1775
    %v3207 = vunpack.c.l.b16 %v1776
    %v3208 = vunpack.c.h.b16 %v1776
    %v3209 = vunpack.c.l.b16 %v1777
    %v3210 = vunpack.c.h.b16 %v1777
    %v3211 = vunpack.c.l.b16 %v1778
    %v3212 = vunpack.c.h.b16 %v1778
    %v3213 = vunpack.c.l.b16 %v1779
    %v3214 = vunpack.c.h.b16 %v1779
    %v3215 = vunpack.c.l.b16 %v1780
    %v3216 = vunpack.c.h.b16 %v1780
    %v3217 = vunpack.c.l.b16 %v1781
    %v3218 = vunpack.c.h.b16 %v1781
    %v3219 = vunpack.c.l.b16 %v1782
    %v3220 = vunpack.c.h.b16 %v1782
    %v3221 = vunpack.c.l.b16 %v1783
    %v3222 = vunpack.c.h.b16 %v1783
    %v3223 = vunpack.c.l.b16 %v1784
    %v3224 = vunpack.c.h.b16 %v1784
    %v3225 = vunpack.c.l.b16 %v1785
    %v3226 = vunpack.c.h.b16 %v1785
    %v3227 = vunpack.c.l.b16 %v1786
    %v3228 = vunpack.c.h.b16 %v1786
    %v3229 = vunpack.c.l.b16 %v1787
    %v3230 = vunpack.c.h.b16 %v1787
    %v3231 = vunpack.c.l.b16 %v1788
    %v3232 = vunpack.c.h.b16 %v1788
    %v3233 = vunpack.c.l.b16 %v1789
    %v3234 = vunpack.c.h.b16 %v1789
    %v3235 = vunpack.c.l.b16 %v1790
    %v3236 = vunpack.c.h.b16 %v1790
    %v3237 = vunpack.c.l.b16 %v1791
    %v3238 = vunpack.c.h.b16 %v1791
    %v3239 = vunpack.c.l.b16 %v1792
    %v3240 = vunpack.c.h.b16 %v1792
    %v3241 = vunpack.c.l.b16 %v1793
    %v3242 = vunpack.c.h.b16 %v1793
    %v3243 = vunpack.c.l.b16 %v1794
    %v3244 = vunpack.c.h.b16 %v1794
    %v3245 = vunpack.c.l.b16 %v1795
    %v3246 = vunpack.c.h.b16 %v1795
    %v3247 = vunpack.c.l.b16 %v1796
    %v3248 = vunpack.c.h.b16 %v1796
    %v3249 = vunpack.c.l.b16 %v1797
    %v3250 = vunpack.c.h.b16 %v1797
    %v3251 = vunpack.c.l.b16 %v1798
    %v3252 = vunpack.c.h.b16 %v1798
    %v3253 = vunpack.c.l.b16 %v1799
    %v3254 = vunpack.c.h.b16 %v1799
    %v3255 = vunpack.c.l.b16 %v1800
    %v3256 = vunpack.c.h.b16 %v1800
    %v3257 = vunpack.c.l.b16 %v1801
    %v3258 = vunpack.c.h.b16 %v1801
    %v3259 = vunpack.c.l.b16 %v1802
    %v3260 = vunpack.c.h.b16 %v1802
    %v3261 = vunpack.c.l.b16 %v1803
    %v3262 = vunpack.c.h.b16 %v1803
    %v3263 = vunpack.c.l.b16 %v1804
    %v3264 = vunpack.c.h.b16 %v1804
    %v3265 = vunpack.c.l.b16 %v1805
    %v3266 = vunpack.c.h.b16 %v1805
    %v3267 = vunpack.c.l.b16 %v1806
    %v3268 = vunpack.c.h.b16 %v1806
    %v3269 = vunpack.c.l.b16 %v1807
    %v3270 = vunpack.c.h.b16 %v1807
    %v3271 = vunpack.c.l.b16 %v1808
    %v3272 = vunpack.c.h.b16 %v1808
    %v3273 = vunpack.c.l.b16 %v1809
    %v3274 = vunpack.c.h.b16 %v1809
    %v3275 = vunpack.c.l.b16 %v1810
    %v3276 = vunpack.c.h.b16 %v1810
    %v3277 = vunpack.c.l.b16 %v1811
    %v3278 = vunpack.c.h.b16 %v1811
    %v3279 = vunpack.c.l.b16 %v1812
    %v3280 = vunpack.c.h.b16 %v1812
    %v3281 = vunpack.c.l.b16 %v1813
    %v3282 = vunpack.c.h.b16 %v1813
    %v3283 = vunpack.c.l.b16 %v1814
    %v3284 = vunpack.c.h.b16 %v1814
    %v3285 = vunpack.c.l.b16 %v1815
    %v3286 = vunpack.c.h.b16 %v1815
    %v3287 = vunpack.c.l.b16 %v1816
    %v3288 = vunpack.c.h.b16 %v1816
    %v3289 = vunpack.c.l.b16 %v1817
    %v3290 = vunpack.c.h.b16 %v1817
    %v3291 = vunpack.c.l.b16 %v1818
    %v3292 = vunpack.c.h.b16 %v1818
    %v3293 = vunpack.c.l.b16 %v1819
    %v3294 = vunpack.c.h.b16 %v1819
    %v3295 = vunpack.c.l.b16 %v1820
    %v3296 = vunpack.c.h.b16 %v1820
    %v3297 = vunpack.c.l.b16 %v1821
    %v3298 = vunpack.c.h.b16 %v1821
    %v3299 = vunpack.c.l.b16 %v1822
    %v3300 = vunpack.c.h.b16 %v1822
    %v3301 = vunpack.c.l.b16 %v1823
    %v3302 = vunpack.c.h.b16 %v1823
    %v3303 = vunpack.c.l.b16 %v1824
    %v3304 = vunpack.c.h.b16 %v1824
    %v3305 = vunpack.c.l.b16 %v1825
    %v3306 = vunpack.c.h.b16 %v1825
    %v3307 = vunpack.c.l.b16 %v1826
    %v3308 = vunpack.c.h.b16 %v1826
    %v3309 = vunpack.c.l.b16 %v1827
    %v3310 = vunpack.c.h.b16 %v1827
    %v3311 = vunpack.c.l.b16 %v1828
    %v3312 = vunpack.c.h.b16 %v1828
    %v3313 = vunpack.c.l.b16 %v1829
    %v3314 = vunpack.c.h.b16 %v1829
    %v3315 = vunpack.c.l.b16 %v1830
    %v3316 = vunpack.c.h.b16 %v1830
    %v3317 = vunpack.c.l.b16 %v1831
    %v3318 = vunpack.c.h.b16 %v1831
    %v3319 = vunpack.c.l.b16 %v1832
    %v3320 = vunpack.c.h.b16 %v1832
    %v3321 = vunpack.c.l.b16 %v1833
    %v3322 = vunpack.c.h.b16 %v1833
    %v3323 = vunpack.c.l.b16 %v1834
    %v3324 = vunpack.c.h.b16 %v1834
    %v3325 = vunpack.c.l.b16 %v1835
    %v3326 = vunpack.c.h.b16 %v1835
    %v3327 = vunpack.c.l.b16 %v1836
    %v3328 = vunpack.c.h.b16 %v1836
    %v3329 = vunpack.c.l.b16 %v1837
    %v3330 = vunpack.c.h.b16 %v1837
    %v3331 = vunpack.c.l.b16 %v1838
    %v3332 = vunpack.c.h.b16 %v1838
    %v3333 = vunpack.c.l.b16 %v1839
    %v3334 = vunpack.c.h.b16 %v1839
    %v3335 = vunpack.c.l.b16 %v1840
    %v3336 = vunpack.c.h.b16 %v1840
    %v3337 = vunpack.c.l.b16 %v1841
    %v3338 = vunpack.c.h.b16 %v1841
    %v3339 = vunpack.c.l.b16 %v1842
    %v3340 = vunpack.c.h.b16 %v1842
    %v3341 = vunpack.c.l.b16 %v1843
    %v3342 = vunpack.c.h.b16 %v1843
    %v3343 = vunpack.c.l.b16 %v1844
    %v3344 = vunpack.c.h.b16 %v1844
    %v3345 = vunpack.c.l.b16 %v1845
    %v3346 = vunpack.c.h.b16 %v1845
    %v3347 = vunpack.c.l.b16 %v1846
    %v3348 = vunpack.c.h.b16 %v1846
    %v3349 = vunpack.c.l.b16 %v1847
    %v3350 = vunpack.c.h.b16 %v1847
    %v3351 = vunpack.c.l.b16 %v1848
    %v3352 = vunpack.c.h.b16 %v1848
    %v3353 = vunpack.c.l.b16 %v1849
    %v3354 = vunpack.c.h.b16 %v1849
    %v3355 = vunpack.c.l.b16 %v1850
    %v3356 = vunpack.c.h.b16 %v1850
    %v3357 = vunpack.c.l.b16 %v1851
    %v3358 = vunpack.c.h.b16 %v1851
    %v3359 = vunpack.c.l.b16 %v1852
    %v3360 = vunpack.c.h.b16 %v1852
    %v3361 = vunpack.c.l.b16 %v1853
    %v3362 = vunpack.c.h.b16 %v1853
    %v3363 = vunpack.c.l.b16 %v1854
    %v3364 = vunpack.c.h.b16 %v1854
    %v3365 = vunpack.c.l.b16 %v1855
    %v3366 = vunpack.c.h.b16 %v1855
    %v3367 = vunpack.c.l.b16 %v1856
    %v3368 = vunpack.c.h.b16 %v1856
    %v3369 = vunpack.c.l.b16 %v1857
    %v3370 = vunpack.c.h.b16 %v1857
    %v3371 = vunpack.c.l.b16 %v1858
    %v3372 = vunpack.c.h.b16 %v1858
    %v3373 = vunpack.c.l.b16 %v1859
    %v3374 = vunpack.c.h.b16 %v1859
    %v3375 = vunpack.c.l.b16 %v1860
    %v3376 = vunpack.c.h.b16 %v1860
    %v3377 = vunpack.c.l.b16 %v1861
    %v3378 = vunpack.c.h.b16 %v1861
    %v3379 = vunpack.c.l.b16 %v1862
    %v3380 = vunpack.c.h.b16 %v1862
    %v3381 = vunpack.c.l.b16 %v1863
    %v3382 = vunpack.c.h.b16 %v1863
    %v3383 = vunpack.c.l.b16 %v1864
    %v3384 = vunpack.c.h.b16 %v1864
    %v3385 = vunpack.c.l.b16 %v1865
    %v3386 = vunpack.c.h.b16 %v1865
    %v3387 = vunpack.c.l.b16 %v1866
    %v3388 = vunpack.c.h.b16 %v1866
    %v3389 = vunpack.c.l.b16 %v1867
    %v3390 = vunpack.c.h.b16 %v1867
    %v3391 = vunpack.c.l.b16 %v1868
    %v3392 = vunpack.c.h.b16 %v1868
    %v3393 = vunpack.c.l.b16 %v1869
    %v3394 = vunpack.c.h.b16 %v1869
    %v3395 = vunpack.c.l.b16 %v1870
    %v3396 = vunpack.c.h.b16 %v1870
    %v3397 = vunpack.c.l.b16 %v1871
    %v3398 = vunpack.c.h.b16 %v1871
    %v3399 = vunpack.c.l.b16 %v1872
    %v3400 = vunpack.c.h.b16 %v1872
    %v3401 = vunpack.c.l.b16 %v1873
    %v3402 = vunpack.c.h.b16 %v1873
    %v3403 = vunpack.c.l.b16 %v1874
    %v3404 = vunpack.c.h.b16 %v1874
    %v3405 = vunpack.c.l.b16 %v1875
    %v3406 = vunpack.c.h.b16 %v1875
    %v3407 = vunpack.c.l.b16 %v1876
    %v3408 = vunpack.c.h.b16 %v1876
    %v3409 = vunpack.c.l.b16 %v1877
    %v3410 = vunpack.c.h.b16 %v1877
    %v3411 = vunpack.c.l.b16 %v1878
    %v3412 = vunpack.c.h.b16 %v1878
    %v3413 = vunpack.c.l.b16 %v1879
    %v3414 = vunpack.c.h.b16 %v1879
    %v3415 = vunpack.c.l.b16 %v1880
    %v3416 = vunpack.c.h.b16 %v1880
    %v3417 = vpack.c.b16 %v2401, %v2393
    %v3418 = vpack.c.b16 %v2402, %v2394
    %v3419 = vpack.c.b16 %v2403, %v2395
    %v3420 = vpack.c.b16 %v2404, %v2396
    %v3421 = vpack.c.b16 %v2405, %v2397
    %v3422 = vpack.c.b16 %v2406, %v2398
    %v3423 = vpack.c.b16 %v2407, %v2399
    %v3424 = vpack.c.b16 %v2408, %v2400
    %v3425 = vpack.c.b16 %v2417, %v2409
    %v3426 = vpack.c.b16 %v2418, %v2410
    %v3427 = vpack.c.b16 %v2419, %v2411
    %v3428 = vpack.c.b16 %v2420, %v2412
    %v3429 = vpack.c.b16 %v2421, %v2413
    %v3430 = vpack.c.b16 %v2422, %v2414
    %v3431 = vpack.c.b16 %v2423, %v2415
    %v3432 = vpack.c.b16 %v2424, %v2416
    %v3433 = vpack.c.b16 %v2433, %v2425
    %v3434 = vpack.c.b16 %v2434, %v2426
    %v3435 = vpack.c.b16 %v2435, %v2427
    %v3436 = vpack.c.b16 %v2436, %v2428
    %v3437 = vpack.c.b16 %v2437, %v2429
    %v3438 = vpack.c.b16 %v2438, %v2430
    %v3439 = vpack.c.b16 %v2439, %v2431
    %v3440 = vpack.c.b16 %v2440, %v2432
    %v3441 = vpack.c.b16 %v2449, %v2441
    %v3442 = vpack.c.b16 %v2450, %v2442
    %v3443 = vpack.c.b16 %v2451, %v2443
    %v3444 = vpack.c.b16 %v2452, %v2444
    %v3445 = vpack.c.b16 %v2453, %v2445
    %v3446 = vpack.c.b16 %v2454, %v2446
    %v3447 = vpack.c.b16 %v2455, %v2447
    %v3448 = vpack.c.b16 %v2456, %v2448
    %v3449 = vpack.c.b16 %v2465, %v2457
    %v3450 = vpack.c.b16 %v2466, %v2458
    %v3451 = vpack.c.b16 %v2467, %v2459
    %v3452 = vpack.c.b16 %v2468, %v2460
    %v3453 = vpack.c.b16 %v2469, %v2461
    %v3454 = vpack.c.b16 %v2470, %v2462
    %v3455 = vpack.c.b16 %v2471, %v2463
    %v3456 = vpack.c.b16 %v2472, %v2464
    %v3457 = vpack.c.b16 %v2481, %v2473
    %v3458 = vpack.c.b16 %v2482, %v2474
    %v3459 = vpack.c.b16 %v2483, %v2475
    %v3460 = vpack.c.b16 %v2484, %v2476
    %v3461 = vpack.c.b16 %v2485, %v2477
    %v3462 = vpack.c.b16 %v2486, %v2478
    %v3463 = vpack.c.b16 %v2487, %v2479
    %v3464 = vpack.c.b16 %v2488, %v2480
    %v3465 = vpack.c.b16 %v2497, %v2489
    %v3466 = vpack.c.b16 %v2498, %v2490
    %v3467 = vpack.c.b16 %v2499, %v2491
    %v3468 = vpack.c.b16 %v2500, %v2492
    %v3469 = vpack.c.b16 %v2501, %v2493
    %v3470 = vpack.c.b16 %v2502, %v2494
    %v3471 = vpack.c.b16 %v2503, %v2495
    %v3472 = vpack.c.b16 %v2504, %v2496
    %v3473 = vpack.c.b16 %v2513, %v2505
    %v3474 = vpack.c.b16 %v2514, %v2506
    %v3475 = vpack.c.b16 %v2515, %v2507
    %v3476 = vpack.c.b16 %v2516, %v2508
    %v3477 = vpack.c.b16 %v2517, %v2509
    %v3478 = vpack.c.b16 %v2518, %v2510
    %v3479 = vpack.c.b16 %v2519, %v2511
    %v3480 = vpack.c.b16 %v2520, %v2512
    %v3481 = vpack.c.b16 %v2529, %v2521
    %v3482 = vpack.c.b16 %v2530, %v2522
    %v3483 = vpack.c.b16 %v2531, %v2523
    %v3484 = vpack.c.b16 %v2532, %v2524
    %v3485 = vpack.c.b16 %v2533, %v2525
    %v3486 = vpack.c.b16 %v2534, %v2526
    %v3487 = vpack.c.b16 %v2535, %v2527
    %v3488 = vpack.c.b16 %v2536, %v2528
    %v3489 = vpack.c.b16 %v2545, %v2537
    %v3490 = vpack.c.b16 %v2546, %v2538
    %v3491 = vpack.c.b16 %v2547, %v2539
    %v3492 = vpack.c.b16 %v2548, %v2540
    %v3493 = vpack.c.b16 %v2549, %v2541
    %v3494 = vpack.c.b16 %v2550, %v2542
    %v3495 = vpack.c.b16 %v2551, %v2543
    %v3496 = vpack.c.b16 %v2552, %v2544
    %v3497 = vpack.c.b16 %v2561, %v2553
    %v3498 = vpack.c.b16 %v2562, %v2554
    %v3499 = vpack.c.b16 %v2563, %v2555
    %v3500 = vpack.c.b16 %v2564, %v2556
    %v3501 = vpack.c.b16 %v2565, %v2557
    %v3502 = vpack.c.b16 %v2566, %v2558
    %v3503 = vpack.c.b16 %v2567, %v2559
    %v3504 = vpack.c.b16 %v2568, %v2560
    %v3505 = vpack.c.b16 %v2577, %v2569
    %v3506 = vpack.c.b16 %v2578, %v2570
    %v3507 = vpack.c.b16 %v2579, %v2571
    %v3508 = vpack.c.b16 %v2580, %v2572
    %v3509 = vpack.c.b16 %v2581, %v2573
    %v3510 = vpack.c.b16 %v2582, %v2574
    %v3511 = vpack.c.b16 %v2583, %v2575
    %v3512 = vpack.c.b16 %v2584, %v2576
    %v3513 = vpack.c.b16 %v2593, %v2585
    %v3514 = vpack.c.b16 %v2594, %v2586
    %v3515 = vpack.c.b16 %v2595, %v2587
    %v3516 = vpack.c.b16 %v2596, %v2588
    %v3517 = vpack.c.b16 %v2597, %v2589
    %v3518 = vpack.c.b16 %v2598, %v2590
    %v3519 = vpack.c.b16 %v2599, %v2591
    %v3520 = vpack.c.b16 %v2600, %v2592
    %v3521 = vpack.c.b16 %v2609, %v2601
    %v3522 = vpack.c.b16 %v2610, %v2602
    %v3523 = vpack.c.b16 %v2611, %v2603
    %v3524 = vpack.c.b16 %v2612, %v2604
    %v3525 = vpack.c.b16 %v2613, %v2605
    %v3526 = vpack.c.b16 %v2614, %v2606
    %v3527 = vpack.c.b16 %v2615, %v2607
    %v3528 = vpack.c.b16 %v2616, %v2608
    %v3529 = vpack.c.b16 %v2625, %v2617
    %v3530 = vpack.c.b16 %v2626, %v2618
    %v3531 = vpack.c.b16 %v2627, %v2619
    %v3532 = vpack.c.b16 %v2628, %v2620
    %v3533 = vpack.c.b16 %v2629, %v2621
    %v3534 = vpack.c.b16 %v2630, %v2622
    %v3535 = vpack.c.b16 %v2631, %v2623
    %v3536 = vpack.c.b16 %v2632, %v2624
    %v3537 = vpack.c.b16 %v2641, %v2633
    %v3538 = vpack.c.b16 %v2642, %v2634
    %v3539 = vpack.c.b16 %v2643, %v2635
    %v3540 = vpack.c.b16 %v2644, %v2636
    %v3541 = vpack.c.b16 %v2645, %v2637
    %v3542 = vpack.c.b16 %v2646, %v2638
    %v3543 = vpack.c.b16 %v2647, %v2639
    %v3544 = vpack.c.b16 %v2648, %v2640
    %v3545 = vpack.c.b16 %v2657, %v2649
    %v3546 = vpack.c.b16 %v2658, %v2650
    %v3547 = vpack.c.b16 %v2659, %v2651
    %v3548 = vpack.c.b16 %v2660, %v2652
    %v3549 = vpack.c.b16 %v2661, %v2653
    %v3550 = vpack.c.b16 %v2662, %v2654
    %v3551 = vpack.c.b16 %v2663, %v2655
    %v3552 = vpack.c.b16 %v2664, %v2656
    %v3553 = vpack.c.b16 %v2673, %v2665
    %v3554 = vpack.c.b16 %v2674, %v2666
    %v3555 = vpack.c.b16 %v2675, %v2667
    %v3556 = vpack.c.b16 %v2676, %v2668
    %v3557 = vpack.c.b16 %v2677, %v2669
    %v3558 = vpack.c.b16 %v2678, %v2670
    %v3559 = vpack.c.b16 %v2679, %v2671
    %v3560 = vpack.c.b16 %v2680, %v2672
    %v3561 = vpack.c.b16 %v2689, %v2681
    %v3562 = vpack.c.b16 %v2690, %v2682
    %v3563 = vpack.c.b16 %v2691, %v2683
    %v3564 = vpack.c.b16 %v2692, %v2684
    %v3565 = vpack.c.b16 %v2693, %v2685
    %v3566 = vpack.c.b16 %v2694, %v2686
    %v3567 = vpack.c.b16 %v2695, %v2687
    %v3568 = vpack.c.b16 %v2696, %v2688
    %v3569 = vpack.c.b16 %v2705, %v2697
    %v3570 = vpack.c.b16 %v2706, %v2698
    %v3571 = vpack.c.b16 %v2707, %v2699
    %v3572 = vpack.c.b16 %v2708, %v2700
    %v3573 = vpack.c.b16 %v2709, %v2701
    %v3574 = vpack.c.b16 %v2710, %v2702
    %v3575 = vpack.c.b16 %v2711, %v2703
    %v3576 = vpack.c.b16 %v2712, %v2704
    %v3577 = vpack.c.b16 %v2721, %v2713
    %v3578 = vpack.c.b16 %v2722, %v2714
    %v3579 = vpack.c.b16 %v2723, %v2715
    %v3580 = vpack.c.b16 %v2724, %v2716
    %v3581 = vpack.c.b16 %v2725, %v2717
    %v3582 = vpack.c.b16 %v2726, %v2718
    %v3583 = vpack.c.b16 %v2727, %v2719
    %v3584 = vpack.c.b16 %v2728, %v2720
    %v3585 = vpack.c.b16 %v2737, %v2729
    %v3586 = vpack.c.b16 %v2738, %v2730
    %v3587 = vpack.c.b16 %v2739, %v2731
    %v3588 = vpack.c.b16 %v2740, %v2732
    %v3589 = vpack.c.b16 %v2741, %v2733
    %v3590 = vpack.c.b16 %v2742, %v2734
    %v3591 = vpack.c.b16 %v2743, %v2735
    %v3592 = vpack.c.b16 %v2744, %v2736
    %v3593 = vpack.c.b16 %v2753, %v2745
    %v3594 = vpack.c.b16 %v2754, %v2746
    %v3595 = vpack.c.b16 %v2755, %v2747
    %v3596 = vpack.c.b16 %v2756, %v2748
    %v3597 = vpack.c.b16 %v2757, %v2749
    %v3598 = vpack.c.b16 %v2758, %v2750
    %v3599 = vpack.c.b16 %v2759, %v2751
    %v3600 = vpack.c.b16 %v2760, %v2752
    %v3601 = vpack.c.b16 %v2769, %v2761
    %v3602 = vpack.c.b16 %v2770, %v2762
    %v3603 = vpack.c.b16 %v2771, %v2763
    %v3604 = vpack.c.b16 %v2772, %v2764
    %v3605 = vpack.c.b16 %v2773, %v2765
    %v3606 = vpack.c.b16 %v2774, %v2766
    %v3607 = vpack.c.b16 %v2775, %v2767
    %v3608 = vpack.c.b16 %v2776, %v2768
    %v3609 = vpack.c.b16 %v2785, %v2777
    %v3610 = vpack.c.b16 %v2786, %v2778
    %v3611 = vpack.c.b16 %v2787, %v2779
    %v3612 = vpack.c.b16 %v2788, %v2780
    %v3613 = vpack.c.b16 %v2789, %v2781
    %v3614 = vpack.c.b16 %v2790, %v2782
    %v3615 = vpack.c.b16 %v2791, %v2783
    %v3616 = vpack.c.b16 %v2792, %v2784
    %v3617 = vpack.c.b16 %v2801, %v2793
    %v3618 = vpack.c.b16 %v2802, %v2794
    %v3619 = vpack.c.b16 %v2803, %v2795
    %v3620 = vpack.c.b16 %v2804, %v2796
    %v3621 = vpack.c.b16 %v2805, %v2797
    %v3622 = vpack.c.b16 %v2806, %v2798
    %v3623 = vpack.c.b16 %v2807, %v2799
    %v3624 = vpack.c.b16 %v2808, %v2800
    %v3625 = vpack.c.b16 %v2817, %v2809
    %v3626 = vpack.c.b16 %v2818, %v2810
    %v3627 = vpack.c.b16 %v2819, %v2811
    %v3628 = vpack.c.b16 %v2820, %v2812
    %v3629 = vpack.c.b16 %v2821, %v2813
    %v3630 = vpack.c.b16 %v2822, %v2814
    %v3631 = vpack.c.b16 %v2823, %v2815
    %v3632 = vpack.c.b16 %v2824, %v2816
    %v3633 = vpack.c.b16 %v2833, %v2825
    %v3634 = vpack.c.b16 %v2834, %v2826
    %v3635 = vpack.c.b16 %v2835, %v2827
    %v3636 = vpack.c.b16 %v2836, %v2828
    %v3637 = vpack.c.b16 %v2837, %v2829
    %v3638 = vpack.c.b16 %v2838, %v2830
    %v3639 = vpack.c.b16 %v2839, %v2831
    %v3640 = vpack.c.b16 %v2840, %v2832
    %v3641 = vpack.c.b16 %v2849, %v2841
    %v3642 = vpack.c.b16 %v2850, %v2842
    %v3643 = vpack.c.b16 %v2851, %v2843
    %v3644 = vpack.c.b16 %v2852, %v2844
    %v3645 = vpack.c.b16 %v2853, %v2845
    %v3646 = vpack.c.b16 %v2854, %v2846
    %v3647 = vpack.c.b16 %v2855, %v2847
    %v3648 = vpack.c.b16 %v2856, %v2848
    %v3649 = vpack.c.b16 %v2865, %v2857
    %v3650 = vpack.c.b16 %v2866, %v2858
    %v3651 = vpack.c.b16 %v2867, %v2859
    %v3652 = vpack.c.b16 %v2868, %v2860
    %v3653 = vpack.c.b16 %v2869, %v2861
    %v3654 = vpack.c.b16 %v2870, %v2862
    %v3655 = vpack.c.b16 %v2871, %v2863
    %v3656 = vpack.c.b16 %v2872, %v2864
    %v3657 = vpack.c.b16 %v2881, %v2873
    %v3658 = vpack.c.b16 %v2882, %v2874
    %v3659 = vpack.c.b16 %v2883, %v2875
    %v3660 = vpack.c.b16 %v2884, %v2876
    %v3661 = vpack.c.b16 %v2885, %v2877
    %v3662 = vpack.c.b16 %v2886, %v2878
    %v3663 = vpack.c.b16 %v2887, %v2879
    %v3664 = vpack.c.b16 %v2888, %v2880
    %v3665 = vpack.c.b16 %v2897, %v2889
    %v3666 = vpack.c.b16 %v2898, %v2890
    %v3667 = vpack.c.b16 %v2899, %v2891
    %v3668 = vpack.c.b16 %v2900, %v2892
    %v3669 = vpack.c.b16 %v2901, %v2893
    %v3670 = vpack.c.b16 %v2902, %v2894
    %v3671 = vpack.c.b16 %v2903, %v2895
    %v3672 = vpack.c.b16 %v2904, %v2896
    %v3673 = vpack.c.b16 %v2913, %v2905
    %v3674 = vpack.c.b16 %v2914, %v2906
    %v3675 = vpack.c.b16 %v2915, %v2907
    %v3676 = vpack.c.b16 %v2916, %v2908
    %v3677 = vpack.c.b16 %v2917, %v2909
    %v3678 = vpack.c.b16 %v2918, %v2910
    %v3679 = vpack.c.b16 %v2919, %v2911
    %v3680 = vpack.c.b16 %v2920, %v2912
    %v3681 = vpack.c.b16 %v2929, %v2921
    %v3682 = vpack.c.b16 %v2930, %v2922
    %v3683 = vpack.c.b16 %v2931, %v2923
    %v3684 = vpack.c.b16 %v2932, %v2924
    %v3685 = vpack.c.b16 %v2933, %v2925
    %v3686 = vpack.c.b16 %v2934, %v2926
    %v3687 = vpack.c.b16 %v2935, %v2927
    %v3688 = vpack.c.b16 %v2936, %v2928
    %v3689 = vpack.c.b16 %v2945, %v2937
    %v3690 = vpack.c.b16 %v2946, %v2938
    %v3691 = vpack.c.b16 %v2947, %v2939
    %v3692 = vpack.c.b16 %v2948, %v2940
    %v3693 = vpack.c.b16 %v2949, %v2941
    %v3694 = vpack.c.b16 %v2950, %v2942
    %v3695 = vpack.c.b16 %v2951, %v2943
    %v3696 = vpack.c.b16 %v2952, %v2944
    %v3697 = vpack.c.b16 %v2961, %v2953
    %v3698 = vpack.c.b16 %v2962, %v2954
    %v3699 = vpack.c.b16 %v2963, %v2955
    %v3700 = vpack.c.b16 %v2964, %v2956
    %v3701 = vpack.c.b16 %v2965, %v2957
    %v3702 = vpack.c.b16 %v2966, %v2958
    %v3703 = vpack.c.b16 %v2967, %v2959
    %v3704 = vpack.c.b16 %v2968, %v2960
    %v3705 = vpack.c.b16 %v2977, %v2969
    %v3706 = vpack.c.b16 %v2978, %v2970
    %v3707 = vpack.c.b16 %v2979, %v2971
    %v3708 = vpack.c.b16 %v2980, %v2972
    %v3709 = vpack.c.b16 %v2981, %v2973
    %v3710 = vpack.c.b16 %v2982, %v2974
    %v3711 = vpack.c.b16 %v2983, %v2975
    %v3712 = vpack.c.b16 %v2984, %v2976
    %v3713 = vpack.c.b16 %v2993, %v2985
    %v3714 = vpack.c.b16 %v2994, %v2986
    %v3715 = vpack.c.b16 %v2995, %v2987
    %v3716 = vpack.c.b16 %v2996, %v2988
    %v3717 = vpack.c.b16 %v2997, %v2989
    %v3718 = vpack.c.b16 %v2998, %v2990
    %v3719 = vpack.c.b16 %v2999, %v2991
    %v3720 = vpack.c.b16 %v3000, %v2992
    %v3721 = vpack.c.b16 %v3009, %v3001
    %v3722 = vpack.c.b16 %v3010, %v3002
    %v3723 = vpack.c.b16 %v3011, %v3003
    %v3724 = vpack.c.b16 %v3012, %v3004
    %v3725 = vpack.c.b16 %v3013, %v3005
    %v3726 = vpack.c.b16 %v3014, %v3006
    %v3727 = vpack.c.b16 %v3015, %v3007
    %v3728 = vpack.c.b16 %v3016, %v3008
    %v3729 = vpack.c.b16 %v3025, %v3017
    %v3730 = vpack.c.b16 %v3026, %v3018
    %v3731 = vpack.c.b16 %v3027, %v3019
    %v3732 = vpack.c.b16 %v3028, %v3020
    %v3733 = vpack.c.b16 %v3029, %v3021
    %v3734 = vpack.c.b16 %v3030, %v3022
    %v3735 = vpack.c.b16 %v3031, %v3023
    %v3736 = vpack.c.b16 %v3032, %v3024
    %v3737 = vpack.c.b16 %v3041, %v3033
    %v3738 = vpack.c.b16 %v3042, %v3034
    %v3739 = vpack.c.b16 %v3043, %v3035
    %v3740 = vpack.c.b16 %v3044, %v3036
    %v3741 = vpack.c.b16 %v3045, %v3037
    %v3742 = vpack.c.b16 %v3046, %v3038
    %v3743 = vpack.c.b16 %v3047, %v3039
    %v3744 = vpack.c.b16 %v3048, %v3040
    %v3745 = vpack.c.b16 %v3057, %v3049
    %v3746 = vpack.c.b16 %v3058, %v3050
    %v3747 = vpack.c.b16 %v3059, %v3051
    %v3748 = vpack.c.b16 %v3060, %v3052
    %v3749 = vpack.c.b16 %v3061, %v3053
    %v3750 = vpack.c.b16 %v3062, %v3054
    %v3751 = vpack.c.b16 %v3063, %v3055
    %v3752 = vpack.c.b16 %v3064, %v3056
    %v3753 = vpack.c.b16 %v3073, %v3065
    %v3754 = vpack.c.b16 %v3074, %v3066
    %v3755 = vpack.c.b16 %v3075, %v3067
    %v3756 = vpack.c.b16 %v3076, %v3068
    %v3757 = vpack.c.b16 %v3077, %v3069
    %v3758 = vpack.c.b16 %v3078, %v3070
    %v3759 = vpack.c.b16 %v3079, %v3071
    %v3760 = vpack.c.b16 %v3080, %v3072
    %v3761 = vpack.c.b16 %v3089, %v3081
    %v3762 = vpack.c.b16 %v3090, %v3082
    %v3763 = vpack.c.b16 %v3091, %v3083
    %v3764 = vpack.c.b16 %v3092, %v3084
    %v3765 = vpack.c.b16 %v3093, %v3085
    %v3766 = vpack.c.b16 %v3094, %v3086
    %v3767 = vpack.c.b16 %v3095, %v3087
    %v3768 = vpack.c.b16 %v3096, %v3088
    %v3769 = vpack.c.b16 %v3105, %v3097
    %v3770 = vpack.c.b16 %v3106, %v3098
    %v3771 = vpack.c.b16 %v3107, %v3099
    %v3772 = vpack.c.b16 %v3108, %v3100
    %v3773 = vpack.c.b16 %v3109, %v3101
    %v3774 = vpack.c.b16 %v3110, %v3102
    %v3775 = vpack.c.b16 %v3111, %v3103
    %v3776 = vpack.c.b16 %v3112, %v3104
    %v3777 = vpack.c.b16 %v3121, %v3113
    %v3778 = vpack.c.b16 %v3122, %v3114
    %v3779 = vpack.c.b16 %v3123, %v3115
    %v3780 = vpack.c.b16 %v3124, %v3116
    %v3781 = vpack.c.b16 %v3125, %v3117
    %v3782 = vpack.c.b16 %v3126, %v3118
    %v3783 = vpack.c.b16 %v3127, %v3119
    %v3784 = vpack.c.b16 %v3128, %v3120
    %v3785 = vpack.c.b16 %v3137, %v3129
    %v3786 = vpack.c.b16 %v3138, %v3130
    %v3787 = vpack.c.b16 %v3139, %v3131
    %v3788 = vpack.c.b16 %v3140, %v3132
    %v3789 = vpack.c.b16 %v3141, %v3133
    %v3790 = vpack.c.b16 %v3142, %v3134
    %v3791 = vpack.c.b16 %v3143, %v3135
    %v3792 = vpack.c.b16 %v3144, %v3136
    %v3793 = vpack.c.b16 %v3153, %v3145
    %v3794 = vpack.c.b16 %v3154, %v3146
    %v3795 = vpack.c.b16 %v3155, %v3147
    %v3796 = vpack.c.b16 %v3156, %v3148
    %v3797 = vpack.c.b16 %v3157, %v3149
    %v3798 = vpack.c.b16 %v3158, %v3150
    %v3799 = vpack.c.b16 %v3159, %v3151
    %v3800 = vpack.c.b16 %v3160, %v3152
    %v3801 = vpack.c.b16 %v3169, %v3161
    %v3802 = vpack.c.b16 %v3170, %v3162
    %v3803 = vpack.c.b16 %v3171, %v3163
    %v3804 = vpack.c.b16 %v3172, %v3164
    %v3805 = vpack.c.b16 %v3173, %v3165
    %v3806 = vpack.c.b16 %v3174, %v3166
    %v3807 = vpack.c.b16 %v3175, %v3167
    %v3808 = vpack.c.b16 %v3176, %v3168
    %v3809 = vpack.c.b16 %v3185, %v3177
    %v3810 = vpack.c.b16 %v3186, %v3178
    %v3811 = vpack.c.b16 %v3187, %v3179
    %v3812 = vpack.c.b16 %v3188, %v3180
    %v3813 = vpack.c.b16 %v3189, %v3181
    %v3814 = vpack.c.b16 %v3190, %v3182
    %v3815 = vpack.c.b16 %v3191, %v3183
    %v3816 = vpack.c.b16 %v3192, %v3184
    %v3817 = vpack.c.b16 %v3201, %v3193
    %v3818 = vpack.c.b16 %v3202, %v3194
    %v3819 = vpack.c.b16 %v3203, %v3195
    %v3820 = vpack.c.b16 %v3204, %v3196
    %v3821 = vpack.c.b16 %v3205, %v3197
    %v3822 = vpack.c.b16 %v3206, %v3198
    %v3823 = vpack.c.b16 %v3207, %v3199
    %v3824 = vpack.c.b16 %v3208, %v3200
    %v3825 = vpack.c.b16 %v3217, %v3209
    %v3826 = vpack.c.b16 %v3218, %v3210
    %v3827 = vpack.c.b16 %v3219, %v3211
    %v3828 = vpack.c.b16 %v3220, %v3212
    %v3829 = vpack.c.b16 %v3221, %v3213
    %v3830 = vpack.c.b16 %v3222, %v3214
    %v3831 = vpack.c.b16 %v3223, %v3215
    %v3832 = vpack.c.b16 %v3224, %v3216
    %v3833 = vpack.c.b16 %v3233, %v3225
    %v3834 = vpack.c.b16 %v3234, %v3226
    %v3835 = vpack.c.b16 %v3235, %v3227
    %v3836 = vpack.c.b16 %v3236, %v3228
    %v3837 = vpack.c.b16 %v3237, %v3229
    %v3838 = vpack.c.b16 %v3238, %v3230
    %v3839 = vpack.c.b16 %v3239, %v3231
    %v3840 = vpack.c.b16 %v3240, %v3232
    %v3841 = vpack.c.b16 %v3249, %v3241
    %v3842 = vpack.c.b16 %v3250, %v3242
    %v3843 = vpack.c.b16 %v3251, %v3243
    %v3844 = vpack.c.b16 %v3252, %v3244
    %v3845 = vpack.c.b16 %v3253, %v3245
    %v3846 = vpack.c.b16 %v3254, %v3246
    %v3847 = vpack.c.b16 %v3255, %v3247
    %v3848 = vpack.c.b16 %v3256, %v3248
    %v3849 = vpack.c.b16 %v3265, %v3257
    %v3850 = vpack.c.b16 %v3266, %v3258
    %v3851 = vpack.c.b16 %v3267, %v3259
    %v3852 = vpack.c.b16 %v3268, %v3260
    %v3853 = vpack.c.b16 %v3269, %v3261
    %v3854 = vpack.c.b16 %v3270, %v3262
    %v3855 = vpack.c.b16 %v3271, %v3263
    %v3856 = vpack.c.b16 %v3272, %v3264
    %v3857 = vpack.c.b16 %v3281, %v3273
    %v3858 = vpack.c.b16 %v3282, %v3274
    %v3859 = vpack.c.b16 %v3283, %v3275
    %v3860 = vpack.c.b16 %v3284, %v3276
    %v3861 = vpack.c.b16 %v3285, %v3277
    %v3862 = vpack.c.b16 %v3286, %v3278
    %v3863 = vpack.c.b16 %v3287, %v3279
    %v3864 = vpack.c.b16 %v3288, %v3280
    %v3865 = vpack.c.b16 %v3297, %v3289
    %v3866 = vpack.c.b16 %v3298, %v3290
    %v3867 = vpack.c.b16 %v3299, %v3291
    %v3868 = vpack.c.b16 %v3300, %v3292
    %v3869 = vpack.c.b16 %v3301, %v3293
    %v3870 = vpack.c.b16 %v3302, %v3294
    %v3871 = vpack.c.b16 %v3303, %v3295
    %v3872 = vpack.c.b16 %v3304, %v3296
    %v3873 = vpack.c.b16 %v3313, %v3305
    %v3874 = vpack.c.b16 %v3314, %v3306
    %v3875 = vpack.c.b16 %v3315, %v3307
    %v3876 = vpack.c.b16 %v3316, %v3308
    %v3877 = vpack.c.b16 %v3317, %v3309
    %v3878 = vpack.c.b16 %v3318, %v3310
    %v3879 = vpack.c.b16 %v3319, %v3311
    %v3880 = vpack.c.b16 %v3320, %v3312
    %v3881 = vpack.c.b16 %v3329, %v3321
    %v3882 = vpack.c.b16 %v3330, %v3322
    %v3883 = vpack.c.b16 %v3331, %v3323
    %v3884 = vpack.c.b16 %v3332, %v3324
    %v3885 = vpack.c.b16 %v3333, %v3325
    %v3886 = vpack.c.b16 %v3334, %v3326
    %v3887 = vpack.c.b16 %v3335, %v3327
    %v3888 = vpack.c.b16 %v3336, %v3328
    %v3889 = vpack.c.b16 %v3345, %v3337
    %v3890 = vpack.c.b16 %v3346, %v3338
    %v3891 = vpack.c.b16 %v3347, %v3339
    %v3892 = vpack.c.b16 %v3348, %v3340
    %v3893 = vpack.c.b16 %v3349, %v3341
    %v3894 = vpack.c.b16 %v3350, %v3342
    %v3895 = vpack.c.b16 %v3351, %v3343
    %v3896 = vpack.c.b16 %v3352, %v3344
    %v3897 = vpack.c.b16 %v3361, %v3353
    %v3898 = vpack.c.b16 %v3362, %v3354
    %v3899 = vpack.c.b16 %v3363, %v3355
    %v3900 = vpack.c.b16 %v3364, %v3356
    %v3901 = vpack.c.b16 %v3365, %v3357
    %v3902 = vpack.c.b16 %v3366, %v3358
    %v3903 = vpack.c.b16 %v3367, %v3359
    %v3904 = vpack.c.b16 %v3368, %v3360
    %v3905 = vpack.c.b16 %v3377, %v3369
    %v3906 = vpack.c.b16 %v3378, %v3370
    %v3907 = vpack.c.b16 %v3379, %v3371
    %v3908 = vpack.c.b16 %v3380, %v3372
    %v3909 = vpack.c.b16 %v3381, %v3373
    %v3910 = vpack.c.b16 %v3382, %v3374
    %v3911 = vpack.c.b16 %v3383, %v3375
    %v3912 = vpack.c.b16 %v3384, %v3376
    %v3913 = vpack.c.b16 %v3393, %v3385
    %v3914 = vpack.c.b16 %v3394, %v3386
    %v3915 = vpack.c.b16 %v3395, %v3387
    %v3916 = vpack.c.b16 %v3396, %v3388
    %v3917 = vpack.c.b16 %v3397, %v3389
    %v3918 = vpack.c.b16 %v3398, %v3390
    %v3919 = vpack.c.b16 %v3399, %v3391
    %v3920 = vpack.c.b16 %v3400, %v3392
    %v3921 = vpack.c.b16 %v3409, %v3401
    %v3922 = vpack.c.b16 %v3410, %v3402
    %v3923 = vpack.c.b16 %v3411, %v3403
    %v3924 = vpack.c.b16 %v3412, %v3404
    %v3925 = vpack.c.b16 %v3413, %v3405
    %v3926 = vpack.c.b16 %v3414, %v3406
    %v3927 = vpack.c.b16 %v3415, %v3407
    %v3928 = vpack.c.b16 %v3416, %v3408
    %4441 = vmatprep.subr.bf16.mxu0 %v3474
    %4442 = vmatpush1.bf16.msra.mxu0 %v3473
    %4443 = vmatprep.subr.bf16.mxu0 %v3466
    %4444 = vmatpush1.bf16.msra.mxu0 %v3465
    %4445 = vmatprep.subr.bf16.mxu0 %v3458
    %4446 = vmatpush1.bf16.msra.mxu0 %v3457
    %4447 = vmatprep.subr.bf16.mxu0 %v3450
    %4448 = vmatpush1.bf16.msra.mxu0 %v3449
    %4449 = vmatprep.subr.bf16.mxu0 %v3442
    %4450 = vmatpush1.bf16.msra.mxu0 %v3441
    %4451 = vmatprep.subr.bf16.mxu0 %v3434
    %4452 = vmatpush1.bf16.msra.mxu0 %v3433
    %4453 = vmatprep.subr.bf16.mxu0 %v3426
    %4454 = vmatpush1.bf16.msra.mxu0 %v3425
    %4455 = vmatprep.subr.bf16.mxu0 %v3418
    %4456 = vmatpush1.bf16.msra.mxu0 %v3417
    %4457 = vmatprep.subr.bf16.mxu0 %v3538
    %4458 = vmatpush2.bf16.msra.mxu0 %v3537
    %4459 = vmatprep.subr.bf16.mxu0 %v3530
    %4460 = vmatpush2.bf16.msra.mxu0 %v3529
    %4461 = vmatprep.subr.bf16.mxu0 %v3522
    %4462 = vmatpush2.bf16.msra.mxu0 %v3521
    %4463 = vmatprep.subr.bf16.mxu0 %v3514
    %4464 = vmatpush2.bf16.msra.mxu0 %v3513
    %4465 = vmatprep.subr.bf16.mxu0 %v3506
    %4466 = vmatpush2.bf16.msra.mxu0 %v3505
    %4467 = vmatprep.subr.bf16.mxu0 %v3498
    %4468 = vmatpush2.bf16.msra.mxu0 %v3497
    %4469 = vmatprep.subr.bf16.mxu0 %v3490
    %4470 = vmatpush2.bf16.msra.mxu0 %v3489
    %4471 = vmatprep.subr.bf16.mxu0 %v3482
    %4472 = vmatpush2.bf16.msra.mxu0 %v3481
    %4473 = vmatprep.mubr.bf16.mxu0 %v1362
    %4474 = vmatmul.mubr.bf16.gmra.mxu0 %v1361
    %v4475 = vpop.f32.mrf.mxu0
    %v4476 = vadd.f32 0.0, %v4475
    %v4477 = vpop.f32.mrf.mxu0
    %v4478 = vadd.f32 0.0, %v4477
    %v4479 = vpop.f32.mrf.mxu0
    %v4480 = vpop.f32.mrf.mxu0
    %4481 = vdwg.mxu0
    %4482 = vmatprep.subr.bf16.mxu0 %v3602
    %4483 = vmatpush1.bf16.msra.mxu0 %v3601
    %4484 = vmatprep.subr.bf16.mxu0 %v3594
    %4485 = vmatpush1.bf16.msra.mxu0 %v3593
    %4486 = vmatprep.subr.bf16.mxu0 %v3586
    %4487 = vmatpush1.bf16.msra.mxu0 %v3585
    %4488 = vmatprep.subr.bf16.mxu0 %v3578
    %4489 = vmatpush1.bf16.msra.mxu0 %v3577
    %4490 = vmatprep.subr.bf16.mxu0 %v3570
    %4491 = vmatpush1.bf16.msra.mxu0 %v3569
    %4492 = vmatprep.subr.bf16.mxu0 %v3562
    %4493 = vmatpush1.bf16.msra.mxu0 %v3561
    %4494 = vmatprep.subr.bf16.mxu0 %v3554
    %4495 = vmatpush1.bf16.msra.mxu0 %v3553
    %4496 = vmatprep.subr.bf16.mxu0 %v3546
    %4497 = vmatpush1.bf16.msra.mxu0 %v3545
    %4498 = vmatprep.subr.bf16.mxu0 %v3666
    %4499 = vmatpush2.bf16.msra.mxu0 %v3665
    %4500 = vmatprep.subr.bf16.mxu0 %v3658
    %4501 = vmatpush2.bf16.msra.mxu0 %v3657
    %4502 = vmatprep.subr.bf16.mxu0 %v3650
    %4503 = vmatpush2.bf16.msra.mxu0 %v3649
    %4504 = vmatprep.subr.bf16.mxu0 %v3642
    %4505 = vmatpush2.bf16.msra.mxu0 %v3641
    %4506 = vmatprep.subr.bf16.mxu0 %v3634
    %4507 = vmatpush2.bf16.msra.mxu0 %v3633
    %4508 = vmatprep.subr.bf16.mxu0 %v3626
    %4509 = vmatpush2.bf16.msra.mxu0 %v3625
    %4510 = vmatprep.subr.bf16.mxu0 %v3618
    %4511 = vmatpush2.bf16.msra.mxu0 %v3617
    %4512 = vmatprep.subr.bf16.mxu0 %v3610
    %4513 = vmatpush2.bf16.msra.mxu0 %v3609
    %4514 = vmatprep.mubr.bf16.mxu0 %v1364
    %4515 = vmatmul.mubr.bf16.gmra.mxu0 %v1363
    %v4516 = vpop.f32.mrf.mxu0
    %v4517 = vadd.f32 %v4476, %v4516
    %v4518 = vpop.f32.mrf.mxu0
    %v4519 = vadd.f32 %v4478, %v4518
    %v4520 = vpop.f32.mrf.mxu0
    %v4521 = vpop.f32.mrf.mxu0
    %4522 = vdwg.mxu0
    %4523 = vmatprep.subr.bf16.mxu0 %v3730
    %4524 = vmatpush1.bf16.msra.mxu0 %v3729
    %4525 = vmatprep.subr.bf16.mxu0 %v3722
    %4526 = vmatpush1.bf16.msra.mxu0 %v3721
    %4527 = vmatprep.subr.bf16.mxu0 %v3714
    %4528 = vmatpush1.bf16.msra.mxu0 %v3713
    %4529 = vmatprep.subr.bf16.mxu0 %v3706
    %4530 = vmatpush1.bf16.msra.mxu0 %v3705
    %4531 = vmatprep.subr.bf16.mxu0 %v3698
    %4532 = vmatpush1.bf16.msra.mxu0 %v3697
    %4533 = vmatprep.subr.bf16.mxu0 %v3690
    %4534 = vmatpush1.bf16.msra.mxu0 %v3689
    %4535 = vmatprep.subr.bf16.mxu0 %v3682
    %4536 = vmatpush1.bf16.msra.mxu0 %v3681
    %4537 = vmatprep.subr.bf16.mxu0 %v3674
    %4538 = vmatpush1.bf16.msra.mxu0 %v3673
    %4539 = vmatprep.subr.bf16.mxu0 %v3794
    %4540 = vmatpush2.bf16.msra.mxu0 %v3793
    %4541 = vmatprep.subr.bf16.mxu0 %v3786
    %4542 = vmatpush2.bf16.msra.mxu0 %v3785
    %4543 = vmatprep.subr.bf16.mxu0 %v3778
    %4544 = vmatpush2.bf16.msra.mxu0 %v3777
    %4545 = vmatprep.subr.bf16.mxu0 %v3770
    %4546 = vmatpush2.bf16.msra.mxu0 %v3769
    %4547 = vmatprep.subr.bf16.mxu0 %v3762
    %4548 = vmatpush2.bf16.msra.mxu0 %v3761
    %4549 = vmatprep.subr.bf16.mxu0 %v3754
    %4550 = vmatpush2.bf16.msra.mxu0 %v3753
    %4551 = vmatprep.subr.bf16.mxu0 %v3746
    %4552 = vmatpush2.bf16.msra.mxu0 %v3745
    %4553 = vmatprep.subr.bf16.mxu0 %v3738
    %4554 = vmatpush2.bf16.msra.mxu0 %v3737
    %4555 = vmatprep.mubr.bf16.mxu0 %v1366
    %4556 = vmatmul.mubr.bf16.gmra.mxu0 %v1365
    %v4557 = vpop.f32.mrf.mxu0
    %v4558 = vadd.f32 %v4517, %v4557
    %v4559 = vpop.f32.mrf.mxu0
    %v4560 = vadd.f32 %v4519, %v4559
    %v4561 = vpop.f32.mrf.mxu0
    %v4562 = vpop.f32.mrf.mxu0
    %4563 = vdwg.mxu0
    %4564 = vmatprep.subr.bf16.mxu0 %v3858
    %4565 = vmatpush1.bf16.msra.mxu0 %v3857
    %4566 = vmatprep.subr.bf16.mxu0 %v3850
    %4567 = vmatpush1.bf16.msra.mxu0 %v3849
    %4568 = vmatprep.subr.bf16.mxu0 %v3842
    %4569 = vmatpush1.bf16.msra.mxu0 %v3841
    %4570 = vmatprep.subr.bf16.mxu0 %v3834
    %4571 = vmatpush1.bf16.msra.mxu0 %v3833
    %4572 = vmatprep.subr.bf16.mxu0 %v3826
    %4573 = vmatpush1.bf16.msra.mxu0 %v3825
    %4574 = vmatprep.subr.bf16.mxu0 %v3818
    %4575 = vmatpush1.bf16.msra.mxu0 %v3817
    %4576 = vmatprep.subr.bf16.mxu0 %v3810
    %4577 = vmatpush1.bf16.msra.mxu0 %v3809
    %4578 = vmatprep.subr.bf16.mxu0 %v3802
    %4579 = vmatpush1.bf16.msra.mxu0 %v3801
    %4580 = vmatprep.subr.bf16.mxu0 %v3922
    %4581 = vmatpush2.bf16.msra.mxu0 %v3921
    %4582 = vmatprep.subr.bf16.mxu0 %v3914
    %4583 = vmatpush2.bf16.msra.mxu0 %v3913
    %4584 = vmatprep.subr.bf16.mxu0 %v3906
    %4585 = vmatpush2.bf16.msra.mxu0 %v3905
    %4586 = vmatprep.subr.bf16.mxu0 %v3898
    %4587 = vmatpush2.bf16.msra.mxu0 %v3897
    %4588 = vmatprep.subr.bf16.mxu0 %v3890
    %4589 = vmatpush2.bf16.msra.mxu0 %v3889
    %4590 = vmatprep.subr.bf16.mxu0 %v3882
    %4591 = vmatpush2.bf16.msra.mxu0 %v3881
    %4592 = vmatprep.subr.bf16.mxu0 %v3874
    %4593 = vmatpush2.bf16.msra.mxu0 %v3873
    %4594 = vmatprep.subr.bf16.mxu0 %v3866
    %4595 = vmatpush2.bf16.msra.mxu0 %v3865
    %4596 = vmatprep.mubr.bf16.mxu0 %v1368
    %4597 = vmatmul.mubr.bf16.gmra.mxu0 %v1367
    %v4598 = vpop.f32.mrf.mxu0
    %v4599 = vadd.f32 %v4558, %v4598
    %v4600 = vpop.f32.mrf.mxu0
    %v4601 = vadd.f32 %v4560, %v4600
    %v4602 = vpop.f32.mrf.mxu0
    %v4603 = vpop.f32.mrf.mxu0
    %4604 = vdwg.mxu0
    %4605 = vmatprep.subr.bf16.mxu0 %v3476
    %4606 = vmatpush1.bf16.msra.mxu0 %v3475
    %4607 = vmatprep.subr.bf16.mxu0 %v3468
    %4608 = vmatpush1.bf16.msra.mxu0 %v3467
    %4609 = vmatprep.subr.bf16.mxu0 %v3460
    %4610 = vmatpush1.bf16.msra.mxu0 %v3459
    %4611 = vmatprep.subr.bf16.mxu0 %v3452
    %4612 = vmatpush1.bf16.msra.mxu0 %v3451
    %4613 = vmatprep.subr.bf16.mxu0 %v3444
    %4614 = vmatpush1.bf16.msra.mxu0 %v3443
    %4615 = vmatprep.subr.bf16.mxu0 %v3436
    %4616 = vmatpush1.bf16.msra.mxu0 %v3435
    %4617 = vmatprep.subr.bf16.mxu0 %v3428
    %4618 = vmatpush1.bf16.msra.mxu0 %v3427
    %4619 = vmatprep.subr.bf16.mxu0 %v3420
    %4620 = vmatpush1.bf16.msra.mxu0 %v3419
    %4621 = vmatprep.subr.bf16.mxu0 %v3540
    %4622 = vmatpush2.bf16.msra.mxu0 %v3539
    %4623 = vmatprep.subr.bf16.mxu0 %v3532
    %4624 = vmatpush2.bf16.msra.mxu0 %v3531
    %4625 = vmatprep.subr.bf16.mxu0 %v3524
    %4626 = vmatpush2.bf16.msra.mxu0 %v3523
    %4627 = vmatprep.subr.bf16.mxu0 %v3516
    %4628 = vmatpush2.bf16.msra.mxu0 %v3515
    %4629 = vmatprep.subr.bf16.mxu0 %v3508
    %4630 = vmatpush2.bf16.msra.mxu0 %v3507
    %4631 = vmatprep.subr.bf16.mxu0 %v3500
    %4632 = vmatpush2.bf16.msra.mxu0 %v3499
    %4633 = vmatprep.subr.bf16.mxu0 %v3492
    %4634 = vmatpush2.bf16.msra.mxu0 %v3491
    %4635 = vmatprep.subr.bf16.mxu0 %v3484
    %4636 = vmatpush2.bf16.msra.mxu0 %v3483
    %4637 = vmatprep.mubr.bf16.mxu0 %v1362
    %4638 = vmatmul.mubr.bf16.gmra.mxu0 %v1361
    %v4639 = vpop.f32.mrf.mxu0
    %v4640 = vadd.f32 0.0, %v4639
    %v4641 = vpop.f32.mrf.mxu0
    %v4642 = vadd.f32 0.0, %v4641
    %v4643 = vpop.f32.mrf.mxu0
    %v4644 = vpop.f32.mrf.mxu0
    %4645 = vdwg.mxu0
    %4646 = vmatprep.subr.bf16.mxu0 %v3604
    %4647 = vmatpush1.bf16.msra.mxu0 %v3603
    %4648 = vmatprep.subr.bf16.mxu0 %v3596
    %4649 = vmatpush1.bf16.msra.mxu0 %v3595
    %4650 = vmatprep.subr.bf16.mxu0 %v3588
    %4651 = vmatpush1.bf16.msra.mxu0 %v3587
    %4652 = vmatprep.subr.bf16.mxu0 %v3580
    %4653 = vmatpush1.bf16.msra.mxu0 %v3579
    %4654 = vmatprep.subr.bf16.mxu0 %v3572
    %4655 = vmatpush1.bf16.msra.mxu0 %v3571
    %4656 = vmatprep.subr.bf16.mxu0 %v3564
    %4657 = vmatpush1.bf16.msra.mxu0 %v3563
    %4658 = vmatprep.subr.bf16.mxu0 %v3556
    %4659 = vmatpush1.bf16.msra.mxu0 %v3555
    %4660 = vmatprep.subr.bf16.mxu0 %v3548
    %4661 = vmatpush1.bf16.msra.mxu0 %v3547
    %4662 = vmatprep.subr.bf16.mxu0 %v3668
    %4663 = vmatpush2.bf16.msra.mxu0 %v3667
    %4664 = vmatprep.subr.bf16.mxu0 %v3660
    %4665 = vmatpush2.bf16.msra.mxu0 %v3659
    %4666 = vmatprep.subr.bf16.mxu0 %v3652
    %4667 = vmatpush2.bf16.msra.mxu0 %v3651
    %4668 = vmatprep.subr.bf16.mxu0 %v3644
    %4669 = vmatpush2.bf16.msra.mxu0 %v3643
    %4670 = vmatprep.subr.bf16.mxu0 %v3636
    %4671 = vmatpush2.bf16.msra.mxu0 %v3635
    %4672 = vmatprep.subr.bf16.mxu0 %v3628
    %4673 = vmatpush2.bf16.msra.mxu0 %v3627
    %4674 = vmatprep.subr.bf16.mxu0 %v3620
    %4675 = vmatpush2.bf16.msra.mxu0 %v3619
    %4676 = vmatprep.subr.bf16.mxu0 %v3612
    %4677 = vmatpush2.bf16.msra.mxu0 %v3611
    %4678 = vmatprep.mubr.bf16.mxu0 %v1364
    %4679 = vmatmul.mubr.bf16.gmra.mxu0 %v1363
    %v4680 = vpop.f32.mrf.mxu0
    %v4681 = vadd.f32 %v4640, %v4680
    %v4682 = vpop.f32.mrf.mxu0
    %v4683 = vadd.f32 %v4642, %v4682
    %v4684 = vpop.f32.mrf.mxu0
    %v4685 = vpop.f32.mrf.mxu0
    %4686 = vdwg.mxu0
    %4687 = vmatprep.subr.bf16.mxu0 %v3732
    %4688 = vmatpush1.bf16.msra.mxu0 %v3731
    %4689 = vmatprep.subr.bf16.mxu0 %v3724
    %4690 = vmatpush1.bf16.msra.mxu0 %v3723
    %4691 = vmatprep.subr.bf16.mxu0 %v3716
    %4692 = vmatpush1.bf16.msra.mxu0 %v3715
    %4693 = vmatprep.subr.bf16.mxu0 %v3708
    %4694 = vmatpush1.bf16.msra.mxu0 %v3707
    %4695 = vmatprep.subr.bf16.mxu0 %v3700
    %4696 = vmatpush1.bf16.msra.mxu0 %v3699
    %4697 = vmatprep.subr.bf16.mxu0 %v3692
    %4698 = vmatpush1.bf16.msra.mxu0 %v3691
    %4699 = vmatprep.subr.bf16.mxu0 %v3684
    %4700 = vmatpush1.bf16.msra.mxu0 %v3683
    %4701 = vmatprep.subr.bf16.mxu0 %v3676
    %4702 = vmatpush1.bf16.msra.mxu0 %v3675
    %4703 = vmatprep.subr.bf16.mxu0 %v3796
    %4704 = vmatpush2.bf16.msra.mxu0 %v3795
    %4705 = vmatprep.subr.bf16.mxu0 %v3788
    %4706 = vmatpush2.bf16.msra.mxu0 %v3787
    %4707 = vmatprep.subr.bf16.mxu0 %v3780
    %4708 = vmatpush2.bf16.msra.mxu0 %v3779
    %4709 = vmatprep.subr.bf16.mxu0 %v3772
    %4710 = vmatpush2.bf16.msra.mxu0 %v3771
    %4711 = vmatprep.subr.bf16.mxu0 %v3764
    %4712 = vmatpush2.bf16.msra.mxu0 %v3763
    %4713 = vmatprep.subr.bf16.mxu0 %v3756
    %4714 = vmatpush2.bf16.msra.mxu0 %v3755
    %4715 = vmatprep.subr.bf16.mxu0 %v3748
    %4716 = vmatpush2.bf16.msra.mxu0 %v3747
    %4717 = vmatprep.subr.bf16.mxu0 %v3740
    %4718 = vmatpush2.bf16.msra.mxu0 %v3739
    %4719 = vmatprep.mubr.bf16.mxu0 %v1366
    %4720 = vmatmul.mubr.bf16.gmra.mxu0 %v1365
    %v4721 = vpop.f32.mrf.mxu0
    %v4722 = vadd.f32 %v4681, %v4721
    %v4723 = vpop.f32.mrf.mxu0
    %v4724 = vadd.f32 %v4683, %v4723
    %v4725 = vpop.f32.mrf.mxu0
    %v4726 = vpop.f32.mrf.mxu0
    %4727 = vdwg.mxu0
    %4728 = vmatprep.subr.bf16.mxu0 %v3860
    %4729 = vmatpush1.bf16.msra.mxu0 %v3859
    %4730 = vmatprep.subr.bf16.mxu0 %v3852
    %4731 = vmatpush1.bf16.msra.mxu0 %v3851
    %4732 = vmatprep.subr.bf16.mxu0 %v3844
    %4733 = vmatpush1.bf16.msra.mxu0 %v3843
    %4734 = vmatprep.subr.bf16.mxu0 %v3836
    %4735 = vmatpush1.bf16.msra.mxu0 %v3835
    %4736 = vmatprep.subr.bf16.mxu0 %v3828
    %4737 = vmatpush1.bf16.msra.mxu0 %v3827
    %4738 = vmatprep.subr.bf16.mxu0 %v3820
    %4739 = vmatpush1.bf16.msra.mxu0 %v3819
    %4740 = vmatprep.subr.bf16.mxu0 %v3812
    %4741 = vmatpush1.bf16.msra.mxu0 %v3811
    %4742 = vmatprep.subr.bf16.mxu0 %v3804
    %4743 = vmatpush1.bf16.msra.mxu0 %v3803
    %4744 = vmatprep.subr.bf16.mxu0 %v3924
    %4745 = vmatpush2.bf16.msra.mxu0 %v3923
    %4746 = vmatprep.subr.bf16.mxu0 %v3916
    %4747 = vmatpush2.bf16.msra.mxu0 %v3915
    %4748 = vmatprep.subr.bf16.mxu0 %v3908
    %4749 = vmatpush2.bf16.msra.mxu0 %v3907
    %4750 = vmatprep.subr.bf16.mxu0 %v3900
    %4751 = vmatpush2.bf16.msra.mxu0 %v3899
    %4752 = vmatprep.subr.bf16.mxu0 %v3892
    %4753 = vmatpush2.bf16.msra.mxu0 %v3891
    %4754 = vmatprep.subr.bf16.mxu0 %v3884
    %4755 = vmatpush2.bf16.msra.mxu0 %v3883
    %4756 = vmatprep.subr.bf16.mxu0 %v3876
    %4757 = vmatpush2.bf16.msra.mxu0 %v3875
    %4758 = vmatprep.subr.bf16.mxu0 %v3868
    %4759 = vmatpush2.bf16.msra.mxu0 %v3867
    %4760 = vmatprep.mubr.bf16.mxu0 %v1368
    %4761 = vmatmul.mubr.bf16.gmra.mxu0 %v1367
    %v4762 = vpop.f32.mrf.mxu0
    %v4763 = vadd.f32 %v4722, %v4762
    %v4764 = vpop.f32.mrf.mxu0
    %v4765 = vadd.f32 %v4724, %v4764
    %v4766 = vpop.f32.mrf.mxu0
    %v4767 = vpop.f32.mrf.mxu0
    %4768 = vdwg.mxu0
    %4769 = vmatprep.subr.bf16.mxu0 %v3478
    %4770 = vmatpush1.bf16.msra.mxu0 %v3477
    %4771 = vmatprep.subr.bf16.mxu0 %v3470
    %4772 = vmatpush1.bf16.msra.mxu0 %v3469
    %4773 = vmatprep.subr.bf16.mxu0 %v3462
    %4774 = vmatpush1.bf16.msra.mxu0 %v3461
    %4775 = vmatprep.subr.bf16.mxu0 %v3454
    %4776 = vmatpush1.bf16.msra.mxu0 %v3453
    %4777 = vmatprep.subr.bf16.mxu0 %v3446
    %4778 = vmatpush1.bf16.msra.mxu0 %v3445
    %4779 = vmatprep.subr.bf16.mxu0 %v3438
    %4780 = vmatpush1.bf16.msra.mxu0 %v3437
    %4781 = vmatprep.subr.bf16.mxu0 %v3430
    %4782 = vmatpush1.bf16.msra.mxu0 %v3429
    %4783 = vmatprep.subr.bf16.mxu0 %v3422
    %4784 = vmatpush1.bf16.msra.mxu0 %v3421
    %4785 = vmatprep.subr.bf16.mxu0 %v3542
    %4786 = vmatpush2.bf16.msra.mxu0 %v3541
    %4787 = vmatprep.subr.bf16.mxu0 %v3534
    %4788 = vmatpush2.bf16.msra.mxu0 %v3533
    %4789 = vmatprep.subr.bf16.mxu0 %v3526
    %4790 = vmatpush2.bf16.msra.mxu0 %v3525
    %4791 = vmatprep.subr.bf16.mxu0 %v3518
    %4792 = vmatpush2.bf16.msra.mxu0 %v3517
    %4793 = vmatprep.subr.bf16.mxu0 %v3510
    %4794 = vmatpush2.bf16.msra.mxu0 %v3509
    %4795 = vmatprep.subr.bf16.mxu0 %v3502
    %4796 = vmatpush2.bf16.msra.mxu0 %v3501
    %4797 = vmatprep.subr.bf16.mxu0 %v3494
    %4798 = vmatpush2.bf16.msra.mxu0 %v3493
    %4799 = vmatprep.subr.bf16.mxu0 %v3486
    %4800 = vmatpush2.bf16.msra.mxu0 %v3485
    %4801 = vmatprep.mubr.bf16.mxu0 %v1362
    %4802 = vmatmul.mubr.bf16.gmra.mxu0 %v1361
    %v4803 = vpop.f32.mrf.mxu0
    %v4804 = vadd.f32 0.0, %v4803
    %v4805 = vpop.f32.mrf.mxu0
    %v4806 = vadd.f32 0.0, %v4805
    %v4807 = vpop.f32.mrf.mxu0
    %v4808 = vpop.f32.mrf.mxu0
    %4809 = vdwg.mxu0
    %4810 = vmatprep.subr.bf16.mxu0 %v3606
    %4811 = vmatpush1.bf16.msra.mxu0 %v3605
    %4812 = vmatprep.subr.bf16.mxu0 %v3598
    %4813 = vmatpush1.bf16.msra.mxu0 %v3597
    %4814 = vmatprep.subr.bf16.mxu0 %v3590
    %4815 = vmatpush1.bf16.msra.mxu0 %v3589
    %4816 = vmatprep.subr.bf16.mxu0 %v3582
    %4817 = vmatpush1.bf16.msra.mxu0 %v3581
    %4818 = vmatprep.subr.bf16.mxu0 %v3574
    %4819 = vmatpush1.bf16.msra.mxu0 %v3573
    %4820 = vmatprep.subr.bf16.mxu0 %v3566
    %4821 = vmatpush1.bf16.msra.mxu0 %v3565
    %4822 = vmatprep.subr.bf16.mxu0 %v3558
    %4823 = vmatpush1.bf16.msra.mxu0 %v3557
    %4824 = vmatprep.subr.bf16.mxu0 %v3550
    %4825 = vmatpush1.bf16.msra.mxu0 %v3549
    %4826 = vmatprep.subr.bf16.mxu0 %v3670
    %4827 = vmatpush2.bf16.msra.mxu0 %v3669
    %4828 = vmatprep.subr.bf16.mxu0 %v3662
    %4829 = vmatpush2.bf16.msra.mxu0 %v3661
    %4830 = vmatprep.subr.bf16.mxu0 %v3654
    %4831 = vmatpush2.bf16.msra.mxu0 %v3653
    %4832 = vmatprep.subr.bf16.mxu0 %v3646
    %4833 = vmatpush2.bf16.msra.mxu0 %v3645
    %4834 = vmatprep.subr.bf16.mxu0 %v3638
    %4835 = vmatpush2.bf16.msra.mxu0 %v3637
    %4836 = vmatprep.subr.bf16.mxu0 %v3630
    %4837 = vmatpush2.bf16.msra.mxu0 %v3629
    %4838 = vmatprep.subr.bf16.mxu0 %v3622
    %4839 = vmatpush2.bf16.msra.mxu0 %v3621
    %4840 = vmatprep.subr.bf16.mxu0 %v3614
    %4841 = vmatpush2.bf16.msra.mxu0 %v3613
    %4842 = vmatprep.mubr.bf16.mxu0 %v1364
    %4843 = vmatmul.mubr.bf16.gmra.mxu0 %v1363
    %v4844 = vpop.f32.mrf.mxu0
    %v4845 = vadd.f32 %v4804, %v4844
    %v4846 = vpop.f32.mrf.mxu0
    %v4847 = vadd.f32 %v4806, %v4846
    %v4848 = vpop.f32.mrf.mxu0
    %v4849 = vpop.f32.mrf.mxu0
    %4850 = vdwg.mxu0
    %4851 = vmatprep.subr.bf16.mxu0 %v3734
    %4852 = vmatpush1.bf16.msra.mxu0 %v3733
    %4853 = vmatprep.subr.bf16.mxu0 %v3726
    %4854 = vmatpush1.bf16.msra.mxu0 %v3725
    %4855 = vmatprep.subr.bf16.mxu0 %v3718
    %4856 = vmatpush1.bf16.msra.mxu0 %v3717
    %4857 = vmatprep.subr.bf16.mxu0 %v3710
    %4858 = vmatpush1.bf16.msra.mxu0 %v3709
    %4859 = vmatprep.subr.bf16.mxu0 %v3702
    %4860 = vmatpush1.bf16.msra.mxu0 %v3701
    %4861 = vmatprep.subr.bf16.mxu0 %v3694
    %4862 = vmatpush1.bf16.msra.mxu0 %v3693
    %4863 = vmatprep.subr.bf16.mxu0 %v3686
    %4864 = vmatpush1.bf16.msra.mxu0 %v3685
    %4865 = vmatprep.subr.bf16.mxu0 %v3678
    %4866 = vmatpush1.bf16.msra.mxu0 %v3677
    %4867 = vmatprep.subr.bf16.mxu0 %v3798
    %4868 = vmatpush2.bf16.msra.mxu0 %v3797
    %4869 = vmatprep.subr.bf16.mxu0 %v3790
    %4870 = vmatpush2.bf16.msra.mxu0 %v3789
    %4871 = vmatprep.subr.bf16.mxu0 %v3782
    %4872 = vmatpush2.bf16.msra.mxu0 %v3781
    %4873 = vmatprep.subr.bf16.mxu0 %v3774
    %4874 = vmatpush2.bf16.msra.mxu0 %v3773
    %4875 = vmatprep.subr.bf16.mxu0 %v3766
    %4876 = vmatpush2.bf16.msra.mxu0 %v3765
    %4877 = vmatprep.subr.bf16.mxu0 %v3758
    %4878 = vmatpush2.bf16.msra.mxu0 %v3757
    %4879 = vmatprep.subr.bf16.mxu0 %v3750
    %4880 = vmatpush2.bf16.msra.mxu0 %v3749
    %4881 = vmatprep.subr.bf16.mxu0 %v3742
    %4882 = vmatpush2.bf16.msra.mxu0 %v3741
    %4883 = vmatprep.mubr.bf16.mxu0 %v1366
    %4884 = vmatmul.mubr.bf16.gmra.mxu0 %v1365
    %v4885 = vpop.f32.mrf.mxu0
    %v4886 = vadd.f32 %v4845, %v4885
    %v4887 = vpop.f32.mrf.mxu0
    %v4888 = vadd.f32 %v4847, %v4887
    %v4889 = vpop.f32.mrf.mxu0
    %v4890 = vpop.f32.mrf.mxu0
    %4891 = vdwg.mxu0
    %4892 = vmatprep.subr.bf16.mxu0 %v3862
    %4893 = vmatpush1.bf16.msra.mxu0 %v3861
    %4894 = vmatprep.subr.bf16.mxu0 %v3854
    %4895 = vmatpush1.bf16.msra.mxu0 %v3853
    %4896 = vmatprep.subr.bf16.mxu0 %v3846
    %4897 = vmatpush1.bf16.msra.mxu0 %v3845
    %4898 = vmatprep.subr.bf16.mxu0 %v3838
    %4899 = vmatpush1.bf16.msra.mxu0 %v3837
    %4900 = vmatprep.subr.bf16.mxu0 %v3830
    %4901 = vmatpush1.bf16.msra.mxu0 %v3829
    %4902 = vmatprep.subr.bf16.mxu0 %v3822
    %4903 = vmatpush1.bf16.msra.mxu0 %v3821
    %4904 = vmatprep.subr.bf16.mxu0 %v3814
    %4905 = vmatpush1.bf16.msra.mxu0 %v3813
    %4906 = vmatprep.subr.bf16.mxu0 %v3806
    %4907 = vmatpush1.bf16.msra.mxu0 %v3805
    %4908 = vmatprep.subr.bf16.mxu0 %v3926
    %4909 = vmatpush2.bf16.msra.mxu0 %v3925
    %4910 = vmatprep.subr.bf16.mxu0 %v3918
    %4911 = vmatpush2.bf16.msra.mxu0 %v3917
    %4912 = vmatprep.subr.bf16.mxu0 %v3910
    %4913 = vmatpush2.bf16.msra.mxu0 %v3909
    %4914 = vmatprep.subr.bf16.mxu0 %v3902
    %4915 = vmatpush2.bf16.msra.mxu0 %v3901
    %4916 = vmatprep.subr.bf16.mxu0 %v3894
    %4917 = vmatpush2.bf16.msra.mxu0 %v3893
    %4918 = vmatprep.subr.bf16.mxu0 %v3886
    %4919 = vmatpush2.bf16.msra.mxu0 %v3885
    %4920 = vmatprep.subr.bf16.mxu0 %v3878
    %4921 = vmatpush2.bf16.msra.mxu0 %v3877
    %4922 = vmatprep.subr.bf16.mxu0 %v3870
    %4923 = vmatpush2.bf16.msra.mxu0 %v3869
    %4924 = vmatprep.mubr.bf16.mxu0 %v1368
    %4925 = vmatmul.mubr.bf16.gmra.mxu0 %v1367
    %v4926 = vpop.f32.mrf.mxu0
    %v4927 = vadd.f32 %v4886, %v4926
    %v4928 = vpop.f32.mrf.mxu0
    %v4929 = vadd.f32 %v4888, %v4928
    %v4930 = vpop.f32.mrf.mxu0
    %v4931 = vpop.f32.mrf.mxu0
    %4932 = vdwg.mxu0
    %4933 = vmatprep.subr.bf16.mxu0 %v3480
    %4934 = vmatpush1.bf16.msra.mxu0 %v3479
    %4935 = vmatprep.subr.bf16.mxu0 %v3472
    %4936 = vmatpush1.bf16.msra.mxu0 %v3471
    %4937 = vmatprep.subr.bf16.mxu0 %v3464
    %4938 = vmatpush1.bf16.msra.mxu0 %v3463
    %4939 = vmatprep.subr.bf16.mxu0 %v3456
    %4940 = vmatpush1.bf16.msra.mxu0 %v3455
    %4941 = vmatprep.subr.bf16.mxu0 %v3448
    %4942 = vmatpush1.bf16.msra.mxu0 %v3447
    %4943 = vmatprep.subr.bf16.mxu0 %v3440
    %4944 = vmatpush1.bf16.msra.mxu0 %v3439
    %4945 = vmatprep.subr.bf16.mxu0 %v3432
    %4946 = vmatpush1.bf16.msra.mxu0 %v3431
    %4947 = vmatprep.subr.bf16.mxu0 %v3424
    %4948 = vmatpush1.bf16.msra.mxu0 %v3423
    %4949 = vmatprep.subr.bf16.mxu0 %v3544
    %4950 = vmatpush2.bf16.msra.mxu0 %v3543
    %4951 = vmatprep.subr.bf16.mxu0 %v3536
    %4952 = vmatpush2.bf16.msra.mxu0 %v3535
    %4953 = vmatprep.subr.bf16.mxu0 %v3528
    %4954 = vmatpush2.bf16.msra.mxu0 %v3527
    %4955 = vmatprep.subr.bf16.mxu0 %v3520
    %4956 = vmatpush2.bf16.msra.mxu0 %v3519
    %4957 = vmatprep.subr.bf16.mxu0 %v3512
    %4958 = vmatpush2.bf16.msra.mxu0 %v3511
    %4959 = vmatprep.subr.bf16.mxu0 %v3504
    %4960 = vmatpush2.bf16.msra.mxu0 %v3503
    %4961 = vmatprep.subr.bf16.mxu0 %v3496
    %4962 = vmatpush2.bf16.msra.mxu0 %v3495
    %4963 = vmatprep.subr.bf16.mxu0 %v3488
    %4964 = vmatpush2.bf16.msra.mxu0 %v3487
    %4965 = vmatprep.mubr.bf16.mxu0 %v1362
    %4966 = vmatmul.mubr.bf16.gmra.mxu0 %v1361
    %v4967 = vpop.f32.mrf.mxu0
    %v4968 = vadd.f32 0.0, %v4967
    %v4969 = vpop.f32.mrf.mxu0
    %v4970 = vadd.f32 0.0, %v4969
    %v4971 = vpop.f32.mrf.mxu0
    %v4972 = vpop.f32.mrf.mxu0
    %4973 = vdwg.mxu0
    %4974 = vmatprep.subr.bf16.mxu0 %v3608
    %4975 = vmatpush1.bf16.msra.mxu0 %v3607
    %4976 = vmatprep.subr.bf16.mxu0 %v3600
    %4977 = vmatpush1.bf16.msra.mxu0 %v3599
    %4978 = vmatprep.subr.bf16.mxu0 %v3592
    %4979 = vmatpush1.bf16.msra.mxu0 %v3591
    %4980 = vmatprep.subr.bf16.mxu0 %v3584
    %4981 = vmatpush1.bf16.msra.mxu0 %v3583
    %4982 = vmatprep.subr.bf16.mxu0 %v3576
    %4983 = vmatpush1.bf16.msra.mxu0 %v3575
    %4984 = vmatprep.subr.bf16.mxu0 %v3568
    %4985 = vmatpush1.bf16.msra.mxu0 %v3567
    %4986 = vmatprep.subr.bf16.mxu0 %v3560
    %4987 = vmatpush1.bf16.msra.mxu0 %v3559
    %4988 = vmatprep.subr.bf16.mxu0 %v3552
    %4989 = vmatpush1.bf16.msra.mxu0 %v3551
    %4990 = vmatprep.subr.bf16.mxu0 %v3672
    %4991 = vmatpush2.bf16.msra.mxu0 %v3671
    %4992 = vmatprep.subr.bf16.mxu0 %v3664
    %4993 = vmatpush2.bf16.msra.mxu0 %v3663
    %4994 = vmatprep.subr.bf16.mxu0 %v3656
    %4995 = vmatpush2.bf16.msra.mxu0 %v3655
    %4996 = vmatprep.subr.bf16.mxu0 %v3648
    %4997 = vmatpush2.bf16.msra.mxu0 %v3647
    %4998 = vmatprep.subr.bf16.mxu0 %v3640
    %4999 = vmatpush2.bf16.msra.mxu0 %v3639
    %5000 = vmatprep.subr.bf16.mxu0 %v3632
    %5001 = vmatpush2.bf16.msra.mxu0 %v3631
    %5002 = vmatprep.subr.bf16.mxu0 %v3624
    %5003 = vmatpush2.bf16.msra.mxu0 %v3623
    %5004 = vmatprep.subr.bf16.mxu0 %v3616
    %5005 = vmatpush2.bf16.msra.mxu0 %v3615
    %5006 = vmatprep.mubr.bf16.mxu0 %v1364
    %5007 = vmatmul.mubr.bf16.gmra.mxu0 %v1363
    %v5008 = vpop.f32.mrf.mxu0
    %v5009 = vadd.f32 %v4968, %v5008
    %v5010 = vpop.f32.mrf.mxu0
    %v5011 = vadd.f32 %v4970, %v5010
    %v5012 = vpop.f32.mrf.mxu0
    %v5013 = vpop.f32.mrf.mxu0
    %5014 = vdwg.mxu0
    %5015 = vmatprep.subr.bf16.mxu0 %v3736
    %5016 = vmatpush1.bf16.msra.mxu0 %v3735
    %5017 = vmatprep.subr.bf16.mxu0 %v3728
    %5018 = vmatpush1.bf16.msra.mxu0 %v3727
    %5019 = vmatprep.subr.bf16.mxu0 %v3720
    %5020 = vmatpush1.bf16.msra.mxu0 %v3719
    %5021 = vmatprep.subr.bf16.mxu0 %v3712
    %5022 = vmatpush1.bf16.msra.mxu0 %v3711
    %5023 = vmatprep.subr.bf16.mxu0 %v3704
    %5024 = vmatpush1.bf16.msra.mxu0 %v3703
    %5025 = vmatprep.subr.bf16.mxu0 %v3696
    %5026 = vmatpush1.bf16.msra.mxu0 %v3695
    %5027 = vmatprep.subr.bf16.mxu0 %v3688
    %5028 = vmatpush1.bf16.msra.mxu0 %v3687
    %5029 = vmatprep.subr.bf16.mxu0 %v3680
    %5030 = vmatpush1.bf16.msra.mxu0 %v3679
    %5031 = vmatprep.subr.bf16.mxu0 %v3800
    %5032 = vmatpush2.bf16.msra.mxu0 %v3799
    %5033 = vmatprep.subr.bf16.mxu0 %v3792
    %5034 = vmatpush2.bf16.msra.mxu0 %v3791
    %5035 = vmatprep.subr.bf16.mxu0 %v3784
    %5036 = vmatpush2.bf16.msra.mxu0 %v3783
    %5037 = vmatprep.subr.bf16.mxu0 %v3776
    %5038 = vmatpush2.bf16.msra.mxu0 %v3775
    %5039 = vmatprep.subr.bf16.mxu0 %v3768
    %5040 = vmatpush2.bf16.msra.mxu0 %v3767
    %5041 = vmatprep.subr.bf16.mxu0 %v3760
    %5042 = vmatpush2.bf16.msra.mxu0 %v3759
    %5043 = vmatprep.subr.bf16.mxu0 %v3752
    %5044 = vmatpush2.bf16.msra.mxu0 %v3751
    %5045 = vmatprep.subr.bf16.mxu0 %v3744
    %5046 = vmatpush2.bf16.msra.mxu0 %v3743
    %5047 = vmatprep.mubr.bf16.mxu0 %v1366
    %5048 = vmatmul.mubr.bf16.gmra.mxu0 %v1365
    %v5049 = vpop.f32.mrf.mxu0
    %v5050 = vadd.f32 %v5009, %v5049
    %v5051 = vpop.f32.mrf.mxu0
    %v5052 = vadd.f32 %v5011, %v5051
    %v5053 = vpop.f32.mrf.mxu0
    %v5054 = vpop.f32.mrf.mxu0
    %5055 = vdwg.mxu0
    %5056 = vmatprep.subr.bf16.mxu0 %v3864
    %5057 = vmatpush1.bf16.msra.mxu0 %v3863
    %5058 = vmatprep.subr.bf16.mxu0 %v3856
    %5059 = vmatpush1.bf16.msra.mxu0 %v3855
    %5060 = vmatprep.subr.bf16.mxu0 %v3848
    %5061 = vmatpush1.bf16.msra.mxu0 %v3847
    %5062 = vmatprep.subr.bf16.mxu0 %v3840
    %5063 = vmatpush1.bf16.msra.mxu0 %v3839
    %5064 = vmatprep.subr.bf16.mxu0 %v3832
    %5065 = vmatpush1.bf16.msra.mxu0 %v3831
    %5066 = vmatprep.subr.bf16.mxu0 %v3824
    %5067 = vmatpush1.bf16.msra.mxu0 %v3823
    %5068 = vmatprep.subr.bf16.mxu0 %v3816
    %5069 = vmatpush1.bf16.msra.mxu0 %v3815
    %5070 = vmatprep.subr.bf16.mxu0 %v3808
    %5071 = vmatpush1.bf16.msra.mxu0 %v3807
    %5072 = vmatprep.subr.bf16.mxu0 %v3928
    %5073 = vmatpush2.bf16.msra.mxu0 %v3927
    %5074 = vmatprep.subr.bf16.mxu0 %v3920
    %5075 = vmatpush2.bf16.msra.mxu0 %v3919
    %5076 = vmatprep.subr.bf16.mxu0 %v3912
    %5077 = vmatpush2.bf16.msra.mxu0 %v3911
    %5078 = vmatprep.subr.bf16.mxu0 %v3904
    %5079 = vmatpush2.bf16.msra.mxu0 %v3903
    %5080 = vmatprep.subr.bf16.mxu0 %v3896
    %5081 = vmatpush2.bf16.msra.mxu0 %v3895
    %5082 = vmatprep.subr.bf16.mxu0 %v3888
    %5083 = vmatpush2.bf16.msra.mxu0 %v3887
    %5084 = vmatprep.subr.bf16.mxu0 %v3880
    %5085 = vmatpush2.bf16.msra.mxu0 %v3879
    %5086 = vmatprep.subr.bf16.mxu0 %v3872
    %5087 = vmatpush2.bf16.msra.mxu0 %v3871
    %5088 = vmatprep.mubr.bf16.mxu0 %v1368
    %5089 = vmatmul.mubr.bf16.gmra.mxu0 %v1367
    %v5090 = vpop.f32.mrf.mxu0
    %v5091 = vadd.f32 %v5050, %v5090
    %v5092 = vpop.f32.mrf.mxu0
    %v5093 = vadd.f32 %v5052, %v5092
    %v5094 = vpop.f32.mrf.mxu0
    %v5095 = vpop.f32.mrf.mxu0
    %5096 = vdwg.mxu0
    %v5097 = vmax.f32 %v4599, %v4927
    %v5098 = vmax.f32 %v4601, %v4929
    %v5099 = vmax.f32 %v4763, %v5091
    %v5100 = vmax.f32 %v4765, %v5093
    %v5101 = vld [vmem:[#allocation8] sm:$0xf]
    %v5103 = vlaneseq
    %v5104 = vshrl.u32 %v5103, 7
    %v5105 = vsub.s32 0, %v5104
    %v5106 = vrot.slane %v5101, %v5105
    %v5107 = vlaneseq
    %v5108 = vshrl.u32 %v5107, 7
    %v5109 = vsub.s32 1, %v5108
    %v5110 = vrot.slane %v5101, %v5109
    %v5111 = vlaneseq
    %v5112 = vshrl.u32 %v5111, 7
    %v5113 = vsub.s32 2, %v5112
    %v5114 = vrot.slane %v5101, %v5113
    %v5115 = vlaneseq
    %v5116 = vshrl.u32 %v5115, 7
    %v5117 = vsub.s32 3, %v5116
    %v5118 = vrot.slane %v5101, %v5117
    %v5123 = vadd.f32 %v5097, %v5106
    %v5124 = vadd.f32 %v5098, %v5110
    %v5125 = vadd.f32 %v5099, %v5114
    %v5126 = vadd.f32 %v5100, %v5118
    %v5127 = vmax.f32 %v5123, 0.0
    %v5128 = vmax.f32 %v5124, 0.0
    %v5129 = vmax.f32 %v5125, 0.0
    %v5130 = vmax.f32 %v5126, 0.0
    %v5131 = vpack.c.bf16 %v5127, %v5127
    %v5132 = vpack.c.bf16 %v5128, %v5128
    %v5133 = vpack.c.bf16 %v5129, %v5129
    %v5134 = vpack.c.bf16 %v5130, %v5130
    %v5135 = vld [vmem:[#allocation10] sm:$0xff]
    %v5136 = vld [vmem:[#allocation10 + $0x8] sm:$0xff]
    %v5137 = vld [vmem:[#allocation10 + $0x10] sm:$0xff]
    %v5138 = vld [vmem:[#allocation10 + $0x18] sm:$0xff]
    %v5139 = vld [vmem:[#allocation10 + $0x20] sm:$0xff]
    %v5140 = vld [vmem:[#allocation10 + $0x28] sm:$0xff]
    %v5141 = vld [vmem:[#allocation10 + $0x30] sm:$0xff]
    %v5142 = vld [vmem:[#allocation10 + $0x38] sm:$0xff]
    %v5143 = vld [vmem:[#allocation10 + $0x40] sm:$0xff]
    %v5144 = vld [vmem:[#allocation10 + $0x48] sm:$0xff]
    %v5145 = vld [vmem:[#allocation10 + $0x50] sm:$0xff]
    %v5146 = vld [vmem:[#allocation10 + $0x58] sm:$0xff]
    %v5147 = vld [vmem:[#allocation10 + $0x60] sm:$0xff]
    %v5148 = vld [vmem:[#allocation10 + $0x68] sm:$0xff]
    %v5149 = vld [vmem:[#allocation10 + $0x70] sm:$0xff]
    %v5150 = vld [vmem:[#allocation10 + $0x78] sm:$0xff]
    %v5151 = vld [vmem:[#allocation10 + $0x80] sm:$0xff]
    %v5152 = vld [vmem:[#allocation10 + $0x88] sm:$0xff]
    %v5153 = vld [vmem:[#allocation10 + $0x90] sm:$0xff]
    %v5154 = vld [vmem:[#allocation10 + $0x98] sm:$0xff]
    %v5155 = vld [vmem:[#allocation10 + $0xa0] sm:$0xff]
    %v5156 = vld [vmem:[#allocation10 + $0xa8] sm:$0xff]
    %v5157 = vld [vmem:[#allocation10 + $0xb0] sm:$0xff]
    %v5158 = vld [vmem:[#allocation10 + $0xb8] sm:$0xff]
    %v5159 = vld [vmem:[#allocation10 + $0xc0] sm:$0xff]
    %v5160 = vld [vmem:[#allocation10 + $0xc8] sm:$0xff]
    %v5161 = vld [vmem:[#allocation10 + $0xd0] sm:$0xff]
    %v5162 = vld [vmem:[#allocation10 + $0xd8] sm:$0xff]
    %v5163 = vld [vmem:[#allocation10 + $0xe0] sm:$0xff]
    %v5164 = vld [vmem:[#allocation10 + $0xe8] sm:$0xff]
    %v5165 = vld [vmem:[#allocation10 + $0xf0] sm:$0xff]
    %v5166 = vld [vmem:[#allocation10 + $0xf8] sm:$0xff]
    %v5167 = vld [vmem:[#allocation10 + $0x100] sm:$0xff]
    %v5168 = vld [vmem:[#allocation10 + $0x108] sm:$0xff]
    %v5169 = vld [vmem:[#allocation10 + $0x110] sm:$0xff]
    %v5170 = vld [vmem:[#allocation10 + $0x118] sm:$0xff]
    %v5171 = vld [vmem:[#allocation10 + $0x120] sm:$0xff]
    %v5172 = vld [vmem:[#allocation10 + $0x128] sm:$0xff]
    %v5173 = vld [vmem:[#allocation10 + $0x130] sm:$0xff]
    %v5174 = vld [vmem:[#allocation10 + $0x138] sm:$0xff]
    %v5175 = vld [vmem:[#allocation10 + $0x140] sm:$0xff]
    %v5176 = vld [vmem:[#allocation10 + $0x148] sm:$0xff]
    %v5177 = vld [vmem:[#allocation10 + $0x150] sm:$0xff]
    %v5178 = vld [vmem:[#allocation10 + $0x158] sm:$0xff]
    %v5179 = vld [vmem:[#allocation10 + $0x160] sm:$0xff]
    %v5180 = vld [vmem:[#allocation10 + $0x168] sm:$0xff]
    %v5181 = vld [vmem:[#allocation10 + $0x170] sm:$0xff]
    %v5182 = vld [vmem:[#allocation10 + $0x178] sm:$0xff]
    %v5183 = vld [vmem:[#allocation10 + $0x180] sm:$0xff]
    %v5184 = vld [vmem:[#allocation10 + $0x188] sm:$0xff]
    %v5185 = vld [vmem:[#allocation10 + $0x190] sm:$0xff]
    %v5186 = vld [vmem:[#allocation10 + $0x198] sm:$0xff]
    %v5187 = vld [vmem:[#allocation10 + $0x1a0] sm:$0xff]
    %v5188 = vld [vmem:[#allocation10 + $0x1a8] sm:$0xff]
    %v5189 = vld [vmem:[#allocation10 + $0x1b0] sm:$0xff]
    %v5190 = vld [vmem:[#allocation10 + $0x1b8] sm:$0xff]
    %v5191 = vld [vmem:[#allocation10 + $0x1c0] sm:$0xff]
    %v5192 = vld [vmem:[#allocation10 + $0x1c8] sm:$0xff]
    %v5193 = vld [vmem:[#allocation10 + $0x1d0] sm:$0xff]
    %v5194 = vld [vmem:[#allocation10 + $0x1d8] sm:$0xff]
    %v5195 = vld [vmem:[#allocation10 + $0x1e0] sm:$0xff]
    %v5196 = vld [vmem:[#allocation10 + $0x1e8] sm:$0xff]
    %v5197 = vld [vmem:[#allocation10 + $0x1f0] sm:$0xff]
    %v5198 = vld [vmem:[#allocation10 + $0x1f8] sm:$0xff]
    %v5199 = vld [vmem:[#allocation11] sm:$0x3]
    %v5201 = vlaneseq
    %v5202 = vshrl.u32 %v5201, 7
    %v5203 = vsub.s32 0, %v5202
    %v5204 = vrot.slane %v5199, %v5203
    %v5205 = vlaneseq
    %v5206 = vshrl.u32 %v5205, 7
    %v5207 = vsub.s32 1, %v5206
    %v5208 = vrot.slane %v5199, %v5207
    %v5275 = vunpack.c.l.b16 %v5135
    %v5276 = vunpack.c.h.b16 %v5135
    %v5277 = vunpack.c.l.b16 %v5136
    %v5278 = vunpack.c.h.b16 %v5136
    %v5279 = vunpack.c.l.b16 %v5137
    %v5280 = vunpack.c.h.b16 %v5137
    %v5281 = vunpack.c.l.b16 %v5138
    %v5282 = vunpack.c.h.b16 %v5138
    %v5283 = vunpack.c.l.b16 %v5139
    %v5284 = vunpack.c.h.b16 %v5139
    %v5285 = vunpack.c.l.b16 %v5140
    %v5286 = vunpack.c.h.b16 %v5140
    %v5287 = vunpack.c.l.b16 %v5141
    %v5288 = vunpack.c.h.b16 %v5141
    %v5289 = vunpack.c.l.b16 %v5142
    %v5290 = vunpack.c.h.b16 %v5142
    %v5291 = vunpack.c.l.b16 %v5143
    %v5292 = vunpack.c.h.b16 %v5143
    %v5293 = vunpack.c.l.b16 %v5144
    %v5294 = vunpack.c.h.b16 %v5144
    %v5295 = vunpack.c.l.b16 %v5145
    %v5296 = vunpack.c.h.b16 %v5145
    %v5297 = vunpack.c.l.b16 %v5146
    %v5298 = vunpack.c.h.b16 %v5146
    %v5299 = vunpack.c.l.b16 %v5147
    %v5300 = vunpack.c.h.b16 %v5147
    %v5301 = vunpack.c.l.b16 %v5148
    %v5302 = vunpack.c.h.b16 %v5148
    %v5303 = vunpack.c.l.b16 %v5149
    %v5304 = vunpack.c.h.b16 %v5149
    %v5305 = vunpack.c.l.b16 %v5150
    %v5306 = vunpack.c.h.b16 %v5150
    %v5307 = vunpack.c.l.b16 %v5151
    %v5308 = vunpack.c.h.b16 %v5151
    %v5309 = vunpack.c.l.b16 %v5152
    %v5310 = vunpack.c.h.b16 %v5152
    %v5311 = vunpack.c.l.b16 %v5153
    %v5312 = vunpack.c.h.b16 %v5153
    %v5313 = vunpack.c.l.b16 %v5154
    %v5314 = vunpack.c.h.b16 %v5154
    %v5315 = vunpack.c.l.b16 %v5155
    %v5316 = vunpack.c.h.b16 %v5155
    %v5317 = vunpack.c.l.b16 %v5156
    %v5318 = vunpack.c.h.b16 %v5156
    %v5319 = vunpack.c.l.b16 %v5157
    %v5320 = vunpack.c.h.b16 %v5157
    %v5321 = vunpack.c.l.b16 %v5158
    %v5322 = vunpack.c.h.b16 %v5158
    %v5323 = vunpack.c.l.b16 %v5159
    %v5324 = vunpack.c.h.b16 %v5159
    %v5325 = vunpack.c.l.b16 %v5160
    %v5326 = vunpack.c.h.b16 %v5160
    %v5327 = vunpack.c.l.b16 %v5161
    %v5328 = vunpack.c.h.b16 %v5161
    %v5329 = vunpack.c.l.b16 %v5162
    %v5330 = vunpack.c.h.b16 %v5162
    %v5331 = vunpack.c.l.b16 %v5163
    %v5332 = vunpack.c.h.b16 %v5163
    %v5333 = vunpack.c.l.b16 %v5164
    %v5334 = vunpack.c.h.b16 %v5164
    %v5335 = vunpack.c.l.b16 %v5165
    %v5336 = vunpack.c.h.b16 %v5165
    %v5337 = vunpack.c.l.b16 %v5166
    %v5338 = vunpack.c.h.b16 %v5166
    %v5339 = vunpack.c.l.b16 %v5167
    %v5340 = vunpack.c.h.b16 %v5167
    %v5341 = vunpack.c.l.b16 %v5168
    %v5342 = vunpack.c.h.b16 %v5168
    %v5343 = vunpack.c.l.b16 %v5169
    %v5344 = vunpack.c.h.b16 %v5169
    %v5345 = vunpack.c.l.b16 %v5170
    %v5346 = vunpack.c.h.b16 %v5170
    %v5347 = vunpack.c.l.b16 %v5171
    %v5348 = vunpack.c.h.b16 %v5171
    %v5349 = vunpack.c.l.b16 %v5172
    %v5350 = vunpack.c.h.b16 %v5172
    %v5351 = vunpack.c.l.b16 %v5173
    %v5352 = vunpack.c.h.b16 %v5173
    %v5353 = vunpack.c.l.b16 %v5174
    %v5354 = vunpack.c.h.b16 %v5174
    %v5355 = vunpack.c.l.b16 %v5175
    %v5356 = vunpack.c.h.b16 %v5175
    %v5357 = vunpack.c.l.b16 %v5176
    %v5358 = vunpack.c.h.b16 %v5176
    %v5359 = vunpack.c.l.b16 %v5177
    %v5360 = vunpack.c.h.b16 %v5177
    %v5361 = vunpack.c.l.b16 %v5178
    %v5362 = vunpack.c.h.b16 %v5178
    %v5363 = vunpack.c.l.b16 %v5179
    %v5364 = vunpack.c.h.b16 %v5179
    %v5365 = vunpack.c.l.b16 %v5180
    %v5366 = vunpack.c.h.b16 %v5180
    %v5367 = vunpack.c.l.b16 %v5181
    %v5368 = vunpack.c.h.b16 %v5181
    %v5369 = vunpack.c.l.b16 %v5182
    %v5370 = vunpack.c.h.b16 %v5182
    %v5371 = vunpack.c.l.b16 %v5183
    %v5372 = vunpack.c.h.b16 %v5183
    %v5373 = vunpack.c.l.b16 %v5184
    %v5374 = vunpack.c.h.b16 %v5184
    %v5375 = vunpack.c.l.b16 %v5185
    %v5376 = vunpack.c.h.b16 %v5185
    %v5377 = vunpack.c.l.b16 %v5186
    %v5378 = vunpack.c.h.b16 %v5186
    %v5379 = vunpack.c.l.b16 %v5187
    %v5380 = vunpack.c.h.b16 %v5187
    %v5381 = vunpack.c.l.b16 %v5188
    %v5382 = vunpack.c.h.b16 %v5188
    %v5383 = vunpack.c.l.b16 %v5189
    %v5384 = vunpack.c.h.b16 %v5189
    %v5385 = vunpack.c.l.b16 %v5190
    %v5386 = vunpack.c.h.b16 %v5190
    %v5387 = vunpack.c.l.b16 %v5191
    %v5388 = vunpack.c.h.b16 %v5191
    %v5389 = vunpack.c.l.b16 %v5192
    %v5390 = vunpack.c.h.b16 %v5192
    %v5391 = vunpack.c.l.b16 %v5193
    %v5392 = vunpack.c.h.b16 %v5193
    %v5393 = vunpack.c.l.b16 %v5194
    %v5394 = vunpack.c.h.b16 %v5194
    %v5395 = vunpack.c.l.b16 %v5195
    %v5396 = vunpack.c.h.b16 %v5195
    %v5397 = vunpack.c.l.b16 %v5196
    %v5398 = vunpack.c.h.b16 %v5196
    %v5399 = vunpack.c.l.b16 %v5197
    %v5400 = vunpack.c.h.b16 %v5197
    %v5401 = vunpack.c.l.b16 %v5198
    %v5402 = vunpack.c.h.b16 %v5198
    %v5403 = vpack.c.b16 %v5277, %v5275
    %v5404 = vpack.c.b16 %v5278, %v5276
    %v5405 = vpack.c.b16 %v5281, %v5279
    %v5406 = vpack.c.b16 %v5282, %v5280
    %v5407 = vpack.c.b16 %v5285, %v5283
    %v5408 = vpack.c.b16 %v5286, %v5284
    %v5409 = vpack.c.b16 %v5289, %v5287
    %v5410 = vpack.c.b16 %v5290, %v5288
    %v5411 = vpack.c.b16 %v5293, %v5291
    %v5412 = vpack.c.b16 %v5294, %v5292
    %v5413 = vpack.c.b16 %v5297, %v5295
    %v5414 = vpack.c.b16 %v5298, %v5296
    %v5415 = vpack.c.b16 %v5301, %v5299
    %v5416 = vpack.c.b16 %v5302, %v5300
    %v5417 = vpack.c.b16 %v5305, %v5303
    %v5418 = vpack.c.b16 %v5306, %v5304
    %v5419 = vpack.c.b16 %v5309, %v5307
    %v5420 = vpack.c.b16 %v5310, %v5308
    %v5421 = vpack.c.b16 %v5313, %v5311
    %v5422 = vpack.c.b16 %v5314, %v5312
    %v5423 = vpack.c.b16 %v5317, %v5315
    %v5424 = vpack.c.b16 %v5318, %v5316
    %v5425 = vpack.c.b16 %v5321, %v5319
    %v5426 = vpack.c.b16 %v5322, %v5320
    %v5427 = vpack.c.b16 %v5325, %v5323
    %v5428 = vpack.c.b16 %v5326, %v5324
    %v5429 = vpack.c.b16 %v5329, %v5327
    %v5430 = vpack.c.b16 %v5330, %v5328
    %v5431 = vpack.c.b16 %v5333, %v5331
    %v5432 = vpack.c.b16 %v5334, %v5332
    %v5433 = vpack.c.b16 %v5337, %v5335
    %v5434 = vpack.c.b16 %v5338, %v5336
    %v5435 = vpack.c.b16 %v5341, %v5339
    %v5436 = vpack.c.b16 %v5342, %v5340
    %v5437 = vpack.c.b16 %v5345, %v5343
    %v5438 = vpack.c.b16 %v5346, %v5344
    %v5439 = vpack.c.b16 %v5349, %v5347
    %v5440 = vpack.c.b16 %v5350, %v5348
    %v5441 = vpack.c.b16 %v5353, %v5351
    %v5442 = vpack.c.b16 %v5354, %v5352
    %v5443 = vpack.c.b16 %v5357, %v5355
    %v5444 = vpack.c.b16 %v5358, %v5356
    %v5445 = vpack.c.b16 %v5361, %v5359
    %v5446 = vpack.c.b16 %v5362, %v5360
    %v5447 = vpack.c.b16 %v5365, %v5363
    %v5448 = vpack.c.b16 %v5366, %v5364
    %v5449 = vpack.c.b16 %v5369, %v5367
    %v5450 = vpack.c.b16 %v5370, %v5368
    %v5451 = vpack.c.b16 %v5373, %v5371
    %v5452 = vpack.c.b16 %v5374, %v5372
    %v5453 = vpack.c.b16 %v5377, %v5375
    %v5454 = vpack.c.b16 %v5378, %v5376
    %v5455 = vpack.c.b16 %v5381, %v5379
    %v5456 = vpack.c.b16 %v5382, %v5380
    %v5457 = vpack.c.b16 %v5385, %v5383
    %v5458 = vpack.c.b16 %v5386, %v5384
    %v5459 = vpack.c.b16 %v5389, %v5387
    %v5460 = vpack.c.b16 %v5390, %v5388
    %v5461 = vpack.c.b16 %v5393, %v5391
    %v5462 = vpack.c.b16 %v5394, %v5392
    %v5463 = vpack.c.b16 %v5397, %v5395
    %v5464 = vpack.c.b16 %v5398, %v5396
    %v5465 = vpack.c.b16 %v5401, %v5399
    %v5466 = vpack.c.b16 %v5402, %v5400
    %5531 = vmatprep.subr.bf16.mxu0 %v5418
    %5532 = vmatpush1.bf16.msra.mxu0 %v5417
    %5533 = vmatprep.subr.bf16.mxu0 %v5416
    %5534 = vmatpush1.bf16.msra.mxu0 %v5415
    %5535 = vmatprep.subr.bf16.mxu0 %v5414
    %5536 = vmatpush1.bf16.msra.mxu0 %v5413
    %5537 = vmatprep.subr.bf16.mxu0 %v5412
    %5538 = vmatpush1.bf16.msra.mxu0 %v5411
    %5539 = vmatprep.subr.bf16.mxu0 %v5410
    %5540 = vmatpush1.bf16.msra.mxu0 %v5409
    %5541 = vmatprep.subr.bf16.mxu0 %v5408
    %5542 = vmatpush1.bf16.msra.mxu0 %v5407
    %5543 = vmatprep.subr.bf16.mxu0 %v5406
    %5544 = vmatpush1.bf16.msra.mxu0 %v5405
    %5545 = vmatprep.subr.bf16.mxu0 %v5404
    %5546 = vmatpush1.bf16.msra.mxu0 %v5403
    %5547 = vmatprep.subr.bf16.mxu0 %v5434
    %5548 = vmatpush2.bf16.msra.mxu0 %v5433
    %5549 = vmatprep.subr.bf16.mxu0 %v5432
    %5550 = vmatpush2.bf16.msra.mxu0 %v5431
    %5551 = vmatprep.subr.bf16.mxu0 %v5430
    %5552 = vmatpush2.bf16.msra.mxu0 %v5429
    %5553 = vmatprep.subr.bf16.mxu0 %v5428
    %5554 = vmatpush2.bf16.msra.mxu0 %v5427
    %5555 = vmatprep.subr.bf16.mxu0 %v5426
    %5556 = vmatpush2.bf16.msra.mxu0 %v5425
    %5557 = vmatprep.subr.bf16.mxu0 %v5424
    %5558 = vmatpush2.bf16.msra.mxu0 %v5423
    %5559 = vmatprep.subr.bf16.mxu0 %v5422
    %5560 = vmatpush2.bf16.msra.mxu0 %v5421
    %5561 = vmatprep.subr.bf16.mxu0 %v5420
    %5562 = vmatpush2.bf16.msra.mxu0 %v5419
    %5563 = vmatprep.mubr.bf16.mxu0 %v5132
    %5564 = vmatmul.mubr.bf16.gmra.mxu0 %v5131
    %v5565 = vpop.f32.mrf.mxu0
    %v5566 = vadd.f32 %v5204, %v5565
    %v5567 = vpop.f32.mrf.mxu0
    %v5568 = vadd.f32 %v5208, %v5567
    %v5569 = vpop.f32.mrf.mxu0
    %v5570 = vpop.f32.mrf.mxu0
    %5571 = vdwg.mxu0
    %5572 = vmatprep.subr.bf16.mxu0 %v5450
    %5573 = vmatpush1.bf16.msra.mxu0 %v5449
    %5574 = vmatprep.subr.bf16.mxu0 %v5448
    %5575 = vmatpush1.bf16.msra.mxu0 %v5447
    %5576 = vmatprep.subr.bf16.mxu0 %v5446
    %5577 = vmatpush1.bf16.msra.mxu0 %v5445
    %5578 = vmatprep.subr.bf16.mxu0 %v5444
    %5579 = vmatpush1.bf16.msra.mxu0 %v5443
    %5580 = vmatprep.subr.bf16.mxu0 %v5442
    %5581 = vmatpush1.bf16.msra.mxu0 %v5441
    %5582 = vmatprep.subr.bf16.mxu0 %v5440
    %5583 = vmatpush1.bf16.msra.mxu0 %v5439
    %5584 = vmatprep.subr.bf16.mxu0 %v5438
    %5585 = vmatpush1.bf16.msra.mxu0 %v5437
    %5586 = vmatprep.subr.bf16.mxu0 %v5436
    %5587 = vmatpush1.bf16.msra.mxu0 %v5435
    %5588 = vmatprep.subr.bf16.mxu0 %v5466
    %5589 = vmatpush2.bf16.msra.mxu0 %v5465
    %5590 = vmatprep.subr.bf16.mxu0 %v5464
    %5591 = vmatpush2.bf16.msra.mxu0 %v5463
    %5592 = vmatprep.subr.bf16.mxu0 %v5462
    %5593 = vmatpush2.bf16.msra.mxu0 %v5461
    %5594 = vmatprep.subr.bf16.mxu0 %v5460
    %5595 = vmatpush2.bf16.msra.mxu0 %v5459
    %5596 = vmatprep.subr.bf16.mxu0 %v5458
    %5597 = vmatpush2.bf16.msra.mxu0 %v5457
    %5598 = vmatprep.subr.bf16.mxu0 %v5456
    %5599 = vmatpush2.bf16.msra.mxu0 %v5455
    %5600 = vmatprep.subr.bf16.mxu0 %v5454
    %5601 = vmatpush2.bf16.msra.mxu0 %v5453
    %5602 = vmatprep.subr.bf16.mxu0 %v5452
    %5603 = vmatpush2.bf16.msra.mxu0 %v5451
    %5604 = vmatprep.mubr.bf16.mxu0 %v5134
    %5605 = vmatmul.mubr.bf16.gmra.mxu0 %v5133
    %v5606 = vpop.f32.mrf.mxu0
    %v5607 = vadd.f32 %v5566, %v5606
    %v5608 = vpop.f32.mrf.mxu0
    %v5609 = vadd.f32 %v5568, %v5608
    %v5610 = vpop.f32.mrf.mxu0
    %v5611 = vpop.f32.mrf.mxu0
    %5612 = vdwg.mxu0
    %v5613 = vmax.f32 %v5607, 0.0
    %v5614 = vmax.f32 %v5609, 0.0
    %v5615 = vpack.c.bf16 %v5613, %v5613
    %v5616 = vpack.c.bf16 %v5614, %v5614
    %v5617 = vld [vmem:[#allocation13] sm:$0xf]
    %v5618 = vld [vmem:[#allocation13 + $0x4] sm:$0xf]
    %v5619 = vld [vmem:[#allocation13 + $0x8] sm:$0xf]
    %v5620 = vld [vmem:[#allocation13 + $0xc] sm:$0xf]
    %v5621 = vld [vmem:[#allocation13 + $0x10] sm:$0xf]
    %v5622 = vld [vmem:[#allocation13 + $0x14] sm:$0xf]
    %v5623 = vld [vmem:[#allocation13 + $0x18] sm:$0xf]
    %v5624 = vld [vmem:[#allocation13 + $0x1c] sm:$0xf]
    %v5625 = vld [vmem:[#allocation13 + $0x20] sm:$0xf]
    %v5626 = vld [vmem:[#allocation13 + $0x24] sm:$0xf]
    %v5627 = vld [vmem:[#allocation13 + $0x28] sm:$0xf]
    %v5628 = vld [vmem:[#allocation13 + $0x2c] sm:$0xf]
    %v5629 = vld [vmem:[#allocation13 + $0x30] sm:$0xf]
    %v5630 = vld [vmem:[#allocation13 + $0x34] sm:$0xf]
    %v5631 = vld [vmem:[#allocation13 + $0x38] sm:$0xf]
    %v5632 = vld [vmem:[#allocation13 + $0x3c] sm:$0xf]
    %v5633 = vld [vmem:[#allocation13 + $0x40] sm:$0xf]
    %v5634 = vld [vmem:[#allocation13 + $0x44] sm:$0xf]
    %v5635 = vld [vmem:[#allocation13 + $0x48] sm:$0xf]
    %v5636 = vld [vmem:[#allocation13 + $0x4c] sm:$0xf]
    %v5637 = vld [vmem:[#allocation13 + $0x50] sm:$0xf]
    %v5638 = vld [vmem:[#allocation13 + $0x54] sm:$0xf]
    %v5639 = vld [vmem:[#allocation13 + $0x58] sm:$0xf]
    %v5640 = vld [vmem:[#allocation13 + $0x5c] sm:$0xf]
    %v5641 = vld [vmem:[#allocation13 + $0x60] sm:$0xf]
    %v5642 = vld [vmem:[#allocation13 + $0x64] sm:$0xf]
    %v5643 = vld [vmem:[#allocation13 + $0x68] sm:$0xf]
    %v5644 = vld [vmem:[#allocation13 + $0x6c] sm:$0xf]
    %v5645 = vld [vmem:[#allocation13 + $0x70] sm:$0xf]
    %v5646 = vld [vmem:[#allocation13 + $0x74] sm:$0xf]
    %v5647 = vld [vmem:[#allocation13 + $0x78] sm:$0xf]
    %v5648 = vld [vmem:[#allocation13 + $0x7c] sm:$0xf]
    %v5649 = vld [vmem:[#allocation14] sm:$0x1]
    %v5651 = vlaneseq
    %v5652 = vshrl.u32 %v5651, 7
    %v5653 = vsub.s32 0, %v5652
    %v5654 = vrot.slane %v5649, %v5653
    %v5688 = vunpack.c.l.b16 %v5617
    %v5689 = vunpack.c.l.b16 %v5618
    %v5690 = vunpack.c.l.b16 %v5619
    %v5691 = vunpack.c.l.b16 %v5620
    %v5692 = vunpack.c.l.b16 %v5621
    %v5693 = vunpack.c.l.b16 %v5622
    %v5694 = vunpack.c.l.b16 %v5623
    %v5695 = vunpack.c.l.b16 %v5624
    %v5696 = vunpack.c.l.b16 %v5625
    %v5697 = vunpack.c.l.b16 %v5626
    %v5698 = vunpack.c.l.b16 %v5627
    %v5699 = vunpack.c.l.b16 %v5628
    %v5700 = vunpack.c.l.b16 %v5629
    %v5701 = vunpack.c.l.b16 %v5630
    %v5702 = vunpack.c.l.b16 %v5631
    %v5703 = vunpack.c.l.b16 %v5632
    %v5704 = vunpack.c.l.b16 %v5633
    %v5705 = vunpack.c.l.b16 %v5634
    %v5706 = vunpack.c.l.b16 %v5635
    %v5707 = vunpack.c.l.b16 %v5636
    %v5708 = vunpack.c.l.b16 %v5637
    %v5709 = vunpack.c.l.b16 %v5638
    %v5710 = vunpack.c.l.b16 %v5639
    %v5711 = vunpack.c.l.b16 %v5640
    %v5712 = vunpack.c.l.b16 %v5641
    %v5713 = vunpack.c.l.b16 %v5642
    %v5714 = vunpack.c.l.b16 %v5643
    %v5715 = vunpack.c.l.b16 %v5644
    %v5716 = vunpack.c.l.b16 %v5645
    %v5717 = vunpack.c.l.b16 %v5646
    %v5718 = vunpack.c.l.b16 %v5647
    %v5719 = vunpack.c.l.b16 %v5648
    %v5720 = vpack.c.b16 %v5689, %v5688
    %v5721 = vpack.c.b16 %v5691, %v5690
    %v5722 = vpack.c.b16 %v5693, %v5692
    %v5723 = vpack.c.b16 %v5695, %v5694
    %v5724 = vpack.c.b16 %v5697, %v5696
    %v5725 = vpack.c.b16 %v5699, %v5698
    %v5726 = vpack.c.b16 %v5701, %v5700
    %v5727 = vpack.c.b16 %v5703, %v5702
    %v5728 = vpack.c.b16 %v5705, %v5704
    %v5729 = vpack.c.b16 %v5707, %v5706
    %v5730 = vpack.c.b16 %v5709, %v5708
    %v5731 = vpack.c.b16 %v5711, %v5710
    %v5732 = vpack.c.b16 %v5713, %v5712
    %v5733 = vpack.c.b16 %v5715, %v5714
    %v5734 = vpack.c.b16 %v5717, %v5716
    %v5735 = vpack.c.b16 %v5719, %v5718
    %5752 = vmatprep.subr.bf16.mxu0 0
    %5753 = vmatpush1.bf16.msra.mxu0 %v5727
    %5754 = vmatprep.subr.bf16.mxu0 0
    %5755 = vmatpush1.bf16.msra.mxu0 %v5726
    %5756 = vmatprep.subr.bf16.mxu0 0
    %5757 = vmatpush1.bf16.msra.mxu0 %v5725
    %5758 = vmatprep.subr.bf16.mxu0 0
    %5759 = vmatpush1.bf16.msra.mxu0 %v5724
    %5760 = vmatprep.subr.bf16.mxu0 0
    %5761 = vmatpush1.bf16.msra.mxu0 %v5723
    %5762 = vmatprep.subr.bf16.mxu0 0
    %5763 = vmatpush1.bf16.msra.mxu0 %v5722
    %5764 = vmatprep.subr.bf16.mxu0 0
    %5765 = vmatpush1.bf16.msra.mxu0 %v5721
    %5766 = vmatprep.subr.bf16.mxu0 0
    %5767 = vmatpush1.bf16.msra.mxu0 %v5720
    %5768 = vmatprep.subr.bf16.mxu0 0
    %5769 = vmatpush2.bf16.msra.mxu0 %v5735
    %5770 = vmatprep.subr.bf16.mxu0 0
    %5771 = vmatpush2.bf16.msra.mxu0 %v5734
    %5772 = vmatprep.subr.bf16.mxu0 0
    %5773 = vmatpush2.bf16.msra.mxu0 %v5733
    %5774 = vmatprep.subr.bf16.mxu0 0
    %5775 = vmatpush2.bf16.msra.mxu0 %v5732
    %5776 = vmatprep.subr.bf16.mxu0 0
    %5777 = vmatpush2.bf16.msra.mxu0 %v5731
    %5778 = vmatprep.subr.bf16.mxu0 0
    %5779 = vmatpush2.bf16.msra.mxu0 %v5730
    %5780 = vmatprep.subr.bf16.mxu0 0
    %5781 = vmatpush2.bf16.msra.mxu0 %v5729
    %5782 = vmatprep.subr.bf16.mxu0 0
    %5783 = vmatpush2.bf16.msra.mxu0 %v5728
    %5784 = vmatprep.mubr.bf16.mxu0 %v5616
    %5785 = vmatmul.mubr.bf16.gmra.mxu0 %v5615
    %v5786 = vpop.f32.mrf.mxu0
    %v5787 = vadd.f32 %v5654, %v5786
    %v5788 = vpop.f32.mrf.mxu0
    %v5789 = vpop.f32.mrf.mxu0
    %v5790 = vpop.f32.mrf.mxu0
    %5791 = vdwg.mxu0
    %v5792 = vmax.f32 %v5787, 0.0
    %v5793 = vpack.c.bf16 %v5792, %v5792
    %v5794 = vld [vmem:[#allocation16] sm:$0xf]
    %v5795 = vld [vmem:[#allocation16 + $0x4] sm:$0xf]
    %v5796 = vld [vmem:[#allocation16 + $0x8] sm:$0xf]
    %v5797 = vld [vmem:[#allocation16 + $0xc] sm:$0xf]
    %v5798 = vld [vmem:[#allocation16 + $0x10] sm:$0xf]
    %v5799 = vld [vmem:[#allocation16 + $0x14] sm:$0xf]
    %v5800 = vld [vmem:[#allocation16 + $0x18] sm:$0xf]
    %v5801 = vld [vmem:[#allocation16 + $0x1c] sm:$0xf]
    %v5802 = vld [vmem:[#allocation16 + $0x20] sm:$0xf]
    %v5803 = vld [vmem:[#allocation16 + $0x24] sm:$0xf]
    %v5804 = vld [vmem:[#allocation16 + $0x28] sm:$0xf]
    %v5805 = vld [vmem:[#allocation16 + $0x2c] sm:$0xf]
    %v5806 = vld [vmem:[#allocation16 + $0x30] sm:$0xf]
    %v5807 = vld [vmem:[#allocation16 + $0x34] sm:$0xf]
    %v5808 = vld [vmem:[#allocation16 + $0x38] sm:$0xf]
    %v5809 = vld [vmem:[#allocation16 + $0x3c] sm:$0xf]
    %v5810 = vld [vmem:[#allocation17] sm:$0x1]
    %v5812 = vlaneseq
    %v5813 = vshrl.u32 %v5812, 7
    %v5814 = vsub.s32 0, %v5813
    %v5815 = vrot.slane %v5810, %v5814
    %v5833 = vunpack.c.l.b16 %v5794
    %v5834 = vunpack.c.l.b16 %v5795
    %v5835 = vunpack.c.l.b16 %v5796
    %v5836 = vunpack.c.l.b16 %v5797
    %v5837 = vunpack.c.l.b16 %v5798
    %v5838 = vunpack.c.l.b16 %v5799
    %v5839 = vunpack.c.l.b16 %v5800
    %v5840 = vunpack.c.l.b16 %v5801
    %v5841 = vunpack.c.l.b16 %v5802
    %v5842 = vunpack.c.l.b16 %v5803
    %v5843 = vunpack.c.l.b16 %v5804
    %v5844 = vunpack.c.l.b16 %v5805
    %v5845 = vunpack.c.l.b16 %v5806
    %v5846 = vunpack.c.l.b16 %v5807
    %v5847 = vunpack.c.l.b16 %v5808
    %v5848 = vunpack.c.l.b16 %v5809
    %v5849 = vpack.c.b16 %v5834, %v5833
    %v5850 = vpack.c.b16 %v5836, %v5835
    %v5851 = vpack.c.b16 %v5838, %v5837
    %v5852 = vpack.c.b16 %v5840, %v5839
    %v5853 = vpack.c.b16 %v5842, %v5841
    %v5854 = vpack.c.b16 %v5844, %v5843
    %v5855 = vpack.c.b16 %v5846, %v5845
    %v5856 = vpack.c.b16 %v5848, %v5847
    %5865 = vmatprep.subr.bf16.mxu0 0
    %5866 = vmatpush1.bf16.msra.mxu0 %v5856
    %5867 = vmatprep.subr.bf16.mxu0 0
    %5868 = vmatpush1.bf16.msra.mxu0 %v5855
    %5869 = vmatprep.subr.bf16.mxu0 0
    %5870 = vmatpush1.bf16.msra.mxu0 %v5854
    %5871 = vmatprep.subr.bf16.mxu0 0
    %5872 = vmatpush1.bf16.msra.mxu0 %v5853
    %5873 = vmatprep.subr.bf16.mxu0 0
    %5874 = vmatpush1.bf16.msra.mxu0 %v5852
    %5875 = vmatprep.subr.bf16.mxu0 0
    %5876 = vmatpush1.bf16.msra.mxu0 %v5851
    %5877 = vmatprep.subr.bf16.mxu0 0
    %5878 = vmatpush1.bf16.msra.mxu0 %v5850
    %5879 = vmatprep.subr.bf16.mxu0 0
    %5880 = vmatpush1.bf16.msra.mxu0 %v5849
    %5881 = vmatprep.subr.bf16.mxu0 0
    %5882 = vmatpush2.bf16.msra.mxu0 0
    %5883 = vmatprep.subr.bf16.mxu0 0
    %5884 = vmatpush2.bf16.msra.mxu0 0
    %5885 = vmatprep.subr.bf16.mxu0 0
    %5886 = vmatpush2.bf16.msra.mxu0 0
    %5887 = vmatprep.subr.bf16.mxu0 0
    %5888 = vmatpush2.bf16.msra.mxu0 0
    %5889 = vmatprep.subr.bf16.mxu0 0
    %5890 = vmatpush2.bf16.msra.mxu0 0
    %5891 = vmatprep.subr.bf16.mxu0 0
    %5892 = vmatpush2.bf16.msra.mxu0 0
    %5893 = vmatprep.subr.bf16.mxu0 0
    %5894 = vmatpush2.bf16.msra.mxu0 0
    %5895 = vmatprep.subr.bf16.mxu0 0
    %5896 = vmatpush2.bf16.msra.mxu0 0
    %5897 = vmatprep.mubr.bf16.mxu0 0
    %5898 = vmatmul.mubr.bf16.gmra.mxu0 %v5793
    %v5899 = vpop.f32.mrf.mxu0
    %v5900 = vadd.f32 %v5815, %v5899
    %v5901 = vpop.f32.mrf.mxu0
    %v5902 = vpop.f32.mrf.mxu0
    %v5903 = vpop.f32.mrf.mxu0
    %5904 = vdwg.mxu0
    %v5905 = vsub.f32 0.0, %v5900
    %v5906 = vmul.f32 %v5905, 1.442695
    %v5907 = vpow.pop %v5906
    %v5908 = vadd.f32 %v5907, 1.0
    %v5909 = vrcp.pop %v5908
    %v5910 = vmul.f32 1.0, %v5909
    %5911 = vst [vmem:[#allocation19] sm:$0xff] %v5910
    // Predicated region
    $region86: #{dnn_forward.1} parent=1 // pred_check
      _
    $region87: #{dnn_forward.1} parent=1 // pred_check_branch
      %5913 = sbr.rel (0) target = $region89
    $region88: #{dnn_forward.1} parent=1 // pred_region
      %s5915 = ssub.s32 128, 32
      %5916 = vsyncadd [#allocation4], %s5915
      %s5917 = sshll.u32 [#allocation19], 4
      %s5918 = int_to_ptr.vmem [resolvable:$true] %s5917
      %5923 = dma.vmem_to_hbm [thread:$0]  %s5918, 32, %s11, [#allocation4], 32, 32, 2
    $region89: #{dnn_forward.1} parent=1 // pred_fallthru
      _
    // Predicated region
    $region90: #{dnn_forward.1} parent=1 // pred_check
      _
    $region91: #{dnn_forward.1} parent=1 // pred_check_branch
      %5925 = sbr.rel (0) target = $region93
    $region92: #{dnn_forward.1} parent=1 // pred_region
      %5926 = dma.done [#allocation4], 128
    $region93: #{dnn_forward.1} parent=1 // pred_fallthru
      _
    %5927 = vsyncpa [#allocation3], 1
    %5928 = vsyncpa [#allocation6], 1
    %5929 = vsyncpa [#allocation9], 1
    %5930 = vsyncpa [#allocation12], 1
    %5931 = vsyncpa [#allocation15], 1
    %5932 = vsyncpa [#allocation18], 1
    %5933 = vsyncpa [#allocation4], 1

</llo_original>
